<compile_context>
chip_gen: v6e
topology: v6e:2x2x1
jax: 0.10.0
libtpu: 0.0.40
codegen_flags: <defaults>
</compile_context>

<pallas_src>
import jax
import jax.numpy as jnp
from jax.experimental import pallas as pl
from jax.experimental.pallas import tpu as pltpu


def encoder_kernel(x_ref, w1_ref, b1_ref, w2_ref, b2_ref, w3_ref, b3_ref,
                   out_ref):
    """One grid step runs the whole MLP on one (TB, dim_in) batch tile.

    Matmuls: bf16 operands on the MXU, f32 accumulation.  Biases (BN already
    folded in) are added in f32; ReLUs run on the VPU.
    """
    f32, bf16 = jnp.float32, jnp.bfloat16

    x = x_ref[...].astype(bf16)                                          # (TB, Din)

    h = jnp.dot(x, w1_ref[...], preferred_element_type=f32) + b1_ref[...]
    h = jnp.maximum(h, 0.0).astype(bf16)                                 # (TB, H)

    h = jnp.dot(h, w2_ref[...], preferred_element_type=f32) + b2_ref[...]
    h = jnp.maximum(h, 0.0).astype(bf16)                                 # (TB, H)

    y = jnp.dot(h, w3_ref[...], preferred_element_type=f32) + b3_ref[...]
    out_ref[...] = y.astype(out_ref.dtype)                               # (TB, 2*Dout)


def _pick_batch_tile(B):
    """Returns (tb, n_steps, padded_B)."""
    if B <= 512:
        return B, 1, B                       # single grid step, no padding
    for tb in (512, 384, 256, 128):          # MXU-friendly multiples of 128
        if B % tb == 0:
            return tb, B // tb, B            # divides B -> no padding pass
    tb = 256
    n = -(-B // tb)
    return tb, n, n * tb                     # ragged tail -> pad (rare path)


def pendulum_encoder_forward(x, params):
    """Pallas-backed PendulumEncoder.forward. Returns (mean, logvar) halves."""
    B, Din = x.shape
    H = params["w2"].shape[0]
    D2 = params["w3"].shape[1]               # 2 * dim_out
    f32, bf16 = jnp.float32, jnp.bfloat16

    # ---- glue (plain JAX): fold eval-mode BatchNorm into the Linears ----
    def fold(w, b, gamma, beta, mean, var, eps=1e-5):
        scale = gamma * jax.lax.rsqrt(var + eps)                         # (H,)
        return w * scale[None, :], (b - mean) * scale + beta

    w1, b1 = fold(params["w1"], params["b1"], params["g1"], params["be1"],
                  params["rm1"], params["rv1"])
    w2, b2 = fold(params["w2"], params["b2"], params["g2"], params["be2"],
                  params["rm2"], params["rv2"])
    w3, b3 = params["w3"], params["b3"]

    # bf16 weights for the MXU; biases stay f32 (added to the f32 accumulators).
    w1 = w1.astype(bf16); w2 = w2.astype(bf16); w3 = w3.astype(bf16)
    b1 = b1.reshape(1, H).astype(f32)
    b2 = b2.reshape(1, H).astype(f32)
    b3 = b3.reshape(1, D2).astype(f32)

    # ---- batch tiling ----
    tb, n_steps, Bp = _pick_batch_tile(B)
    xp = x if Bp == B else jnp.pad(x, ((0, Bp - B), (0, 0)))

    def resident(r, c):
        # Constant index map -> weight block stays resident across grid steps.
        return pl.BlockSpec((r, c), lambda i: (0, 0))

    out = pl.pallas_call(
        encoder_kernel,
        out_shape=jax.ShapeDtypeStruct((Bp, D2), f32),
        grid=(n_steps,),
        in_specs=[
            pl.BlockSpec((tb, Din), lambda i: (i, 0)),   # x batch tile
            resident(Din, H), resident(1, H),            # Linear1 (BN folded)
            resident(H, H),   resident(1, H),            # Linear2 (BN folded)
            resident(H, D2),  resident(1, D2),           # Linear3
        ],
        out_specs=pl.BlockSpec((tb, D2), lambda i: (i, 0)),
        compiler_params=pltpu.CompilerParams(
            dimension_semantics=("parallel",),
            vmem_limit_bytes=32 * 1024 * 1024),
    )(xp, w1, b1, w2, b2, w3, b3)

    if Bp != B:
        out = out[:B]
    dout = D2 // 2
    return out[:, :dout], out[:, dout:]       # == x.chunk(2, dim=1)


def init_params(key, dim_in, dim_out, hidden=800):
    """Deterministic PyTorch-style init. Linear weights stored (in, out): y = x @ W + b."""
    ks = jax.random.split(key, 14)

    def lin(kw, kb, fi, fo):
        lim = 1.0 / jnp.sqrt(jnp.float32(fi))
        w = jax.random.uniform(kw, (fi, fo), jnp.float32, -lim, lim)
        b = jax.random.uniform(kb, (fo,), jnp.float32, -lim, lim)
        return w, b

    w1, b1 = lin(ks[0], ks[1], dim_in, hidden)
    w2, b2 = lin(ks[2], ks[3], hidden, hidden)
    w3, b3 = lin(ks[4], ks[5], hidden, 2 * dim_out)

    # BatchNorm1d affine params + (eval-mode) running statistics.
    g1 = jax.random.uniform(ks[6], (hidden,), jnp.float32, 0.5, 1.5)
    be1 = 0.1 * jax.random.normal(ks[7], (hidden,), jnp.float32)
    rm1 = 0.1 * jax.random.normal(ks[8], (hidden,), jnp.float32)
    rv1 = jax.random.uniform(ks[9], (hidden,), jnp.float32, 0.5, 1.5)
    g2 = jax.random.uniform(ks[10], (hidden,), jnp.float32, 0.5, 1.5)
    be2 = 0.1 * jax.random.normal(ks[11], (hidden,), jnp.float32)
    rm2 = 0.1 * jax.random.normal(ks[12], (hidden,), jnp.float32)
    rv2 = jax.random.uniform(ks[13], (hidden,), jnp.float32, 0.5, 1.5)

    return dict(w1=w1, b1=b1, w2=w2, b2=b2, w3=w3, b3=b3,
                g1=g1, be1=be1, rm1=rm1, rv1=rv1,
                g2=g2, be2=be2, rm2=rm2, rv2=rv2)


def pendulum_encoder_reference(x, params, eps=1e-5):
    """Pure-JAX f32 mirror of the PyTorch forward (BatchNorm in eval mode)."""
    def bn(h, g, be, rm, rv):
        return (h - rm) * jax.lax.rsqrt(rv + eps) * g + be

    h = x @ params["w1"] + params["b1"]
    h = jnp.maximum(bn(h, params["g1"], params["be1"], params["rm1"], params["rv1"]), 0.0)
    h = h @ params["w2"] + params["b2"]
    h = jnp.maximum(bn(h, params["g2"], params["be2"], params["rm2"], params["rv2"]), 0.0)
    y = h @ params["w3"] + params["b3"]
    dout = y.shape[1] // 2
    return y[:, :dout], y[:, dout:]


if __name__ == "__main__":
    B, dim_in, dim_out = 64, 16, 8          # hidden width 800 is fixed by the module
    key = jax.random.PRNGKey(0)
    kp, kx = jax.random.split(key)

    params = init_params(kp, dim_in, dim_out)
    x = jax.random.normal(kx, (B, dim_in), jnp.float32)

    # B=64 <= 512 -> single grid step (grid=(1,)), no padding, no wrapper cast.
    mean, logvar = pendulum_encoder_forward(x, params)
    jax.block_until_ready((mean, logvar))

    ref_mean, ref_logvar = pendulum_encoder_reference(x, params)
    # bf16 MXU operands with f32 accumulation -> loosened tolerance vs f32 ref.
    ok = (jnp.allclose(mean, ref_mean, rtol=2e-2, atol=2e-2)
          and jnp.allclose(logvar, ref_logvar, rtol=2e-2, atol=2e-2))
    if not bool(ok):
        raise AssertionError("Pallas PendulumEncoder kernel mismatch vs JAX reference")
    print("KERNEL_OK")
</pallas_src>

<mosaic_0001>
module attributes {stable_mosaic.version = 11 : i64} {
  func.func @encoder_kernel(%arg0: i32, %arg1: memref<64x16xf32, #tpu.memory_space<vmem>>, %arg2: memref<16x800xbf16, #tpu.memory_space<vmem>>, %arg3: memref<1x800xf32, #tpu.memory_space<vmem>>, %arg4: memref<800x800xbf16, #tpu.memory_space<vmem>>, %arg5: memref<1x800xf32, #tpu.memory_space<vmem>>, %arg6: memref<800x16xbf16, #tpu.memory_space<vmem>>, %arg7: memref<1x16xf32, #tpu.memory_space<vmem>>, %arg8: memref<64x16xf32, #tpu.memory_space<vmem>>) attributes {dimension_semantics = [#tpu.dimension_semantics<parallel>], iteration_bounds = array<i64: 1>, scalar_prefetch = 0 : i64, scratch_operands = 0 : i64, tpu.core_type = #tpu.core_type<tc>, window_params = [{transform_indices = @transform_0, window_bounds = array<i64: 64, 16>}, {pipeline_mode = #tpu.pipeline_mode<synchronous>, transform_indices = @transform_1, window_bounds = array<i64: 16, 800>}, {pipeline_mode = #tpu.pipeline_mode<synchronous>, transform_indices = @transform_2, window_bounds = array<i64: 1, 800>}, {pipeline_mode = #tpu.pipeline_mode<synchronous>, transform_indices = @transform_3, window_bounds = array<i64: 800, 800>}, {pipeline_mode = #tpu.pipeline_mode<synchronous>, transform_indices = @transform_4, window_bounds = array<i64: 1, 800>}, {pipeline_mode = #tpu.pipeline_mode<synchronous>, transform_indices = @transform_5, window_bounds = array<i64: 800, 16>}, {pipeline_mode = #tpu.pipeline_mode<synchronous>, transform_indices = @transform_6, window_bounds = array<i64: 1, 16>}, {transform_indices = @transform_7, window_bounds = array<i64: 64, 16>}]} {
    %c0 = arith.constant 0 : index
    %c0_0 = arith.constant 0 : index
    %0 = vector.load %arg1[%c0, %c0_0] : memref<64x16xf32, #tpu.memory_space<vmem>>, vector<64x16xf32>
    %1 = arith.truncf %0 : vector<64x16xf32> to vector<64x16xbf16>
    %c0_1 = arith.constant 0 : index
    %c0_2 = arith.constant 0 : index
    %2 = vector.load %arg2[%c0_1, %c0_2] : memref<16x800xbf16, #tpu.memory_space<vmem>>, vector<16x800xbf16>
    %cst = arith.constant dense<0.000000e+00> : vector<64x800xf32>
    %3 = tpu.matmul %1, %2, %cst {dimension_numbers = #tpu.dot_dimension_numbers<[1], [0], [0], [1], [0, 0, 1, 1], [], []>} : vector<64x16xbf16>, vector<16x800xbf16>, vector<64x800xf32> -> vector<64x800xf32>
    %c0_3 = arith.constant 0 : index
    %c0_4 = arith.constant 0 : index
    %4 = vector.load %arg3[%c0_3, %c0_4] : memref<1x800xf32, #tpu.memory_space<vmem>>, vector<1x800xf32>
    %5 = vector.broadcast %4 : vector<1x800xf32> to vector<64x800xf32>
    %6 = arith.addf %3, %5 : vector<64x800xf32>
    %cst_5 = arith.constant 0.000000e+00 : f32
    %7 = vector.broadcast %cst_5 : f32 to vector<64x800xf32>
    %8 = arith.maximumf %6, %7 : vector<64x800xf32>
    %9 = arith.truncf %8 : vector<64x800xf32> to vector<64x800xbf16>
    %c0_6 = arith.constant 0 : index
    %c0_7 = arith.constant 0 : index
    %10 = vector.load %arg4[%c0_6, %c0_7] : memref<800x800xbf16, #tpu.memory_space<vmem>>, vector<800x800xbf16>
    %cst_8 = arith.constant dense<0.000000e+00> : vector<64x800xf32>
    %11 = tpu.matmul %9, %10, %cst_8 {dimension_numbers = #tpu.dot_dimension_numbers<[1], [0], [0], [1], [0, 0, 1, 1], [], []>} : vector<64x800xbf16>, vector<800x800xbf16>, vector<64x800xf32> -> vector<64x800xf32>
    %c0_9 = arith.constant 0 : index
    %c0_10 = arith.constant 0 : index
    %12 = vector.load %arg5[%c0_9, %c0_10] : memref<1x800xf32, #tpu.memory_space<vmem>>, vector<1x800xf32>
    %13 = vector.broadcast %12 : vector<1x800xf32> to vector<64x800xf32>
    %14 = arith.addf %11, %13 : vector<64x800xf32>
    %cst_11 = arith.constant 0.000000e+00 : f32
    %15 = vector.broadcast %cst_11 : f32 to vector<64x800xf32>
    %16 = arith.maximumf %14, %15 : vector<64x800xf32>
    %17 = arith.truncf %16 : vector<64x800xf32> to vector<64x800xbf16>
    %c0_12 = arith.constant 0 : index
    %c0_13 = arith.constant 0 : index
    %18 = vector.load %arg6[%c0_12, %c0_13] : memref<800x16xbf16, #tpu.memory_space<vmem>>, vector<800x16xbf16>
    %cst_14 = arith.constant dense<0.000000e+00> : vector<64x16xf32>
    %19 = tpu.matmul %17, %18, %cst_14 {dimension_numbers = #tpu.dot_dimension_numbers<[1], [0], [0], [1], [0, 0, 1, 1], [], []>} : vector<64x800xbf16>, vector<800x16xbf16>, vector<64x16xf32> -> vector<64x16xf32>
    %c0_15 = arith.constant 0 : index
    %c0_16 = arith.constant 0 : index
    %20 = vector.load %arg7[%c0_15, %c0_16] : memref<1x16xf32, #tpu.memory_space<vmem>>, vector<1x16xf32>
    %21 = vector.broadcast %20 : vector<1x16xf32> to vector<64x16xf32>
    %22 = arith.addf %19, %21 : vector<64x16xf32>
    %c0_17 = arith.constant 0 : index
    %c0_18 = arith.constant 0 : index
    %23 = vector.load %arg8[%c0_17, %c0_18] : memref<64x16xf32, #tpu.memory_space<vmem>>, vector<64x16xf32>
    tpu.vector_store %arg8[%c0_17, %c0_18], %22 {strides = array<i32>} : memref<64x16xf32, #tpu.memory_space<vmem>>, vector<64x16xf32>,
    return
  }
  func.func @transform_0(%arg0: i32) -> (i32, i32) {
    %c0_i32 = arith.constant 0 : i32
    %c0_i32_0 = arith.constant 0 : i32
    return %arg0, %c0_i32 : i32, i32
  }
  func.func @transform_1(%arg0: i32) -> (i32, i32) {
    %c0_i32 = arith.constant 0 : i32
    %c0_i32_0 = arith.constant 0 : i32
    %c0_i32_1 = arith.constant 0 : i32
    return %c0_i32, %c0_i32_0 : i32, i32
  }
  func.func @transform_2(%arg0: i32) -> (i32, i32) {
    %c0_i32 = arith.constant 0 : i32
    %c0_i32_0 = arith.constant 0 : i32
    %c0_i32_1 = arith.constant 0 : i32
    return %c0_i32, %c0_i32_0 : i32, i32
  }
  func.func @transform_3(%arg0: i32) -> (i32, i32) {
    %c0_i32 = arith.constant 0 : i32
    %c0_i32_0 = arith.constant 0 : i32
    %c0_i32_1 = arith.constant 0 : i32
    return %c0_i32, %c0_i32_0 : i32, i32
  }
  func.func @transform_4(%arg0: i32) -> (i32, i32) {
    %c0_i32 = arith.constant 0 : i32
    %c0_i32_0 = arith.constant 0 : i32
    %c0_i32_1 = arith.constant 0 : i32
    return %c0_i32, %c0_i32_0 : i32, i32
  }
  func.func @transform_5(%arg0: i32) -> (i32, i32) {
    %c0_i32 = arith.constant 0 : i32
    %c0_i32_0 = arith.constant 0 : i32
    %c0_i32_1 = arith.constant 0 : i32
    return %c0_i32, %c0_i32_0 : i32, i32
  }
  func.func @transform_6(%arg0: i32) -> (i32, i32) {
    %c0_i32 = arith.constant 0 : i32
    %c0_i32_0 = arith.constant 0 : i32
    %c0_i32_1 = arith.constant 0 : i32
    return %c0_i32, %c0_i32_0 : i32, i32
  }
  func.func @transform_7(%arg0: i32) -> (i32, i32) {
    %c0_i32 = arith.constant 0 : i32
    %c0_i32_0 = arith.constant 0 : i32
    return %arg0, %c0_i32 : i32, i32
  }
}

</mosaic_0001>

<llo_original>
// kernel: tpu_custom_call.1
$region0: #{tpu_custom_call.1}
  #allocation0 [shape = 'u32[]', space=smem, size = 0x4, offset = 0x4, fixed_abs, tag = 'smem constant byte address 0x4 - core index']
  #allocation1 [shape = 'u32[144,128]{1,0:T(1,128)}', space=vmem, size = 0x12000, scoped, tag = 'internal scratch']
  %s0 = inlined_call_operand.vmem [shape: f32[64,16], index: 0, kind: input, shape index: {}]
  %s1 = inlined_call_operand.hbm [shape: bf16[16,800], index: 1, kind: input, shape index: {}]
  %s2 = inlined_call_operand.hbm [shape: f32[1,800], index: 2, kind: input, shape index: {}]
  %s3 = inlined_call_operand.hbm [shape: bf16[800,800], index: 3, kind: input, shape index: {}]
  %s4 = inlined_call_operand.hbm [shape: f32[1,800], index: 4, kind: input, shape index: {}]
  %s5 = inlined_call_operand.vmem [shape: bf16[800,16], index: 5, kind: input, shape index: {}]
  %s6 = inlined_call_operand.hbm [shape: f32[1,16], index: 6, kind: input, shape index: {}]
  %s7 = inlined_call_operand.vmem [shape: f32[64,16], index: 7, kind: output, shape index: {}]
  %s8 = sld [smem:[#allocation0]]
  $region58: #{tpu_custom_call.1} parent=0
    _
  %s10 = ssub.s32 1, %s8
  %s11 = scalar_select 0, %s10, %s8
  $region1: #{tpu_custom_call.1} parent=0
    #allocation2 [shape = 'u8[28672]{0}', space=vmem, size = 0x7000, scoped, tag = 'input window, operand 1, single buffered']
    #allocation3 [shape = 's32[1]{0}', space=sflag, size = 0x4, scoped, tag = 'scoped memory for tpu_custom_call.1']
    #allocation4 [shape = 'u8[3584]{0}', space=vmem, size = 0x1000, scoped, tag = 'input window, operand 2, single buffered']
    #allocation5 [shape = 's32[1]{0}', space=sflag, size = 0x4, scoped, tag = 'scoped memory for tpu_custom_call.1']
    #allocation6 [shape = 'u8[1433600]{0}', space=vmem, size = 0x15e000, scoped, tag = 'input window, operand 3, single buffered']
    #allocation7 [shape = 'u8[3584]{0}', space=vmem, size = 0x1000, scoped, tag = 'input window, operand 4, single buffered']
    #allocation8 [shape = 's32[1]{0}', space=sflag, size = 0x4, scoped, tag = 'scoped memory for tpu_custom_call.1']
    #allocation9 [shape = 'u8[512]{0}', space=vmem, size = 0x400, scoped, tag = 'input window, operand 6, single buffered']
    %12 = vsyncpa [#allocation3], 0
    %13 = vsyncpa [#allocation5], 0
    %14 = vsyncpa [#allocation8], 0
    // Predicated region
    $region2: #{tpu_custom_call.1} parent=1 // pred_check
      _
    $region3: #{tpu_custom_call.1} parent=1 // pred_check_branch
      %16 = sbr.rel (0) target = $region5
    $region4: #{tpu_custom_call.1} parent=1 // pred_region
      _
    $region5: #{tpu_custom_call.1} parent=1 // pred_fallthru
      _
    // Predicated region
    $region6: #{tpu_custom_call.1} parent=1 // pred_check
      _
    $region7: #{tpu_custom_call.1} parent=1 // pred_check_branch
      %18 = sbr.rel (0) target = $region9
    $region8: #{tpu_custom_call.1} parent=1 // pred_region
      %s20 = ssub.s32 896, 896
      %21 = vsyncadd [#allocation3], %s20
      %s22 = sshll.u32 [#allocation2], 4
      %s23 = int_to_ptr.vmem [resolvable:$true] %s22
      %28 = dma.hbm_to_vmem [thread:$0]  %s1, 896, %s23, [#allocation3], 448, 448, 28
    $region9: #{tpu_custom_call.1} parent=1 // pred_fallthru
      _
    // Predicated region
    $region10: #{tpu_custom_call.1} parent=1 // pred_check
      _
    $region11: #{tpu_custom_call.1} parent=1 // pred_check_branch
      %30 = sbr.rel (0) target = $region13
    $region12: #{tpu_custom_call.1} parent=1 // pred_region
      %s32 = ssub.s32 112, 112
      %33 = vsyncadd [#allocation5], %s32
      %s35 = sshll.u32 [#allocation4], 4
      %s36 = int_to_ptr.vmem [resolvable:$true] %s35
      %38 = dma.hbm_to_vmem [thread:$0]  %s2, 112, %s36, [#allocation5]
    $region13: #{tpu_custom_call.1} parent=1 // pred_fallthru
      _
    // Predicated region
    $region14: #{tpu_custom_call.1} parent=1 // pred_check
      _
    $region15: #{tpu_custom_call.1} parent=1 // pred_check_branch
      %40 = sbr.rel (0) target = $region17
    $region16: #{tpu_custom_call.1} parent=1 // pred_region
      %s42 = ssub.s32 44800, 44800
      %43 = vsyncadd [#allocation5], %s42
      %s44 = sshll.u32 [#allocation6], 4
      %s45 = int_to_ptr.vmem [resolvable:$true] %s44
      %50 = dma.hbm_to_vmem [thread:$0]  %s3, 44800, %s45, [#allocation5], 448, 448, 28
    $region17: #{tpu_custom_call.1} parent=1 // pred_fallthru
      _
    // Predicated region
    $region18: #{tpu_custom_call.1} parent=1 // pred_check
      _
    $region19: #{tpu_custom_call.1} parent=1 // pred_check_branch
      %52 = sbr.rel (0) target = $region21
    $region20: #{tpu_custom_call.1} parent=1 // pred_region
      %s54 = ssub.s32 112, 112
      %55 = vsyncadd [#allocation8], %s54
      %s57 = sshll.u32 [#allocation7], 4
      %s58 = int_to_ptr.vmem [resolvable:$true] %s57
      %60 = dma.hbm_to_vmem [thread:$0]  %s4, 112, %s58, [#allocation8]
    $region21: #{tpu_custom_call.1} parent=1 // pred_fallthru
      _
    // Predicated region
    $region22: #{tpu_custom_call.1} parent=1 // pred_check
      _
    $region23: #{tpu_custom_call.1} parent=1 // pred_check_branch
      %62 = sbr.rel (0) target = $region25
    $region24: #{tpu_custom_call.1} parent=1 // pred_region
      _
    $region25: #{tpu_custom_call.1} parent=1 // pred_fallthru
      _
    // Predicated region
    $region26: #{tpu_custom_call.1} parent=1 // pred_check
      _
    $region27: #{tpu_custom_call.1} parent=1 // pred_check_branch
      %64 = sbr.rel (0) target = $region29
    $region28: #{tpu_custom_call.1} parent=1 // pred_region
      %s66 = ssub.s32 16, 16
      %67 = vsyncadd [#allocation8], %s66
      %s69 = sshll.u32 [#allocation9], 4
      %s70 = int_to_ptr.vmem [resolvable:$true] %s69
      %72 = dma.hbm_to_vmem [thread:$0]  %s6, 16, %s70, [#allocation8]
    $region29: #{tpu_custom_call.1} parent=1 // pred_fallthru
      _
    // Predicated region
    $region30: #{tpu_custom_call.1} parent=1 // pred_check
      _
    $region31: #{tpu_custom_call.1} parent=1 // pred_check_branch
      %74 = sbr.rel (0) target = $region33
    $region32: #{tpu_custom_call.1} parent=1 // pred_region
      %75 = dma.done [#allocation3], 896
    $region33: #{tpu_custom_call.1} parent=1 // pred_fallthru
      _
    // Predicated region
    $region34: #{tpu_custom_call.1} parent=1 // pred_check
      _
    $region35: #{tpu_custom_call.1} parent=1 // pred_check_branch
      %77 = sbr.rel (0) target = $region37
    $region36: #{tpu_custom_call.1} parent=1 // pred_region
      %78 = dma.done [#allocation5], 112
    $region37: #{tpu_custom_call.1} parent=1 // pred_fallthru
      _
    // Predicated region
    $region38: #{tpu_custom_call.1} parent=1 // pred_check
      _
    $region39: #{tpu_custom_call.1} parent=1 // pred_check_branch
      %80 = sbr.rel (0) target = $region41
    $region40: #{tpu_custom_call.1} parent=1 // pred_region
      %81 = dma.done [#allocation5], 44800
    $region41: #{tpu_custom_call.1} parent=1 // pred_fallthru
      _
    // Predicated region
    $region42: #{tpu_custom_call.1} parent=1 // pred_check
      _
    $region43: #{tpu_custom_call.1} parent=1 // pred_check_branch
      %83 = sbr.rel (0) target = $region45
    $region44: #{tpu_custom_call.1} parent=1 // pred_region
      %84 = dma.done [#allocation8], 112
    $region45: #{tpu_custom_call.1} parent=1 // pred_fallthru
      _
    // Predicated region
    $region46: #{tpu_custom_call.1} parent=1 // pred_check
      _
    $region47: #{tpu_custom_call.1} parent=1 // pred_check_branch
      %86 = sbr.rel (0) target = $region49
    $region48: #{tpu_custom_call.1} parent=1 // pred_region
      %87 = dma.done [#allocation8], 16
    $region49: #{tpu_custom_call.1} parent=1 // pred_fallthru
      _
    %v89 = vld [vmem:[%s0] sm:$0xff]
    %v90 = vld [vmem:[%s0 + $0x8] sm:$0xff]
    %v91 = vld [vmem:[%s0 + $0x10] sm:$0xff]
    %v92 = vld [vmem:[%s0 + $0x18] sm:$0xff]
    %v93 = vld [vmem:[%s0 + $0x20] sm:$0xff]
    %v94 = vld [vmem:[%s0 + $0x28] sm:$0xff]
    %v95 = vld [vmem:[%s0 + $0x30] sm:$0xff]
    %v96 = vld [vmem:[%s0 + $0x38] sm:$0xff]
    %v97 = vpack.c.bf16 %v90, %v89
    %v98 = vpack.c.bf16 %v92, %v91
    %v99 = vpack.c.bf16 %v94, %v93
    %v100 = vpack.c.bf16 %v96, %v95
    %v101 = vld [vmem:[#allocation2] sm:$0xff]
    %v102 = vld [vmem:[#allocation2 + $0x8] sm:$0xff]
    %v103 = vld [vmem:[#allocation2 + $0x10] sm:$0xff]
    %v104 = vld [vmem:[#allocation2 + $0x18] sm:$0xf]
    %v105 = vld [vmem:[#allocation2 + $0x1c] sm:$0xff]
    %v106 = vld [vmem:[#allocation2 + $0x24] sm:$0xff]
    %v107 = vld [vmem:[#allocation2 + $0x2c] sm:$0xff]
    %v108 = vld [vmem:[#allocation2 + $0x34] sm:$0xf]
    %v109 = vld [vmem:[#allocation4] sm:$0x7f]
    %v111 = vlaneseq
    %v112 = vshrl.u32 %v111, 7
    %v113 = vsub.s32 0, %v112
    %v114 = vrot.slane %v109, %v113
    %v115 = vlaneseq
    %v116 = vshrl.u32 %v115, 7
    %v117 = vsub.s32 1, %v116
    %v118 = vrot.slane %v109, %v117
    %v119 = vlaneseq
    %v120 = vshrl.u32 %v119, 7
    %v121 = vsub.s32 2, %v120
    %v122 = vrot.slane %v109, %v121
    %v123 = vlaneseq
    %v124 = vshrl.u32 %v123, 7
    %v125 = vsub.s32 3, %v124
    %v126 = vrot.slane %v109, %v125
    %v127 = vlaneseq
    %v128 = vshrl.u32 %v127, 7
    %v129 = vsub.s32 4, %v128
    %v130 = vrot.slane %v109, %v129
    %v131 = vlaneseq
    %v132 = vshrl.u32 %v131, 7
    %v133 = vsub.s32 5, %v132
    %v134 = vrot.slane %v109, %v133
    %v135 = vlaneseq
    %v136 = vshrl.u32 %v135, 7
    %v137 = vsub.s32 6, %v136
    %v138 = vrot.slane %v109, %v137
    %v154 = vunpack.c.l.b16 %v101
    %v155 = vunpack.c.h.b16 %v101
    %v156 = vunpack.c.l.b16 %v102
    %v157 = vunpack.c.h.b16 %v102
    %v158 = vunpack.c.l.b16 %v103
    %v159 = vunpack.c.h.b16 %v103
    %v160 = vunpack.c.l.b16 %v104
    %v161 = vunpack.c.l.b16 %v105
    %v162 = vunpack.c.h.b16 %v105
    %v163 = vunpack.c.l.b16 %v106
    %v164 = vunpack.c.h.b16 %v106
    %v165 = vunpack.c.l.b16 %v107
    %v166 = vunpack.c.h.b16 %v107
    %v167 = vunpack.c.l.b16 %v108
    %v168 = vpack.c.b16 %v161, %v154
    %v169 = vpack.c.b16 %v162, %v155
    %v170 = vpack.c.b16 %v163, %v156
    %v171 = vpack.c.b16 %v164, %v157
    %v172 = vpack.c.b16 %v165, %v158
    %v173 = vpack.c.b16 %v166, %v159
    %v174 = vpack.c.b16 %v167, %v160
    %vm182 = vcmask 130048
    %v184 = vsel %vm182, %v97, 0
    %v187 = vsel %vm182, %v98, 0
    %v190 = vsel %vm182, %v99, 0
    %v193 = vsel %vm182, %v100, 0
    %195 = vmatprep.subr.bf16.mxu0 0
    %196 = vmatpush1.bf16.msra.mxu0 0
    %197 = vmatprep.subr.bf16.mxu0 0
    %198 = vmatpush1.bf16.msra.mxu0 0
    %199 = vmatprep.subr.bf16.mxu0 0
    %200 = vmatpush1.bf16.msra.mxu0 0
    %201 = vmatprep.subr.bf16.mxu0 0
    %202 = vmatpush1.bf16.msra.mxu0 0
    %203 = vmatprep.subr.bf16.mxu0 0
    %204 = vmatpush1.bf16.msra.mxu0 0
    %205 = vmatprep.subr.bf16.mxu0 0
    %206 = vmatpush1.bf16.msra.mxu0 0
    %207 = vmatprep.subr.bf16.mxu0 0
    %208 = vmatpush1.bf16.msra.mxu0 0
    %209 = vmatprep.subr.bf16.mxu0 %v169
    %210 = vmatpush1.bf16.msra.mxu0 %v168
    %211 = vmatprep.subr.bf16.mxu0 0
    %212 = vmatpush2.bf16.msra.mxu0 0
    %213 = vmatprep.subr.bf16.mxu0 0
    %214 = vmatpush2.bf16.msra.mxu0 0
    %215 = vmatprep.subr.bf16.mxu0 0
    %216 = vmatpush2.bf16.msra.mxu0 0
    %217 = vmatprep.subr.bf16.mxu0 0
    %218 = vmatpush2.bf16.msra.mxu0 0
    %219 = vmatprep.subr.bf16.mxu0 0
    %220 = vmatpush2.bf16.msra.mxu0 0
    %221 = vmatprep.subr.bf16.mxu0 0
    %222 = vmatpush2.bf16.msra.mxu0 0
    %223 = vmatprep.subr.bf16.mxu0 0
    %224 = vmatpush2.bf16.msra.mxu0 0
    %225 = vmatprep.subr.bf16.mxu0 0
    %226 = vmatpush2.bf16.msra.mxu0 0
    %227 = vmatprep.mubr.bf16.mxu0 0
    %228 = vmatmul.mubr.bf16.gmra.mxu0 %v184
    %v229 = vpop.f32.mrf.mxu0
    %v230 = vadd.f32 %v114, %v229
    %v231 = vpop.f32.mrf.mxu0
    %v232 = vadd.f32 %v118, %v231
    %v233 = vpop.f32.mrf.mxu0
    %v234 = vadd.f32 %v114, %v233
    %v235 = vpop.f32.mrf.mxu0
    %v236 = vadd.f32 %v118, %v235
    %237 = vmatprep.mubr.bf16.mxu0 0
    %238 = vmatmul.mubr.bf16.gmra.mxu0 %v187
    %v239 = vpop.f32.mrf.mxu0
    %v240 = vadd.f32 %v114, %v239
    %v241 = vpop.f32.mrf.mxu0
    %v242 = vadd.f32 %v118, %v241
    %v243 = vpop.f32.mrf.mxu0
    %v244 = vadd.f32 %v114, %v243
    %v245 = vpop.f32.mrf.mxu0
    %v246 = vadd.f32 %v118, %v245
    %247 = vmatprep.mubr.bf16.mxu0 0
    %248 = vmatmul.mubr.bf16.gmra.mxu0 %v190
    %v249 = vpop.f32.mrf.mxu0
    %v250 = vadd.f32 %v114, %v249
    %v251 = vpop.f32.mrf.mxu0
    %v252 = vadd.f32 %v118, %v251
    %v253 = vpop.f32.mrf.mxu0
    %v254 = vadd.f32 %v114, %v253
    %v255 = vpop.f32.mrf.mxu0
    %v256 = vadd.f32 %v118, %v255
    %257 = vmatprep.mubr.bf16.mxu0 0
    %258 = vmatmul.mubr.bf16.gmra.mxu0 %v193
    %v259 = vpop.f32.mrf.mxu0
    %v260 = vadd.f32 %v114, %v259
    %v261 = vpop.f32.mrf.mxu0
    %v262 = vadd.f32 %v118, %v261
    %v263 = vpop.f32.mrf.mxu0
    %v264 = vadd.f32 %v114, %v263
    %v265 = vpop.f32.mrf.mxu0
    %v266 = vadd.f32 %v118, %v265
    %267 = vdwg.mxu0
    %268 = vmatprep.subr.bf16.mxu0 0
    %269 = vmatpush1.bf16.msra.mxu0 0
    %270 = vmatprep.subr.bf16.mxu0 0
    %271 = vmatpush1.bf16.msra.mxu0 0
    %272 = vmatprep.subr.bf16.mxu0 0
    %273 = vmatpush1.bf16.msra.mxu0 0
    %274 = vmatprep.subr.bf16.mxu0 0
    %275 = vmatpush1.bf16.msra.mxu0 0
    %276 = vmatprep.subr.bf16.mxu0 0
    %277 = vmatpush1.bf16.msra.mxu0 0
    %278 = vmatprep.subr.bf16.mxu0 0
    %279 = vmatpush1.bf16.msra.mxu0 0
    %280 = vmatprep.subr.bf16.mxu0 0
    %281 = vmatpush1.bf16.msra.mxu0 0
    %282 = vmatprep.subr.bf16.mxu0 %v171
    %283 = vmatpush1.bf16.msra.mxu0 %v170
    %284 = vmatprep.subr.bf16.mxu0 0
    %285 = vmatpush2.bf16.msra.mxu0 0
    %286 = vmatprep.subr.bf16.mxu0 0
    %287 = vmatpush2.bf16.msra.mxu0 0
    %288 = vmatprep.subr.bf16.mxu0 0
    %289 = vmatpush2.bf16.msra.mxu0 0
    %290 = vmatprep.subr.bf16.mxu0 0
    %291 = vmatpush2.bf16.msra.mxu0 0
    %292 = vmatprep.subr.bf16.mxu0 0
    %293 = vmatpush2.bf16.msra.mxu0 0
    %294 = vmatprep.subr.bf16.mxu0 0
    %295 = vmatpush2.bf16.msra.mxu0 0
    %296 = vmatprep.subr.bf16.mxu0 0
    %297 = vmatpush2.bf16.msra.mxu0 0
    %298 = vmatprep.subr.bf16.mxu0 0
    %299 = vmatpush2.bf16.msra.mxu0 0
    %300 = vmatprep.mubr.bf16.mxu0 0
    %301 = vmatmul.mubr.bf16.gmra.mxu0 %v184
    %v302 = vpop.f32.mrf.mxu0
    %v303 = vadd.f32 %v122, %v302
    %v304 = vpop.f32.mrf.mxu0
    %v305 = vadd.f32 %v126, %v304
    %v306 = vpop.f32.mrf.mxu0
    %v307 = vadd.f32 %v122, %v306
    %v308 = vpop.f32.mrf.mxu0
    %v309 = vadd.f32 %v126, %v308
    %310 = vmatprep.mubr.bf16.mxu0 0
    %311 = vmatmul.mubr.bf16.gmra.mxu0 %v187
    %v312 = vpop.f32.mrf.mxu0
    %v313 = vadd.f32 %v122, %v312
    %v314 = vpop.f32.mrf.mxu0
    %v315 = vadd.f32 %v126, %v314
    %v316 = vpop.f32.mrf.mxu0
    %v317 = vadd.f32 %v122, %v316
    %v318 = vpop.f32.mrf.mxu0
    %v319 = vadd.f32 %v126, %v318
    %320 = vmatprep.mubr.bf16.mxu0 0
    %321 = vmatmul.mubr.bf16.gmra.mxu0 %v190
    %v322 = vpop.f32.mrf.mxu0
    %v323 = vadd.f32 %v122, %v322
    %v324 = vpop.f32.mrf.mxu0
    %v325 = vadd.f32 %v126, %v324
    %v326 = vpop.f32.mrf.mxu0
    %v327 = vadd.f32 %v122, %v326
    %v328 = vpop.f32.mrf.mxu0
    %v329 = vadd.f32 %v126, %v328
    %330 = vmatprep.mubr.bf16.mxu0 0
    %331 = vmatmul.mubr.bf16.gmra.mxu0 %v193
    %v332 = vpop.f32.mrf.mxu0
    %v333 = vadd.f32 %v122, %v332
    %v334 = vpop.f32.mrf.mxu0
    %v335 = vadd.f32 %v126, %v334
    %v336 = vpop.f32.mrf.mxu0
    %v337 = vadd.f32 %v122, %v336
    %v338 = vpop.f32.mrf.mxu0
    %v339 = vadd.f32 %v126, %v338
    %340 = vdwg.mxu0
    %341 = vmatprep.subr.bf16.mxu0 0
    %342 = vmatpush1.bf16.msra.mxu0 0
    %343 = vmatprep.subr.bf16.mxu0 0
    %344 = vmatpush1.bf16.msra.mxu0 0
    %345 = vmatprep.subr.bf16.mxu0 0
    %346 = vmatpush1.bf16.msra.mxu0 0
    %347 = vmatprep.subr.bf16.mxu0 0
    %348 = vmatpush1.bf16.msra.mxu0 0
    %349 = vmatprep.subr.bf16.mxu0 0
    %350 = vmatpush1.bf16.msra.mxu0 0
    %351 = vmatprep.subr.bf16.mxu0 0
    %352 = vmatpush1.bf16.msra.mxu0 0
    %353 = vmatprep.subr.bf16.mxu0 0
    %354 = vmatpush1.bf16.msra.mxu0 0
    %355 = vmatprep.subr.bf16.mxu0 %v173
    %356 = vmatpush1.bf16.msra.mxu0 %v172
    %357 = vmatprep.subr.bf16.mxu0 0
    %358 = vmatpush2.bf16.msra.mxu0 0
    %359 = vmatprep.subr.bf16.mxu0 0
    %360 = vmatpush2.bf16.msra.mxu0 0
    %361 = vmatprep.subr.bf16.mxu0 0
    %362 = vmatpush2.bf16.msra.mxu0 0
    %363 = vmatprep.subr.bf16.mxu0 0
    %364 = vmatpush2.bf16.msra.mxu0 0
    %365 = vmatprep.subr.bf16.mxu0 0
    %366 = vmatpush2.bf16.msra.mxu0 0
    %367 = vmatprep.subr.bf16.mxu0 0
    %368 = vmatpush2.bf16.msra.mxu0 0
    %369 = vmatprep.subr.bf16.mxu0 0
    %370 = vmatpush2.bf16.msra.mxu0 0
    %371 = vmatprep.subr.bf16.mxu0 0
    %372 = vmatpush2.bf16.msra.mxu0 0
    %373 = vmatprep.mubr.bf16.mxu0 0
    %374 = vmatmul.mubr.bf16.gmra.mxu0 %v184
    %v375 = vpop.f32.mrf.mxu0
    %v376 = vadd.f32 %v130, %v375
    %v377 = vpop.f32.mrf.mxu0
    %v378 = vadd.f32 %v134, %v377
    %v379 = vpop.f32.mrf.mxu0
    %v380 = vadd.f32 %v130, %v379
    %v381 = vpop.f32.mrf.mxu0
    %v382 = vadd.f32 %v134, %v381
    %383 = vmatprep.mubr.bf16.mxu0 0
    %384 = vmatmul.mubr.bf16.gmra.mxu0 %v187
    %v385 = vpop.f32.mrf.mxu0
    %v386 = vadd.f32 %v130, %v385
    %v387 = vpop.f32.mrf.mxu0
    %v388 = vadd.f32 %v134, %v387
    %v389 = vpop.f32.mrf.mxu0
    %v390 = vadd.f32 %v130, %v389
    %v391 = vpop.f32.mrf.mxu0
    %v392 = vadd.f32 %v134, %v391
    %393 = vmatprep.mubr.bf16.mxu0 0
    %394 = vmatmul.mubr.bf16.gmra.mxu0 %v190
    %v395 = vpop.f32.mrf.mxu0
    %v396 = vadd.f32 %v130, %v395
    %v397 = vpop.f32.mrf.mxu0
    %v398 = vadd.f32 %v134, %v397
    %v399 = vpop.f32.mrf.mxu0
    %v400 = vadd.f32 %v130, %v399
    %v401 = vpop.f32.mrf.mxu0
    %v402 = vadd.f32 %v134, %v401
    %403 = vmatprep.mubr.bf16.mxu0 0
    %404 = vmatmul.mubr.bf16.gmra.mxu0 %v193
    %v405 = vpop.f32.mrf.mxu0
    %v406 = vadd.f32 %v130, %v405
    %v407 = vpop.f32.mrf.mxu0
    %v408 = vadd.f32 %v134, %v407
    %v409 = vpop.f32.mrf.mxu0
    %v410 = vadd.f32 %v130, %v409
    %v411 = vpop.f32.mrf.mxu0
    %v412 = vadd.f32 %v134, %v411
    %413 = vdwg.mxu0
    %414 = vmatprep.subr.bf16.mxu0 0
    %415 = vmatpush1.bf16.msra.mxu0 0
    %416 = vmatprep.subr.bf16.mxu0 0
    %417 = vmatpush1.bf16.msra.mxu0 0
    %418 = vmatprep.subr.bf16.mxu0 0
    %419 = vmatpush1.bf16.msra.mxu0 0
    %420 = vmatprep.subr.bf16.mxu0 0
    %421 = vmatpush1.bf16.msra.mxu0 0
    %422 = vmatprep.subr.bf16.mxu0 0
    %423 = vmatpush1.bf16.msra.mxu0 0
    %424 = vmatprep.subr.bf16.mxu0 0
    %425 = vmatpush1.bf16.msra.mxu0 0
    %426 = vmatprep.subr.bf16.mxu0 0
    %427 = vmatpush1.bf16.msra.mxu0 0
    %428 = vmatprep.subr.bf16.mxu0 0
    %429 = vmatpush1.bf16.msra.mxu0 %v174
    %430 = vmatprep.subr.bf16.mxu0 0
    %431 = vmatpush2.bf16.msra.mxu0 0
    %432 = vmatprep.subr.bf16.mxu0 0
    %433 = vmatpush2.bf16.msra.mxu0 0
    %434 = vmatprep.subr.bf16.mxu0 0
    %435 = vmatpush2.bf16.msra.mxu0 0
    %436 = vmatprep.subr.bf16.mxu0 0
    %437 = vmatpush2.bf16.msra.mxu0 0
    %438 = vmatprep.subr.bf16.mxu0 0
    %439 = vmatpush2.bf16.msra.mxu0 0
    %440 = vmatprep.subr.bf16.mxu0 0
    %441 = vmatpush2.bf16.msra.mxu0 0
    %442 = vmatprep.subr.bf16.mxu0 0
    %443 = vmatpush2.bf16.msra.mxu0 0
    %444 = vmatprep.subr.bf16.mxu0 0
    %445 = vmatpush2.bf16.msra.mxu0 0
    %446 = vmatprep.mubr.bf16.mxu0 0
    %447 = vmatmul.mubr.bf16.gmra.mxu0 %v184
    %v448 = vpop.f32.mrf.mxu0
    %v449 = vadd.f32 %v138, %v448
    %v450 = vpop.f32.mrf.mxu0
    %v451 = vpop.f32.mrf.mxu0
    %v452 = vadd.f32 %v138, %v451
    %v453 = vpop.f32.mrf.mxu0
    %454 = vmatprep.mubr.bf16.mxu0 0
    %455 = vmatmul.mubr.bf16.gmra.mxu0 %v187
    %v456 = vpop.f32.mrf.mxu0
    %v457 = vadd.f32 %v138, %v456
    %v458 = vpop.f32.mrf.mxu0
    %v459 = vpop.f32.mrf.mxu0
    %v460 = vadd.f32 %v138, %v459
    %v461 = vpop.f32.mrf.mxu0
    %462 = vmatprep.mubr.bf16.mxu0 0
    %463 = vmatmul.mubr.bf16.gmra.mxu0 %v190
    %v464 = vpop.f32.mrf.mxu0
    %v465 = vadd.f32 %v138, %v464
    %v466 = vpop.f32.mrf.mxu0
    %v467 = vpop.f32.mrf.mxu0
    %v468 = vadd.f32 %v138, %v467
    %v469 = vpop.f32.mrf.mxu0
    %470 = vmatprep.mubr.bf16.mxu0 0
    %471 = vmatmul.mubr.bf16.gmra.mxu0 %v193
    %v472 = vpop.f32.mrf.mxu0
    %v473 = vadd.f32 %v138, %v472
    %v474 = vpop.f32.mrf.mxu0
    %v475 = vpop.f32.mrf.mxu0
    %v476 = vadd.f32 %v138, %v475
    %v477 = vpop.f32.mrf.mxu0
    %478 = vdwg.mxu0
    %v479 = vmax.f32 %v230, 0.0
    %v480 = vmax.f32 %v232, 0.0
    %v481 = vmax.f32 %v303, 0.0
    %v482 = vmax.f32 %v305, 0.0
    %v483 = vmax.f32 %v376, 0.0
    %v484 = vmax.f32 %v378, 0.0
    %v485 = vmax.f32 %v449, 0.0
    %v486 = vmax.f32 %v234, 0.0
    %v487 = vmax.f32 %v236, 0.0
    %v488 = vmax.f32 %v307, 0.0
    %v489 = vmax.f32 %v309, 0.0
    %v490 = vmax.f32 %v380, 0.0
    %v491 = vmax.f32 %v382, 0.0
    %v492 = vmax.f32 %v452, 0.0
    %v493 = vmax.f32 %v240, 0.0
    %v494 = vmax.f32 %v242, 0.0
    %v495 = vmax.f32 %v313, 0.0
    %v496 = vmax.f32 %v315, 0.0
    %v497 = vmax.f32 %v386, 0.0
    %v498 = vmax.f32 %v388, 0.0
    %v499 = vmax.f32 %v457, 0.0
    %v500 = vmax.f32 %v244, 0.0
    %v501 = vmax.f32 %v246, 0.0
    %v502 = vmax.f32 %v317, 0.0
    %v503 = vmax.f32 %v319, 0.0
    %v504 = vmax.f32 %v390, 0.0
    %v505 = vmax.f32 %v392, 0.0
    %v506 = vmax.f32 %v460, 0.0
    %v507 = vmax.f32 %v250, 0.0
    %v508 = vmax.f32 %v252, 0.0
    %v509 = vmax.f32 %v323, 0.0
    %v510 = vmax.f32 %v325, 0.0
    %v511 = vmax.f32 %v396, 0.0
    %v512 = vmax.f32 %v398, 0.0
    %v513 = vmax.f32 %v465, 0.0
    %v514 = vmax.f32 %v254, 0.0
    %v515 = vmax.f32 %v256, 0.0
    %v516 = vmax.f32 %v327, 0.0
    %v517 = vmax.f32 %v329, 0.0
    %v518 = vmax.f32 %v400, 0.0
    %v519 = vmax.f32 %v402, 0.0
    %v520 = vmax.f32 %v468, 0.0
    %v521 = vmax.f32 %v260, 0.0
    %v522 = vmax.f32 %v262, 0.0
    %v523 = vmax.f32 %v333, 0.0
    %v524 = vmax.f32 %v335, 0.0
    %v525 = vmax.f32 %v406, 0.0
    %v526 = vmax.f32 %v408, 0.0
    %v527 = vmax.f32 %v473, 0.0
    %v528 = vmax.f32 %v264, 0.0
    %v529 = vmax.f32 %v266, 0.0
    %v530 = vmax.f32 %v337, 0.0
    %v531 = vmax.f32 %v339, 0.0
    %v532 = vmax.f32 %v410, 0.0
    %v533 = vmax.f32 %v412, 0.0
    %v534 = vmax.f32 %v476, 0.0
    %v535 = vpack.c.bf16 %v486, %v479
    %v536 = vpack.c.bf16 %v487, %v480
    %v537 = vpack.c.bf16 %v488, %v481
    %v538 = vpack.c.bf16 %v489, %v482
    %v539 = vpack.c.bf16 %v490, %v483
    %v540 = vpack.c.bf16 %v491, %v484
    %v541 = vpack.c.bf16 %v492, %v485
    %v542 = vpack.c.bf16 %v500, %v493
    %v543 = vpack.c.bf16 %v501, %v494
    %v544 = vpack.c.bf16 %v502, %v495
    %v545 = vpack.c.bf16 %v503, %v496
    %v546 = vpack.c.bf16 %v504, %v497
    %v547 = vpack.c.bf16 %v505, %v498
    %v548 = vpack.c.bf16 %v506, %v499
    %v549 = vpack.c.bf16 %v514, %v507
    %v550 = vpack.c.bf16 %v515, %v508
    %v551 = vpack.c.bf16 %v516, %v509
    %v552 = vpack.c.bf16 %v517, %v510
    %v553 = vpack.c.bf16 %v518, %v511
    %v554 = vpack.c.bf16 %v519, %v512
    %v555 = vpack.c.bf16 %v520, %v513
    %v556 = vpack.c.bf16 %v528, %v521
    %v557 = vpack.c.bf16 %v529, %v522
    %v558 = vpack.c.bf16 %v530, %v523
    %v559 = vpack.c.bf16 %v531, %v524
    %v560 = vpack.c.bf16 %v532, %v525
    %v561 = vpack.c.bf16 %v533, %v526
    %v562 = vpack.c.bf16 %v534, %v527
    %v563 = vld [vmem:[#allocation6] sm:$0xff]
    %v564 = vld [vmem:[#allocation6 + $0x8] sm:$0xff]
    %v565 = vld [vmem:[#allocation6 + $0x10] sm:$0xff]
    %v566 = vld [vmem:[#allocation6 + $0x18] sm:$0xf]
    %v567 = vld [vmem:[#allocation6 + $0x1c] sm:$0xff]
    %v568 = vld [vmem:[#allocation6 + $0x24] sm:$0xff]
    %v569 = vld [vmem:[#allocation6 + $0x2c] sm:$0xff]
    %v570 = vld [vmem:[#allocation6 + $0x34] sm:$0xf]
    %v571 = vld [vmem:[#allocation6 + $0x38] sm:$0xff]
    %v572 = vld [vmem:[#allocation6 + $0x40] sm:$0xff]
    %v573 = vld [vmem:[#allocation6 + $0x48] sm:$0xff]
    %v574 = vld [vmem:[#allocation6 + $0x50] sm:$0xf]
    %v575 = vld [vmem:[#allocation6 + $0x54] sm:$0xff]
    %v576 = vld [vmem:[#allocation6 + $0x5c] sm:$0xff]
    %v577 = vld [vmem:[#allocation6 + $0x64] sm:$0xff]
    %v578 = vld [vmem:[#allocation6 + $0x6c] sm:$0xf]
    %v579 = vld [vmem:[#allocation6 + $0x70] sm:$0xff]
    %v580 = vld [vmem:[#allocation6 + $0x78] sm:$0xff]
    %v581 = vld [vmem:[#allocation6 + $0x80] sm:$0xff]
    %v582 = vld [vmem:[#allocation6 + $0x88] sm:$0xf]
    %v583 = vld [vmem:[#allocation6 + $0x8c] sm:$0xff]
    %v584 = vld [vmem:[#allocation6 + $0x94] sm:$0xff]
    %v585 = vld [vmem:[#allocation6 + $0x9c] sm:$0xff]
    %v586 = vld [vmem:[#allocation6 + $0xa4] sm:$0xf]
    %v587 = vld [vmem:[#allocation6 + $0xa8] sm:$0xff]
    %v588 = vld [vmem:[#allocation6 + $0xb0] sm:$0xff]
    %v589 = vld [vmem:[#allocation6 + $0xb8] sm:$0xff]
    %v590 = vld [vmem:[#allocation6 + $0xc0] sm:$0xf]
    %v591 = vld [vmem:[#allocation6 + $0xc4] sm:$0xff]
    %v592 = vld [vmem:[#allocation6 + $0xcc] sm:$0xff]
    %v593 = vld [vmem:[#allocation6 + $0xd4] sm:$0xff]
    %v594 = vld [vmem:[#allocation6 + $0xdc] sm:$0xf]
    %v595 = vld [vmem:[#allocation6 + $0xe0] sm:$0xff]
    %v596 = vld [vmem:[#allocation6 + $0xe8] sm:$0xff]
    %v597 = vld [vmem:[#allocation6 + $0xf0] sm:$0xff]
    %v598 = vld [vmem:[#allocation6 + $0xf8] sm:$0xf]
    %v599 = vld [vmem:[#allocation6 + $0xfc] sm:$0xff]
    %v600 = vld [vmem:[#allocation6 + $0x104] sm:$0xff]
    %v601 = vld [vmem:[#allocation6 + $0x10c] sm:$0xff]
    %v602 = vld [vmem:[#allocation6 + $0x114] sm:$0xf]
    %v603 = vld [vmem:[#allocation6 + $0x118] sm:$0xff]
    %v604 = vld [vmem:[#allocation6 + $0x120] sm:$0xff]
    %v605 = vld [vmem:[#allocation6 + $0x128] sm:$0xff]
    %v606 = vld [vmem:[#allocation6 + $0x130] sm:$0xf]
    %v607 = vld [vmem:[#allocation6 + $0x134] sm:$0xff]
    %v608 = vld [vmem:[#allocation6 + $0x13c] sm:$0xff]
    %v609 = vld [vmem:[#allocation6 + $0x144] sm:$0xff]
    %v610 = vld [vmem:[#allocation6 + $0x14c] sm:$0xf]
    %v611 = vld [vmem:[#allocation6 + $0x150] sm:$0xff]
    %v612 = vld [vmem:[#allocation6 + $0x158] sm:$0xff]
    %v613 = vld [vmem:[#allocation6 + $0x160] sm:$0xff]
    %v614 = vld [vmem:[#allocation6 + $0x168] sm:$0xf]
    %v615 = vld [vmem:[#allocation6 + $0x16c] sm:$0xff]
    %v616 = vld [vmem:[#allocation6 + $0x174] sm:$0xff]
    %v617 = vld [vmem:[#allocation6 + $0x17c] sm:$0xff]
    %v618 = vld [vmem:[#allocation6 + $0x184] sm:$0xf]
    %v619 = vld [vmem:[#allocation6 + $0x188] sm:$0xff]
    %v620 = vld [vmem:[#allocation6 + $0x190] sm:$0xff]
    %v621 = vld [vmem:[#allocation6 + $0x198] sm:$0xff]
    %v622 = vld [vmem:[#allocation6 + $0x1a0] sm:$0xf]
    %v623 = vld [vmem:[#allocation6 + $0x1a4] sm:$0xff]
    %v624 = vld [vmem:[#allocation6 + $0x1ac] sm:$0xff]
    %v625 = vld [vmem:[#allocation6 + $0x1b4] sm:$0xff]
    %v626 = vld [vmem:[#allocation6 + $0x1bc] sm:$0xf]
    %v627 = vld [vmem:[#allocation6 + $0x1c0] sm:$0xff]
    %v628 = vld [vmem:[#allocation6 + $0x1c8] sm:$0xff]
    %v629 = vld [vmem:[#allocation6 + $0x1d0] sm:$0xff]
    %v630 = vld [vmem:[#allocation6 + $0x1d8] sm:$0xf]
    %v631 = vld [vmem:[#allocation6 + $0x1dc] sm:$0xff]
    %v632 = vld [vmem:[#allocation6 + $0x1e4] sm:$0xff]
    %v633 = vld [vmem:[#allocation6 + $0x1ec] sm:$0xff]
    %v634 = vld [vmem:[#allocation6 + $0x1f4] sm:$0xf]
    %v635 = vld [vmem:[#allocation6 + $0x1f8] sm:$0xff]
    %v636 = vld [vmem:[#allocation6 + $0x200] sm:$0xff]
    %v637 = vld [vmem:[#allocation6 + $0x208] sm:$0xff]
    %v638 = vld [vmem:[#allocation6 + $0x210] sm:$0xf]
    %v639 = vld [vmem:[#allocation6 + $0x214] sm:$0xff]
    %v640 = vld [vmem:[#allocation6 + $0x21c] sm:$0xff]
    %v641 = vld [vmem:[#allocation6 + $0x224] sm:$0xff]
    %v642 = vld [vmem:[#allocation6 + $0x22c] sm:$0xf]
    %v643 = vld [vmem:[#allocation6 + $0x230] sm:$0xff]
    %v644 = vld [vmem:[#allocation6 + $0x238] sm:$0xff]
    %v645 = vld [vmem:[#allocation6 + $0x240] sm:$0xff]
    %v646 = vld [vmem:[#allocation6 + $0x248] sm:$0xf]
    %v647 = vld [vmem:[#allocation6 + $0x24c] sm:$0xff]
    %v648 = vld [vmem:[#allocation6 + $0x254] sm:$0xff]
    %v649 = vld [vmem:[#allocation6 + $0x25c] sm:$0xff]
    %v650 = vld [vmem:[#allocation6 + $0x264] sm:$0xf]
    %v651 = vld [vmem:[#allocation6 + $0x268] sm:$0xff]
    %v652 = vld [vmem:[#allocation6 + $0x270] sm:$0xff]
    %v653 = vld [vmem:[#allocation6 + $0x278] sm:$0xff]
    %v654 = vld [vmem:[#allocation6 + $0x280] sm:$0xf]
    %v655 = vld [vmem:[#allocation6 + $0x284] sm:$0xff]
    %v656 = vld [vmem:[#allocation6 + $0x28c] sm:$0xff]
    %v657 = vld [vmem:[#allocation6 + $0x294] sm:$0xff]
    %v658 = vld [vmem:[#allocation6 + $0x29c] sm:$0xf]
    %v659 = vld [vmem:[#allocation6 + $0x2a0] sm:$0xff]
    %v660 = vld [vmem:[#allocation6 + $0x2a8] sm:$0xff]
    %v661 = vld [vmem:[#allocation6 + $0x2b0] sm:$0xff]
    %v662 = vld [vmem:[#allocation6 + $0x2b8] sm:$0xf]
    %v663 = vld [vmem:[#allocation6 + $0x2bc] sm:$0xff]
    %v664 = vld [vmem:[#allocation6 + $0x2c4] sm:$0xff]
    %v665 = vld [vmem:[#allocation6 + $0x2cc] sm:$0xff]
    %v666 = vld [vmem:[#allocation6 + $0x2d4] sm:$0xf]
    %v667 = vld [vmem:[#allocation6 + $0x2d8] sm:$0xff]
    %v668 = vld [vmem:[#allocation6 + $0x2e0] sm:$0xff]
    %v669 = vld [vmem:[#allocation6 + $0x2e8] sm:$0xff]
    %v670 = vld [vmem:[#allocation6 + $0x2f0] sm:$0xf]
    %v671 = vld [vmem:[#allocation6 + $0x2f4] sm:$0xff]
    %v672 = vld [vmem:[#allocation6 + $0x2fc] sm:$0xff]
    %v673 = vld [vmem:[#allocation6 + $0x304] sm:$0xff]
    %v674 = vld [vmem:[#allocation6 + $0x30c] sm:$0xf]
    %v675 = vld [vmem:[#allocation6 + $0x310] sm:$0xff]
    %v676 = vld [vmem:[#allocation6 + $0x318] sm:$0xff]
    %v677 = vld [vmem:[#allocation6 + $0x320] sm:$0xff]
    %v678 = vld [vmem:[#allocation6 + $0x328] sm:$0xf]
    %v679 = vld [vmem:[#allocation6 + $0x32c] sm:$0xff]
    %v680 = vld [vmem:[#allocation6 + $0x334] sm:$0xff]
    %v681 = vld [vmem:[#allocation6 + $0x33c] sm:$0xff]
    %v682 = vld [vmem:[#allocation6 + $0x344] sm:$0xf]
    %v683 = vld [vmem:[#allocation6 + $0x348] sm:$0xff]
    %v684 = vld [vmem:[#allocation6 + $0x350] sm:$0xff]
    %v685 = vld [vmem:[#allocation6 + $0x358] sm:$0xff]
    %v686 = vld [vmem:[#allocation6 + $0x360] sm:$0xf]
    %v687 = vld [vmem:[#allocation6 + $0x364] sm:$0xff]
    %v688 = vld [vmem:[#allocation6 + $0x36c] sm:$0xff]
    %v689 = vld [vmem:[#allocation6 + $0x374] sm:$0xff]
    %v690 = vld [vmem:[#allocation6 + $0x37c] sm:$0xf]
    %v691 = vld [vmem:[#allocation6 + $0x380] sm:$0xff]
    %v692 = vld [vmem:[#allocation6 + $0x388] sm:$0xff]
    %v693 = vld [vmem:[#allocation6 + $0x390] sm:$0xff]
    %v694 = vld [vmem:[#allocation6 + $0x398] sm:$0xf]
    %v695 = vld [vmem:[#allocation6 + $0x39c] sm:$0xff]
    %v696 = vld [vmem:[#allocation6 + $0x3a4] sm:$0xff]
    %v697 = vld [vmem:[#allocation6 + $0x3ac] sm:$0xff]
    %v698 = vld [vmem:[#allocation6 + $0x3b4] sm:$0xf]
    %v699 = vld [vmem:[#allocation6 + $0x3b8] sm:$0xff]
    %v700 = vld [vmem:[#allocation6 + $0x3c0] sm:$0xff]
    %v701 = vld [vmem:[#allocation6 + $0x3c8] sm:$0xff]
    %v702 = vld [vmem:[#allocation6 + $0x3d0] sm:$0xf]
    %v703 = vld [vmem:[#allocation6 + $0x3d4] sm:$0xff]
    %v704 = vld [vmem:[#allocation6 + $0x3dc] sm:$0xff]
    %v705 = vld [vmem:[#allocation6 + $0x3e4] sm:$0xff]
    %v706 = vld [vmem:[#allocation6 + $0x3ec] sm:$0xf]
    %v707 = vld [vmem:[#allocation6 + $0x3f0] sm:$0xff]
    %v708 = vld [vmem:[#allocation6 + $0x3f8] sm:$0xff]
    %v709 = vld [vmem:[#allocation6 + $0x400] sm:$0xff]
    %v710 = vld [vmem:[#allocation6 + $0x408] sm:$0xf]
    %v711 = vld [vmem:[#allocation6 + $0x40c] sm:$0xff]
    %v712 = vld [vmem:[#allocation6 + $0x414] sm:$0xff]
    %v713 = vld [vmem:[#allocation6 + $0x41c] sm:$0xff]
    %v714 = vld [vmem:[#allocation6 + $0x424] sm:$0xf]
    %v715 = vld [vmem:[#allocation6 + $0x428] sm:$0xff]
    %v716 = vld [vmem:[#allocation6 + $0x430] sm:$0xff]
    %v717 = vld [vmem:[#allocation6 + $0x438] sm:$0xff]
    %v718 = vld [vmem:[#allocation6 + $0x440] sm:$0xf]
    %v719 = vld [vmem:[#allocation6 + $0x444] sm:$0xff]
    %v720 = vld [vmem:[#allocation6 + $0x44c] sm:$0xff]
    %v721 = vld [vmem:[#allocation6 + $0x454] sm:$0xff]
    %v722 = vld [vmem:[#allocation6 + $0x45c] sm:$0xf]
    %v723 = vld [vmem:[#allocation6 + $0x460] sm:$0xff]
    %v724 = vld [vmem:[#allocation6 + $0x468] sm:$0xff]
    %v725 = vld [vmem:[#allocation6 + $0x470] sm:$0xff]
    %v726 = vld [vmem:[#allocation6 + $0x478] sm:$0xf]
    %v727 = vld [vmem:[#allocation6 + $0x47c] sm:$0xff]
    %v728 = vld [vmem:[#allocation6 + $0x484] sm:$0xff]
    %v729 = vld [vmem:[#allocation6 + $0x48c] sm:$0xff]
    %v730 = vld [vmem:[#allocation6 + $0x494] sm:$0xf]
    %v731 = vld [vmem:[#allocation6 + $0x498] sm:$0xff]
    %v732 = vld [vmem:[#allocation6 + $0x4a0] sm:$0xff]
    %v733 = vld [vmem:[#allocation6 + $0x4a8] sm:$0xff]
    %v734 = vld [vmem:[#allocation6 + $0x4b0] sm:$0xf]
    %v735 = vld [vmem:[#allocation6 + $0x4b4] sm:$0xff]
    %v736 = vld [vmem:[#allocation6 + $0x4bc] sm:$0xff]
    %v737 = vld [vmem:[#allocation6 + $0x4c4] sm:$0xff]
    %v738 = vld [vmem:[#allocation6 + $0x4cc] sm:$0xf]
    %v739 = vld [vmem:[#allocation6 + $0x4d0] sm:$0xff]
    %v740 = vld [vmem:[#allocation6 + $0x4d8] sm:$0xff]
    %v741 = vld [vmem:[#allocation6 + $0x4e0] sm:$0xff]
    %v742 = vld [vmem:[#allocation6 + $0x4e8] sm:$0xf]
    %v743 = vld [vmem:[#allocation6 + $0x4ec] sm:$0xff]
    %v744 = vld [vmem:[#allocation6 + $0x4f4] sm:$0xff]
    %v745 = vld [vmem:[#allocation6 + $0x4fc] sm:$0xff]
    %v746 = vld [vmem:[#allocation6 + $0x504] sm:$0xf]
    %v747 = vld [vmem:[#allocation6 + $0x508] sm:$0xff]
    %v748 = vld [vmem:[#allocation6 + $0x510] sm:$0xff]
    %v749 = vld [vmem:[#allocation6 + $0x518] sm:$0xff]
    %v750 = vld [vmem:[#allocation6 + $0x520] sm:$0xf]
    %v751 = vld [vmem:[#allocation6 + $0x524] sm:$0xff]
    %v752 = vld [vmem:[#allocation6 + $0x52c] sm:$0xff]
    %v753 = vld [vmem:[#allocation6 + $0x534] sm:$0xff]
    %v754 = vld [vmem:[#allocation6 + $0x53c] sm:$0xf]
    %v755 = vld [vmem:[#allocation6 + $0x540] sm:$0xff]
    %v756 = vld [vmem:[#allocation6 + $0x548] sm:$0xff]
    %v757 = vld [vmem:[#allocation6 + $0x550] sm:$0xff]
    %v758 = vld [vmem:[#allocation6 + $0x558] sm:$0xf]
    %v759 = vld [vmem:[#allocation6 + $0x55c] sm:$0xff]
    %v760 = vld [vmem:[#allocation6 + $0x564] sm:$0xff]
    %v761 = vld [vmem:[#allocation6 + $0x56c] sm:$0xff]
    %v762 = vld [vmem:[#allocation6 + $0x574] sm:$0xf]
    %v763 = vld [vmem:[#allocation6 + $0x578] sm:$0xff]
    %v764 = vld [vmem:[#allocation6 + $0x580] sm:$0xff]
    %v765 = vld [vmem:[#allocation6 + $0x588] sm:$0xff]
    %v766 = vld [vmem:[#allocation6 + $0x590] sm:$0xf]
    %v767 = vld [vmem:[#allocation6 + $0x594] sm:$0xff]
    %v768 = vld [vmem:[#allocation6 + $0x59c] sm:$0xff]
    %v769 = vld [vmem:[#allocation6 + $0x5a4] sm:$0xff]
    %v770 = vld [vmem:[#allocation6 + $0x5ac] sm:$0xf]
    %v771 = vld [vmem:[#allocation6 + $0x5b0] sm:$0xff]
    %v772 = vld [vmem:[#allocation6 + $0x5b8] sm:$0xff]
    %v773 = vld [vmem:[#allocation6 + $0x5c0] sm:$0xff]
    %v774 = vld [vmem:[#allocation6 + $0x5c8] sm:$0xf]
    %v775 = vld [vmem:[#allocation6 + $0x5cc] sm:$0xff]
    %v776 = vld [vmem:[#allocation6 + $0x5d4] sm:$0xff]
    %v777 = vld [vmem:[#allocation6 + $0x5dc] sm:$0xff]
    %v778 = vld [vmem:[#allocation6 + $0x5e4] sm:$0xf]
    %v779 = vld [vmem:[#allocation6 + $0x5e8] sm:$0xff]
    %v780 = vld [vmem:[#allocation6 + $0x5f0] sm:$0xff]
    %v781 = vld [vmem:[#allocation6 + $0x5f8] sm:$0xff]
    %v782 = vld [vmem:[#allocation6 + $0x600] sm:$0xf]
    %v783 = vld [vmem:[#allocation6 + $0x604] sm:$0xff]
    %v784 = vld [vmem:[#allocation6 + $0x60c] sm:$0xff]
    %v785 = vld [vmem:[#allocation6 + $0x614] sm:$0xff]
    %v786 = vld [vmem:[#allocation6 + $0x61c] sm:$0xf]
    %v787 = vld [vmem:[#allocation6 + $0x620] sm:$0xff]
    %v788 = vld [vmem:[#allocation6 + $0x628] sm:$0xff]
    %v789 = vld [vmem:[#allocation6 + $0x630] sm:$0xff]
    %v790 = vld [vmem:[#allocation6 + $0x638] sm:$0xf]
    %v791 = vld [vmem:[#allocation6 + $0x63c] sm:$0xff]
    %v792 = vld [vmem:[#allocation6 + $0x644] sm:$0xff]
    %v793 = vld [vmem:[#allocation6 + $0x64c] sm:$0xff]
    %v794 = vld [vmem:[#allocation6 + $0x654] sm:$0xf]
    %v795 = vld [vmem:[#allocation6 + $0x658] sm:$0xff]
    %v796 = vld [vmem:[#allocation6 + $0x660] sm:$0xff]
    %v797 = vld [vmem:[#allocation6 + $0x668] sm:$0xff]
    %v798 = vld [vmem:[#allocation6 + $0x670] sm:$0xf]
    %v799 = vld [vmem:[#allocation6 + $0x674] sm:$0xff]
    %v800 = vld [vmem:[#allocation6 + $0x67c] sm:$0xff]
    %v801 = vld [vmem:[#allocation6 + $0x684] sm:$0xff]
    %v802 = vld [vmem:[#allocation6 + $0x68c] sm:$0xf]
    %v803 = vld [vmem:[#allocation6 + $0x690] sm:$0xff]
    %v804 = vld [vmem:[#allocation6 + $0x698] sm:$0xff]
    %v805 = vld [vmem:[#allocation6 + $0x6a0] sm:$0xff]
    %v806 = vld [vmem:[#allocation6 + $0x6a8] sm:$0xf]
    %v807 = vld [vmem:[#allocation6 + $0x6ac] sm:$0xff]
    %v808 = vld [vmem:[#allocation6 + $0x6b4] sm:$0xff]
    %v809 = vld [vmem:[#allocation6 + $0x6bc] sm:$0xff]
    %v810 = vld [vmem:[#allocation6 + $0x6c4] sm:$0xf]
    %v811 = vld [vmem:[#allocation6 + $0x6c8] sm:$0xff]
    %v812 = vld [vmem:[#allocation6 + $0x6d0] sm:$0xff]
    %v813 = vld [vmem:[#allocation6 + $0x6d8] sm:$0xff]
    %v814 = vld [vmem:[#allocation6 + $0x6e0] sm:$0xf]
    %v815 = vld [vmem:[#allocation6 + $0x6e4] sm:$0xff]
    %v816 = vld [vmem:[#allocation6 + $0x6ec] sm:$0xff]
    %v817 = vld [vmem:[#allocation6 + $0x6f4] sm:$0xff]
    %v818 = vld [vmem:[#allocation6 + $0x6fc] sm:$0xf]
    %v819 = vld [vmem:[#allocation6 + $0x700] sm:$0xff]
    %v820 = vld [vmem:[#allocation6 + $0x708] sm:$0xff]
    %v821 = vld [vmem:[#allocation6 + $0x710] sm:$0xff]
    %v822 = vld [vmem:[#allocation6 + $0x718] sm:$0xf]
    %v823 = vld [vmem:[#allocation6 + $0x71c] sm:$0xff]
    %v824 = vld [vmem:[#allocation6 + $0x724] sm:$0xff]
    %v825 = vld [vmem:[#allocation6 + $0x72c] sm:$0xff]
    %v826 = vld [vmem:[#allocation6 + $0x734] sm:$0xf]
    %v827 = vld [vmem:[#allocation6 + $0x738] sm:$0xff]
    %v828 = vld [vmem:[#allocation6 + $0x740] sm:$0xff]
    %v829 = vld [vmem:[#allocation6 + $0x748] sm:$0xff]
    %v830 = vld [vmem:[#allocation6 + $0x750] sm:$0xf]
    %v831 = vld [vmem:[#allocation6 + $0x754] sm:$0xff]
    %v832 = vld [vmem:[#allocation6 + $0x75c] sm:$0xff]
    %v833 = vld [vmem:[#allocation6 + $0x764] sm:$0xff]
    %v834 = vld [vmem:[#allocation6 + $0x76c] sm:$0xf]
    %v835 = vld [vmem:[#allocation6 + $0x770] sm:$0xff]
    %v836 = vld [vmem:[#allocation6 + $0x778] sm:$0xff]
    %v837 = vld [vmem:[#allocation6 + $0x780] sm:$0xff]
    %v838 = vld [vmem:[#allocation6 + $0x788] sm:$0xf]
    %v839 = vld [vmem:[#allocation6 + $0x78c] sm:$0xff]
    %v840 = vld [vmem:[#allocation6 + $0x794] sm:$0xff]
    %v841 = vld [vmem:[#allocation6 + $0x79c] sm:$0xff]
    %v842 = vld [vmem:[#allocation6 + $0x7a4] sm:$0xf]
    %v843 = vld [vmem:[#allocation6 + $0x7a8] sm:$0xff]
    %v844 = vld [vmem:[#allocation6 + $0x7b0] sm:$0xff]
    %v845 = vld [vmem:[#allocation6 + $0x7b8] sm:$0xff]
    %v846 = vld [vmem:[#allocation6 + $0x7c0] sm:$0xf]
    %v847 = vld [vmem:[#allocation6 + $0x7c4] sm:$0xff]
    %v848 = vld [vmem:[#allocation6 + $0x7cc] sm:$0xff]
    %v849 = vld [vmem:[#allocation6 + $0x7d4] sm:$0xff]
    %v850 = vld [vmem:[#allocation6 + $0x7dc] sm:$0xf]
    %v851 = vld [vmem:[#allocation6 + $0x7e0] sm:$0xff]
    %v852 = vld [vmem:[#allocation6 + $0x7e8] sm:$0xff]
    %v853 = vld [vmem:[#allocation6 + $0x7f0] sm:$0xff]
    %v854 = vld [vmem:[#allocation6 + $0x7f8] sm:$0xf]
    %v855 = vld [vmem:[#allocation6 + $0x7fc] sm:$0xff]
    %v856 = vld [vmem:[#allocation6 + $0x804] sm:$0xff]
    %v857 = vld [vmem:[#allocation6 + $0x80c] sm:$0xff]
    %v858 = vld [vmem:[#allocation6 + $0x814] sm:$0xf]
    %v859 = vld [vmem:[#allocation6 + $0x818] sm:$0xff]
    %v860 = vld [vmem:[#allocation6 + $0x820] sm:$0xff]
    %v861 = vld [vmem:[#allocation6 + $0x828] sm:$0xff]
    %v862 = vld [vmem:[#allocation6 + $0x830] sm:$0xf]
    %v863 = vld [vmem:[#allocation6 + $0x834] sm:$0xff]
    %v864 = vld [vmem:[#allocation6 + $0x83c] sm:$0xff]
    %v865 = vld [vmem:[#allocation6 + $0x844] sm:$0xff]
    %v866 = vld [vmem:[#allocation6 + $0x84c] sm:$0xf]
    %v867 = vld [vmem:[#allocation6 + $0x850] sm:$0xff]
    %v868 = vld [vmem:[#allocation6 + $0x858] sm:$0xff]
    %v869 = vld [vmem:[#allocation6 + $0x860] sm:$0xff]
    %v870 = vld [vmem:[#allocation6 + $0x868] sm:$0xf]
    %v871 = vld [vmem:[#allocation6 + $0x86c] sm:$0xff]
    %v872 = vld [vmem:[#allocation6 + $0x874] sm:$0xff]
    %v873 = vld [vmem:[#allocation6 + $0x87c] sm:$0xff]
    %v874 = vld [vmem:[#allocation6 + $0x884] sm:$0xf]
    %v875 = vld [vmem:[#allocation6 + $0x888] sm:$0xff]
    %v876 = vld [vmem:[#allocation6 + $0x890] sm:$0xff]
    %v877 = vld [vmem:[#allocation6 + $0x898] sm:$0xff]
    %v878 = vld [vmem:[#allocation6 + $0x8a0] sm:$0xf]
    %v879 = vld [vmem:[#allocation6 + $0x8a4] sm:$0xff]
    %v880 = vld [vmem:[#allocation6 + $0x8ac] sm:$0xff]
    %v881 = vld [vmem:[#allocation6 + $0x8b4] sm:$0xff]
    %v882 = vld [vmem:[#allocation6 + $0x8bc] sm:$0xf]
    %v883 = vld [vmem:[#allocation6 + $0x8c0] sm:$0xff]
    %v884 = vld [vmem:[#allocation6 + $0x8c8] sm:$0xff]
    %v885 = vld [vmem:[#allocation6 + $0x8d0] sm:$0xff]
    %v886 = vld [vmem:[#allocation6 + $0x8d8] sm:$0xf]
    %v887 = vld [vmem:[#allocation6 + $0x8dc] sm:$0xff]
    %v888 = vld [vmem:[#allocation6 + $0x8e4] sm:$0xff]
    %v889 = vld [vmem:[#allocation6 + $0x8ec] sm:$0xff]
    %v890 = vld [vmem:[#allocation6 + $0x8f4] sm:$0xf]
    %v891 = vld [vmem:[#allocation6 + $0x8f8] sm:$0xff]
    %v892 = vld [vmem:[#allocation6 + $0x900] sm:$0xff]
    %v893 = vld [vmem:[#allocation6 + $0x908] sm:$0xff]
    %v894 = vld [vmem:[#allocation6 + $0x910] sm:$0xf]
    %v895 = vld [vmem:[#allocation6 + $0x914] sm:$0xff]
    %v896 = vld [vmem:[#allocation6 + $0x91c] sm:$0xff]
    %v897 = vld [vmem:[#allocation6 + $0x924] sm:$0xff]
    %v898 = vld [vmem:[#allocation6 + $0x92c] sm:$0xf]
    %v899 = vld [vmem:[#allocation6 + $0x930] sm:$0xff]
    %v900 = vld [vmem:[#allocation6 + $0x938] sm:$0xff]
    %v901 = vld [vmem:[#allocation6 + $0x940] sm:$0xff]
    %v902 = vld [vmem:[#allocation6 + $0x948] sm:$0xf]
    %v903 = vld [vmem:[#allocation6 + $0x94c] sm:$0xff]
    %v904 = vld [vmem:[#allocation6 + $0x954] sm:$0xff]
    %v905 = vld [vmem:[#allocation6 + $0x95c] sm:$0xff]
    %v906 = vld [vmem:[#allocation6 + $0x964] sm:$0xf]
    %v907 = vld [vmem:[#allocation6 + $0x968] sm:$0xff]
    %v908 = vld [vmem:[#allocation6 + $0x970] sm:$0xff]
    %v909 = vld [vmem:[#allocation6 + $0x978] sm:$0xff]
    %v910 = vld [vmem:[#allocation6 + $0x980] sm:$0xf]
    %v911 = vld [vmem:[#allocation6 + $0x984] sm:$0xff]
    %v912 = vld [vmem:[#allocation6 + $0x98c] sm:$0xff]
    %v913 = vld [vmem:[#allocation6 + $0x994] sm:$0xff]
    %v914 = vld [vmem:[#allocation6 + $0x99c] sm:$0xf]
    %v915 = vld [vmem:[#allocation6 + $0x9a0] sm:$0xff]
    %v916 = vld [vmem:[#allocation6 + $0x9a8] sm:$0xff]
    %v917 = vld [vmem:[#allocation6 + $0x9b0] sm:$0xff]
    %v918 = vld [vmem:[#allocation6 + $0x9b8] sm:$0xf]
    %v919 = vld [vmem:[#allocation6 + $0x9bc] sm:$0xff]
    %v920 = vld [vmem:[#allocation6 + $0x9c4] sm:$0xff]
    %v921 = vld [vmem:[#allocation6 + $0x9cc] sm:$0xff]
    %v922 = vld [vmem:[#allocation6 + $0x9d4] sm:$0xf]
    %v923 = vld [vmem:[#allocation6 + $0x9d8] sm:$0xff]
    %v924 = vld [vmem:[#allocation6 + $0x9e0] sm:$0xff]
    %v925 = vld [vmem:[#allocation6 + $0x9e8] sm:$0xff]
    %v926 = vld [vmem:[#allocation6 + $0x9f0] sm:$0xf]
    %v927 = vld [vmem:[#allocation6 + $0x9f4] sm:$0xff]
    %v928 = vld [vmem:[#allocation6 + $0x9fc] sm:$0xff]
    %v929 = vld [vmem:[#allocation6 + $0xa04] sm:$0xff]
    %v930 = vld [vmem:[#allocation6 + $0xa0c] sm:$0xf]
    %v931 = vld [vmem:[#allocation6 + $0xa10] sm:$0xff]
    %v932 = vld [vmem:[#allocation6 + $0xa18] sm:$0xff]
    %v933 = vld [vmem:[#allocation6 + $0xa20] sm:$0xff]
    %v934 = vld [vmem:[#allocation6 + $0xa28] sm:$0xf]
    %v935 = vld [vmem:[#allocation6 + $0xa2c] sm:$0xff]
    %v936 = vld [vmem:[#allocation6 + $0xa34] sm:$0xff]
    %v937 = vld [vmem:[#allocation6 + $0xa3c] sm:$0xff]
    %v938 = vld [vmem:[#allocation6 + $0xa44] sm:$0xf]
    %v939 = vld [vmem:[#allocation6 + $0xa48] sm:$0xff]
    %v940 = vld [vmem:[#allocation6 + $0xa50] sm:$0xff]
    %v941 = vld [vmem:[#allocation6 + $0xa58] sm:$0xff]
    %v942 = vld [vmem:[#allocation6 + $0xa60] sm:$0xf]
    %v943 = vld [vmem:[#allocation6 + $0xa64] sm:$0xff]
    %v944 = vld [vmem:[#allocation6 + $0xa6c] sm:$0xff]
    %v945 = vld [vmem:[#allocation6 + $0xa74] sm:$0xff]
    %v946 = vld [vmem:[#allocation6 + $0xa7c] sm:$0xf]
    %v947 = vld [vmem:[#allocation6 + $0xa80] sm:$0xff]
    %v948 = vld [vmem:[#allocation6 + $0xa88] sm:$0xff]
    %v949 = vld [vmem:[#allocation6 + $0xa90] sm:$0xff]
    %v950 = vld [vmem:[#allocation6 + $0xa98] sm:$0xf]
    %v951 = vld [vmem:[#allocation6 + $0xa9c] sm:$0xff]
    %v952 = vld [vmem:[#allocation6 + $0xaa4] sm:$0xff]
    %v953 = vld [vmem:[#allocation6 + $0xaac] sm:$0xff]
    %v954 = vld [vmem:[#allocation6 + $0xab4] sm:$0xf]
    %v955 = vld [vmem:[#allocation6 + $0xab8] sm:$0xff]
    %v956 = vld [vmem:[#allocation6 + $0xac0] sm:$0xff]
    %v957 = vld [vmem:[#allocation6 + $0xac8] sm:$0xff]
    %v958 = vld [vmem:[#allocation6 + $0xad0] sm:$0xf]
    %v959 = vld [vmem:[#allocation6 + $0xad4] sm:$0xff]
    %v960 = vld [vmem:[#allocation6 + $0xadc] sm:$0xff]
    %v961 = vld [vmem:[#allocation6 + $0xae4] sm:$0xff]
    %v962 = vld [vmem:[#allocation6 + $0xaec] sm:$0xf]
    %v963 = vld [vmem:[#allocation7] sm:$0x7f]
    %v965 = vlaneseq
    %v966 = vshrl.u32 %v965, 7
    %v967 = vsub.s32 0, %v966
    %v968 = vrot.slane %v963, %v967
    %v969 = vlaneseq
    %v970 = vshrl.u32 %v969, 7
    %v971 = vsub.s32 1, %v970
    %v972 = vrot.slane %v963, %v971
    %v973 = vlaneseq
    %v974 = vshrl.u32 %v973, 7
    %v975 = vsub.s32 2, %v974
    %v976 = vrot.slane %v963, %v975
    %v977 = vlaneseq
    %v978 = vshrl.u32 %v977, 7
    %v979 = vsub.s32 3, %v978
    %v980 = vrot.slane %v963, %v979
    %v981 = vlaneseq
    %v982 = vshrl.u32 %v981, 7
    %v983 = vsub.s32 4, %v982
    %v984 = vrot.slane %v963, %v983
    %v985 = vlaneseq
    %v986 = vshrl.u32 %v985, 7
    %v987 = vsub.s32 5, %v986
    %v988 = vrot.slane %v963, %v987
    %v989 = vlaneseq
    %v990 = vshrl.u32 %v989, 7
    %v991 = vsub.s32 6, %v990
    %v992 = vrot.slane %v963, %v991
    %v1400 = vunpack.c.l.b16 %v563
    %v1401 = vunpack.c.h.b16 %v563
    %v1402 = vunpack.c.l.b16 %v564
    %v1403 = vunpack.c.h.b16 %v564
    %v1404 = vunpack.c.l.b16 %v565
    %v1405 = vunpack.c.h.b16 %v565
    %v1406 = vunpack.c.l.b16 %v566
    %v1407 = vunpack.c.l.b16 %v567
    %v1408 = vunpack.c.h.b16 %v567
    %v1409 = vunpack.c.l.b16 %v568
    %v1410 = vunpack.c.h.b16 %v568
    %v1411 = vunpack.c.l.b16 %v569
    %v1412 = vunpack.c.h.b16 %v569
    %v1413 = vunpack.c.l.b16 %v570
    %v1414 = vunpack.c.l.b16 %v571
    %v1415 = vunpack.c.h.b16 %v571
    %v1416 = vunpack.c.l.b16 %v572
    %v1417 = vunpack.c.h.b16 %v572
    %v1418 = vunpack.c.l.b16 %v573
    %v1419 = vunpack.c.h.b16 %v573
    %v1420 = vunpack.c.l.b16 %v574
    %v1421 = vunpack.c.l.b16 %v575
    %v1422 = vunpack.c.h.b16 %v575
    %v1423 = vunpack.c.l.b16 %v576
    %v1424 = vunpack.c.h.b16 %v576
    %v1425 = vunpack.c.l.b16 %v577
    %v1426 = vunpack.c.h.b16 %v577
    %v1427 = vunpack.c.l.b16 %v578
    %v1428 = vunpack.c.l.b16 %v579
    %v1429 = vunpack.c.h.b16 %v579
    %v1430 = vunpack.c.l.b16 %v580
    %v1431 = vunpack.c.h.b16 %v580
    %v1432 = vunpack.c.l.b16 %v581
    %v1433 = vunpack.c.h.b16 %v581
    %v1434 = vunpack.c.l.b16 %v582
    %v1435 = vunpack.c.l.b16 %v583
    %v1436 = vunpack.c.h.b16 %v583
    %v1437 = vunpack.c.l.b16 %v584
    %v1438 = vunpack.c.h.b16 %v584
    %v1439 = vunpack.c.l.b16 %v585
    %v1440 = vunpack.c.h.b16 %v585
    %v1441 = vunpack.c.l.b16 %v586
    %v1442 = vunpack.c.l.b16 %v587
    %v1443 = vunpack.c.h.b16 %v587
    %v1444 = vunpack.c.l.b16 %v588
    %v1445 = vunpack.c.h.b16 %v588
    %v1446 = vunpack.c.l.b16 %v589
    %v1447 = vunpack.c.h.b16 %v589
    %v1448 = vunpack.c.l.b16 %v590
    %v1449 = vunpack.c.l.b16 %v591
    %v1450 = vunpack.c.h.b16 %v591
    %v1451 = vunpack.c.l.b16 %v592
    %v1452 = vunpack.c.h.b16 %v592
    %v1453 = vunpack.c.l.b16 %v593
    %v1454 = vunpack.c.h.b16 %v593
    %v1455 = vunpack.c.l.b16 %v594
    %v1456 = vunpack.c.l.b16 %v595
    %v1457 = vunpack.c.h.b16 %v595
    %v1458 = vunpack.c.l.b16 %v596
    %v1459 = vunpack.c.h.b16 %v596
    %v1460 = vunpack.c.l.b16 %v597
    %v1461 = vunpack.c.h.b16 %v597
    %v1462 = vunpack.c.l.b16 %v598
    %v1463 = vunpack.c.l.b16 %v599
    %v1464 = vunpack.c.h.b16 %v599
    %v1465 = vunpack.c.l.b16 %v600
    %v1466 = vunpack.c.h.b16 %v600
    %v1467 = vunpack.c.l.b16 %v601
    %v1468 = vunpack.c.h.b16 %v601
    %v1469 = vunpack.c.l.b16 %v602
    %v1470 = vunpack.c.l.b16 %v603
    %v1471 = vunpack.c.h.b16 %v603
    %v1472 = vunpack.c.l.b16 %v604
    %v1473 = vunpack.c.h.b16 %v604
    %v1474 = vunpack.c.l.b16 %v605
    %v1475 = vunpack.c.h.b16 %v605
    %v1476 = vunpack.c.l.b16 %v606
    %v1477 = vunpack.c.l.b16 %v607
    %v1478 = vunpack.c.h.b16 %v607
    %v1479 = vunpack.c.l.b16 %v608
    %v1480 = vunpack.c.h.b16 %v608
    %v1481 = vunpack.c.l.b16 %v609
    %v1482 = vunpack.c.h.b16 %v609
    %v1483 = vunpack.c.l.b16 %v610
    %v1484 = vunpack.c.l.b16 %v611
    %v1485 = vunpack.c.h.b16 %v611
    %v1486 = vunpack.c.l.b16 %v612
    %v1487 = vunpack.c.h.b16 %v612
    %v1488 = vunpack.c.l.b16 %v613
    %v1489 = vunpack.c.h.b16 %v613
    %v1490 = vunpack.c.l.b16 %v614
    %v1491 = vunpack.c.l.b16 %v615
    %v1492 = vunpack.c.h.b16 %v615
    %v1493 = vunpack.c.l.b16 %v616
    %v1494 = vunpack.c.h.b16 %v616
    %v1495 = vunpack.c.l.b16 %v617
    %v1496 = vunpack.c.h.b16 %v617
    %v1497 = vunpack.c.l.b16 %v618
    %v1498 = vunpack.c.l.b16 %v619
    %v1499 = vunpack.c.h.b16 %v619
    %v1500 = vunpack.c.l.b16 %v620
    %v1501 = vunpack.c.h.b16 %v620
    %v1502 = vunpack.c.l.b16 %v621
    %v1503 = vunpack.c.h.b16 %v621
    %v1504 = vunpack.c.l.b16 %v622
    %v1505 = vunpack.c.l.b16 %v623
    %v1506 = vunpack.c.h.b16 %v623
    %v1507 = vunpack.c.l.b16 %v624
    %v1508 = vunpack.c.h.b16 %v624
    %v1509 = vunpack.c.l.b16 %v625
    %v1510 = vunpack.c.h.b16 %v625
    %v1511 = vunpack.c.l.b16 %v626
    %v1512 = vunpack.c.l.b16 %v627
    %v1513 = vunpack.c.h.b16 %v627
    %v1514 = vunpack.c.l.b16 %v628
    %v1515 = vunpack.c.h.b16 %v628
    %v1516 = vunpack.c.l.b16 %v629
    %v1517 = vunpack.c.h.b16 %v629
    %v1518 = vunpack.c.l.b16 %v630
    %v1519 = vunpack.c.l.b16 %v631
    %v1520 = vunpack.c.h.b16 %v631
    %v1521 = vunpack.c.l.b16 %v632
    %v1522 = vunpack.c.h.b16 %v632
    %v1523 = vunpack.c.l.b16 %v633
    %v1524 = vunpack.c.h.b16 %v633
    %v1525 = vunpack.c.l.b16 %v634
    %v1526 = vunpack.c.l.b16 %v635
    %v1527 = vunpack.c.h.b16 %v635
    %v1528 = vunpack.c.l.b16 %v636
    %v1529 = vunpack.c.h.b16 %v636
    %v1530 = vunpack.c.l.b16 %v637
    %v1531 = vunpack.c.h.b16 %v637
    %v1532 = vunpack.c.l.b16 %v638
    %v1533 = vunpack.c.l.b16 %v639
    %v1534 = vunpack.c.h.b16 %v639
    %v1535 = vunpack.c.l.b16 %v640
    %v1536 = vunpack.c.h.b16 %v640
    %v1537 = vunpack.c.l.b16 %v641
    %v1538 = vunpack.c.h.b16 %v641
    %v1539 = vunpack.c.l.b16 %v642
    %v1540 = vunpack.c.l.b16 %v643
    %v1541 = vunpack.c.h.b16 %v643
    %v1542 = vunpack.c.l.b16 %v644
    %v1543 = vunpack.c.h.b16 %v644
    %v1544 = vunpack.c.l.b16 %v645
    %v1545 = vunpack.c.h.b16 %v645
    %v1546 = vunpack.c.l.b16 %v646
    %v1547 = vunpack.c.l.b16 %v647
    %v1548 = vunpack.c.h.b16 %v647
    %v1549 = vunpack.c.l.b16 %v648
    %v1550 = vunpack.c.h.b16 %v648
    %v1551 = vunpack.c.l.b16 %v649
    %v1552 = vunpack.c.h.b16 %v649
    %v1553 = vunpack.c.l.b16 %v650
    %v1554 = vunpack.c.l.b16 %v651
    %v1555 = vunpack.c.h.b16 %v651
    %v1556 = vunpack.c.l.b16 %v652
    %v1557 = vunpack.c.h.b16 %v652
    %v1558 = vunpack.c.l.b16 %v653
    %v1559 = vunpack.c.h.b16 %v653
    %v1560 = vunpack.c.l.b16 %v654
    %v1561 = vunpack.c.l.b16 %v655
    %v1562 = vunpack.c.h.b16 %v655
    %v1563 = vunpack.c.l.b16 %v656
    %v1564 = vunpack.c.h.b16 %v656
    %v1565 = vunpack.c.l.b16 %v657
    %v1566 = vunpack.c.h.b16 %v657
    %v1567 = vunpack.c.l.b16 %v658
    %v1568 = vunpack.c.l.b16 %v659
    %v1569 = vunpack.c.h.b16 %v659
    %v1570 = vunpack.c.l.b16 %v660
    %v1571 = vunpack.c.h.b16 %v660
    %v1572 = vunpack.c.l.b16 %v661
    %v1573 = vunpack.c.h.b16 %v661
    %v1574 = vunpack.c.l.b16 %v662
    %v1575 = vunpack.c.l.b16 %v663
    %v1576 = vunpack.c.h.b16 %v663
    %v1577 = vunpack.c.l.b16 %v664
    %v1578 = vunpack.c.h.b16 %v664
    %v1579 = vunpack.c.l.b16 %v665
    %v1580 = vunpack.c.h.b16 %v665
    %v1581 = vunpack.c.l.b16 %v666
    %v1582 = vunpack.c.l.b16 %v667
    %v1583 = vunpack.c.h.b16 %v667
    %v1584 = vunpack.c.l.b16 %v668
    %v1585 = vunpack.c.h.b16 %v668
    %v1586 = vunpack.c.l.b16 %v669
    %v1587 = vunpack.c.h.b16 %v669
    %v1588 = vunpack.c.l.b16 %v670
    %v1589 = vunpack.c.l.b16 %v671
    %v1590 = vunpack.c.h.b16 %v671
    %v1591 = vunpack.c.l.b16 %v672
    %v1592 = vunpack.c.h.b16 %v672
    %v1593 = vunpack.c.l.b16 %v673
    %v1594 = vunpack.c.h.b16 %v673
    %v1595 = vunpack.c.l.b16 %v674
    %v1596 = vunpack.c.l.b16 %v675
    %v1597 = vunpack.c.h.b16 %v675
    %v1598 = vunpack.c.l.b16 %v676
    %v1599 = vunpack.c.h.b16 %v676
    %v1600 = vunpack.c.l.b16 %v677
    %v1601 = vunpack.c.h.b16 %v677
    %v1602 = vunpack.c.l.b16 %v678
    %v1603 = vunpack.c.l.b16 %v679
    %v1604 = vunpack.c.h.b16 %v679
    %v1605 = vunpack.c.l.b16 %v680
    %v1606 = vunpack.c.h.b16 %v680
    %v1607 = vunpack.c.l.b16 %v681
    %v1608 = vunpack.c.h.b16 %v681
    %v1609 = vunpack.c.l.b16 %v682
    %v1610 = vunpack.c.l.b16 %v683
    %v1611 = vunpack.c.h.b16 %v683
    %v1612 = vunpack.c.l.b16 %v684
    %v1613 = vunpack.c.h.b16 %v684
    %v1614 = vunpack.c.l.b16 %v685
    %v1615 = vunpack.c.h.b16 %v685
    %v1616 = vunpack.c.l.b16 %v686
    %v1617 = vunpack.c.l.b16 %v687
    %v1618 = vunpack.c.h.b16 %v687
    %v1619 = vunpack.c.l.b16 %v688
    %v1620 = vunpack.c.h.b16 %v688
    %v1621 = vunpack.c.l.b16 %v689
    %v1622 = vunpack.c.h.b16 %v689
    %v1623 = vunpack.c.l.b16 %v690
    %v1624 = vunpack.c.l.b16 %v691
    %v1625 = vunpack.c.h.b16 %v691
    %v1626 = vunpack.c.l.b16 %v692
    %v1627 = vunpack.c.h.b16 %v692
    %v1628 = vunpack.c.l.b16 %v693
    %v1629 = vunpack.c.h.b16 %v693
    %v1630 = vunpack.c.l.b16 %v694
    %v1631 = vunpack.c.l.b16 %v695
    %v1632 = vunpack.c.h.b16 %v695
    %v1633 = vunpack.c.l.b16 %v696
    %v1634 = vunpack.c.h.b16 %v696
    %v1635 = vunpack.c.l.b16 %v697
    %v1636 = vunpack.c.h.b16 %v697
    %v1637 = vunpack.c.l.b16 %v698
    %v1638 = vunpack.c.l.b16 %v699
    %v1639 = vunpack.c.h.b16 %v699
    %v1640 = vunpack.c.l.b16 %v700
    %v1641 = vunpack.c.h.b16 %v700
    %v1642 = vunpack.c.l.b16 %v701
    %v1643 = vunpack.c.h.b16 %v701
    %v1644 = vunpack.c.l.b16 %v702
    %v1645 = vunpack.c.l.b16 %v703
    %v1646 = vunpack.c.h.b16 %v703
    %v1647 = vunpack.c.l.b16 %v704
    %v1648 = vunpack.c.h.b16 %v704
    %v1649 = vunpack.c.l.b16 %v705
    %v1650 = vunpack.c.h.b16 %v705
    %v1651 = vunpack.c.l.b16 %v706
    %v1652 = vunpack.c.l.b16 %v707
    %v1653 = vunpack.c.h.b16 %v707
    %v1654 = vunpack.c.l.b16 %v708
    %v1655 = vunpack.c.h.b16 %v708
    %v1656 = vunpack.c.l.b16 %v709
    %v1657 = vunpack.c.h.b16 %v709
    %v1658 = vunpack.c.l.b16 %v710
    %v1659 = vunpack.c.l.b16 %v711
    %v1660 = vunpack.c.h.b16 %v711
    %v1661 = vunpack.c.l.b16 %v712
    %v1662 = vunpack.c.h.b16 %v712
    %v1663 = vunpack.c.l.b16 %v713
    %v1664 = vunpack.c.h.b16 %v713
    %v1665 = vunpack.c.l.b16 %v714
    %v1666 = vunpack.c.l.b16 %v715
    %v1667 = vunpack.c.h.b16 %v715
    %v1668 = vunpack.c.l.b16 %v716
    %v1669 = vunpack.c.h.b16 %v716
    %v1670 = vunpack.c.l.b16 %v717
    %v1671 = vunpack.c.h.b16 %v717
    %v1672 = vunpack.c.l.b16 %v718
    %v1673 = vunpack.c.l.b16 %v719
    %v1674 = vunpack.c.h.b16 %v719
    %v1675 = vunpack.c.l.b16 %v720
    %v1676 = vunpack.c.h.b16 %v720
    %v1677 = vunpack.c.l.b16 %v721
    %v1678 = vunpack.c.h.b16 %v721
    %v1679 = vunpack.c.l.b16 %v722
    %v1680 = vunpack.c.l.b16 %v723
    %v1681 = vunpack.c.h.b16 %v723
    %v1682 = vunpack.c.l.b16 %v724
    %v1683 = vunpack.c.h.b16 %v724
    %v1684 = vunpack.c.l.b16 %v725
    %v1685 = vunpack.c.h.b16 %v725
    %v1686 = vunpack.c.l.b16 %v726
    %v1687 = vunpack.c.l.b16 %v727
    %v1688 = vunpack.c.h.b16 %v727
    %v1689 = vunpack.c.l.b16 %v728
    %v1690 = vunpack.c.h.b16 %v728
    %v1691 = vunpack.c.l.b16 %v729
    %v1692 = vunpack.c.h.b16 %v729
    %v1693 = vunpack.c.l.b16 %v730
    %v1694 = vunpack.c.l.b16 %v731
    %v1695 = vunpack.c.h.b16 %v731
    %v1696 = vunpack.c.l.b16 %v732
    %v1697 = vunpack.c.h.b16 %v732
    %v1698 = vunpack.c.l.b16 %v733
    %v1699 = vunpack.c.h.b16 %v733
    %v1700 = vunpack.c.l.b16 %v734
    %v1701 = vunpack.c.l.b16 %v735
    %v1702 = vunpack.c.h.b16 %v735
    %v1703 = vunpack.c.l.b16 %v736
    %v1704 = vunpack.c.h.b16 %v736
    %v1705 = vunpack.c.l.b16 %v737
    %v1706 = vunpack.c.h.b16 %v737
    %v1707 = vunpack.c.l.b16 %v738
    %v1708 = vunpack.c.l.b16 %v739
    %v1709 = vunpack.c.h.b16 %v739
    %v1710 = vunpack.c.l.b16 %v740
    %v1711 = vunpack.c.h.b16 %v740
    %v1712 = vunpack.c.l.b16 %v741
    %v1713 = vunpack.c.h.b16 %v741
    %v1714 = vunpack.c.l.b16 %v742
    %v1715 = vunpack.c.l.b16 %v743
    %v1716 = vunpack.c.h.b16 %v743
    %v1717 = vunpack.c.l.b16 %v744
    %v1718 = vunpack.c.h.b16 %v744
    %v1719 = vunpack.c.l.b16 %v745
    %v1720 = vunpack.c.h.b16 %v745
    %v1721 = vunpack.c.l.b16 %v746
    %v1722 = vunpack.c.l.b16 %v747
    %v1723 = vunpack.c.h.b16 %v747
    %v1724 = vunpack.c.l.b16 %v748
    %v1725 = vunpack.c.h.b16 %v748
    %v1726 = vunpack.c.l.b16 %v749
    %v1727 = vunpack.c.h.b16 %v749
    %v1728 = vunpack.c.l.b16 %v750
    %v1729 = vunpack.c.l.b16 %v751
    %v1730 = vunpack.c.h.b16 %v751
    %v1731 = vunpack.c.l.b16 %v752
    %v1732 = vunpack.c.h.b16 %v752
    %v1733 = vunpack.c.l.b16 %v753
    %v1734 = vunpack.c.h.b16 %v753
    %v1735 = vunpack.c.l.b16 %v754
    %v1736 = vunpack.c.l.b16 %v755
    %v1737 = vunpack.c.h.b16 %v755
    %v1738 = vunpack.c.l.b16 %v756
    %v1739 = vunpack.c.h.b16 %v756
    %v1740 = vunpack.c.l.b16 %v757
    %v1741 = vunpack.c.h.b16 %v757
    %v1742 = vunpack.c.l.b16 %v758
    %v1743 = vunpack.c.l.b16 %v759
    %v1744 = vunpack.c.h.b16 %v759
    %v1745 = vunpack.c.l.b16 %v760
    %v1746 = vunpack.c.h.b16 %v760
    %v1747 = vunpack.c.l.b16 %v761
    %v1748 = vunpack.c.h.b16 %v761
    %v1749 = vunpack.c.l.b16 %v762
    %v1750 = vunpack.c.l.b16 %v763
    %v1751 = vunpack.c.h.b16 %v763
    %v1752 = vunpack.c.l.b16 %v764
    %v1753 = vunpack.c.h.b16 %v764
    %v1754 = vunpack.c.l.b16 %v765
    %v1755 = vunpack.c.h.b16 %v765
    %v1756 = vunpack.c.l.b16 %v766
    %v1757 = vunpack.c.l.b16 %v767
    %v1758 = vunpack.c.h.b16 %v767
    %v1759 = vunpack.c.l.b16 %v768
    %v1760 = vunpack.c.h.b16 %v768
    %v1761 = vunpack.c.l.b16 %v769
    %v1762 = vunpack.c.h.b16 %v769
    %v1763 = vunpack.c.l.b16 %v770
    %v1764 = vunpack.c.l.b16 %v771
    %v1765 = vunpack.c.h.b16 %v771
    %v1766 = vunpack.c.l.b16 %v772
    %v1767 = vunpack.c.h.b16 %v772
    %v1768 = vunpack.c.l.b16 %v773
    %v1769 = vunpack.c.h.b16 %v773
    %v1770 = vunpack.c.l.b16 %v774
    %v1771 = vunpack.c.l.b16 %v775
    %v1772 = vunpack.c.h.b16 %v775
    %v1773 = vunpack.c.l.b16 %v776
    %v1774 = vunpack.c.h.b16 %v776
    %v1775 = vunpack.c.l.b16 %v777
    %v1776 = vunpack.c.h.b16 %v777
    %v1777 = vunpack.c.l.b16 %v778
    %v1778 = vunpack.c.l.b16 %v779
    %v1779 = vunpack.c.h.b16 %v779
    %v1780 = vunpack.c.l.b16 %v780
    %v1781 = vunpack.c.h.b16 %v780
    %v1782 = vunpack.c.l.b16 %v781
    %v1783 = vunpack.c.h.b16 %v781
    %v1784 = vunpack.c.l.b16 %v782
    %v1785 = vunpack.c.l.b16 %v783
    %v1786 = vunpack.c.h.b16 %v783
    %v1787 = vunpack.c.l.b16 %v784
    %v1788 = vunpack.c.h.b16 %v784
    %v1789 = vunpack.c.l.b16 %v785
    %v1790 = vunpack.c.h.b16 %v785
    %v1791 = vunpack.c.l.b16 %v786
    %v1792 = vunpack.c.l.b16 %v787
    %v1793 = vunpack.c.h.b16 %v787
    %v1794 = vunpack.c.l.b16 %v788
    %v1795 = vunpack.c.h.b16 %v788
    %v1796 = vunpack.c.l.b16 %v789
    %v1797 = vunpack.c.h.b16 %v789
    %v1798 = vunpack.c.l.b16 %v790
    %v1799 = vunpack.c.l.b16 %v791
    %v1800 = vunpack.c.h.b16 %v791
    %v1801 = vunpack.c.l.b16 %v792
    %v1802 = vunpack.c.h.b16 %v792
    %v1803 = vunpack.c.l.b16 %v793
    %v1804 = vunpack.c.h.b16 %v793
    %v1805 = vunpack.c.l.b16 %v794
    %v1806 = vunpack.c.l.b16 %v795
    %v1807 = vunpack.c.h.b16 %v795
    %v1808 = vunpack.c.l.b16 %v796
    %v1809 = vunpack.c.h.b16 %v796
    %v1810 = vunpack.c.l.b16 %v797
    %v1811 = vunpack.c.h.b16 %v797
    %v1812 = vunpack.c.l.b16 %v798
    %v1813 = vunpack.c.l.b16 %v799
    %v1814 = vunpack.c.h.b16 %v799
    %v1815 = vunpack.c.l.b16 %v800
    %v1816 = vunpack.c.h.b16 %v800
    %v1817 = vunpack.c.l.b16 %v801
    %v1818 = vunpack.c.h.b16 %v801
    %v1819 = vunpack.c.l.b16 %v802
    %v1820 = vunpack.c.l.b16 %v803
    %v1821 = vunpack.c.h.b16 %v803
    %v1822 = vunpack.c.l.b16 %v804
    %v1823 = vunpack.c.h.b16 %v804
    %v1824 = vunpack.c.l.b16 %v805
    %v1825 = vunpack.c.h.b16 %v805
    %v1826 = vunpack.c.l.b16 %v806
    %v1827 = vunpack.c.l.b16 %v807
    %v1828 = vunpack.c.h.b16 %v807
    %v1829 = vunpack.c.l.b16 %v808
    %v1830 = vunpack.c.h.b16 %v808
    %v1831 = vunpack.c.l.b16 %v809
    %v1832 = vunpack.c.h.b16 %v809
    %v1833 = vunpack.c.l.b16 %v810
    %v1834 = vunpack.c.l.b16 %v811
    %v1835 = vunpack.c.h.b16 %v811
    %v1836 = vunpack.c.l.b16 %v812
    %v1837 = vunpack.c.h.b16 %v812
    %v1838 = vunpack.c.l.b16 %v813
    %v1839 = vunpack.c.h.b16 %v813
    %v1840 = vunpack.c.l.b16 %v814
    %v1841 = vunpack.c.l.b16 %v815
    %v1842 = vunpack.c.h.b16 %v815
    %v1843 = vunpack.c.l.b16 %v816
    %v1844 = vunpack.c.h.b16 %v816
    %v1845 = vunpack.c.l.b16 %v817
    %v1846 = vunpack.c.h.b16 %v817
    %v1847 = vunpack.c.l.b16 %v818
    %v1848 = vunpack.c.l.b16 %v819
    %v1849 = vunpack.c.h.b16 %v819
    %v1850 = vunpack.c.l.b16 %v820
    %v1851 = vunpack.c.h.b16 %v820
    %v1852 = vunpack.c.l.b16 %v821
    %v1853 = vunpack.c.h.b16 %v821
    %v1854 = vunpack.c.l.b16 %v822
    %v1855 = vunpack.c.l.b16 %v823
    %v1856 = vunpack.c.h.b16 %v823
    %v1857 = vunpack.c.l.b16 %v824
    %v1858 = vunpack.c.h.b16 %v824
    %v1859 = vunpack.c.l.b16 %v825
    %v1860 = vunpack.c.h.b16 %v825
    %v1861 = vunpack.c.l.b16 %v826
    %v1862 = vunpack.c.l.b16 %v827
    %v1863 = vunpack.c.h.b16 %v827
    %v1864 = vunpack.c.l.b16 %v828
    %v1865 = vunpack.c.h.b16 %v828
    %v1866 = vunpack.c.l.b16 %v829
    %v1867 = vunpack.c.h.b16 %v829
    %v1868 = vunpack.c.l.b16 %v830
    %v1869 = vunpack.c.l.b16 %v831
    %v1870 = vunpack.c.h.b16 %v831
    %v1871 = vunpack.c.l.b16 %v832
    %v1872 = vunpack.c.h.b16 %v832
    %v1873 = vunpack.c.l.b16 %v833
    %v1874 = vunpack.c.h.b16 %v833
    %v1875 = vunpack.c.l.b16 %v834
    %v1876 = vunpack.c.l.b16 %v835
    %v1877 = vunpack.c.h.b16 %v835
    %v1878 = vunpack.c.l.b16 %v836
    %v1879 = vunpack.c.h.b16 %v836
    %v1880 = vunpack.c.l.b16 %v837
    %v1881 = vunpack.c.h.b16 %v837
    %v1882 = vunpack.c.l.b16 %v838
    %v1883 = vunpack.c.l.b16 %v839
    %v1884 = vunpack.c.h.b16 %v839
    %v1885 = vunpack.c.l.b16 %v840
    %v1886 = vunpack.c.h.b16 %v840
    %v1887 = vunpack.c.l.b16 %v841
    %v1888 = vunpack.c.h.b16 %v841
    %v1889 = vunpack.c.l.b16 %v842
    %v1890 = vunpack.c.l.b16 %v843
    %v1891 = vunpack.c.h.b16 %v843
    %v1892 = vunpack.c.l.b16 %v844
    %v1893 = vunpack.c.h.b16 %v844
    %v1894 = vunpack.c.l.b16 %v845
    %v1895 = vunpack.c.h.b16 %v845
    %v1896 = vunpack.c.l.b16 %v846
    %v1897 = vunpack.c.l.b16 %v847
    %v1898 = vunpack.c.h.b16 %v847
    %v1899 = vunpack.c.l.b16 %v848
    %v1900 = vunpack.c.h.b16 %v848
    %v1901 = vunpack.c.l.b16 %v849
    %v1902 = vunpack.c.h.b16 %v849
    %v1903 = vunpack.c.l.b16 %v850
    %v1904 = vunpack.c.l.b16 %v851
    %v1905 = vunpack.c.h.b16 %v851
    %v1906 = vunpack.c.l.b16 %v852
    %v1907 = vunpack.c.h.b16 %v852
    %v1908 = vunpack.c.l.b16 %v853
    %v1909 = vunpack.c.h.b16 %v853
    %v1910 = vunpack.c.l.b16 %v854
    %v1911 = vunpack.c.l.b16 %v855
    %v1912 = vunpack.c.h.b16 %v855
    %v1913 = vunpack.c.l.b16 %v856
    %v1914 = vunpack.c.h.b16 %v856
    %v1915 = vunpack.c.l.b16 %v857
    %v1916 = vunpack.c.h.b16 %v857
    %v1917 = vunpack.c.l.b16 %v858
    %v1918 = vunpack.c.l.b16 %v859
    %v1919 = vunpack.c.h.b16 %v859
    %v1920 = vunpack.c.l.b16 %v860
    %v1921 = vunpack.c.h.b16 %v860
    %v1922 = vunpack.c.l.b16 %v861
    %v1923 = vunpack.c.h.b16 %v861
    %v1924 = vunpack.c.l.b16 %v862
    %v1925 = vunpack.c.l.b16 %v863
    %v1926 = vunpack.c.h.b16 %v863
    %v1927 = vunpack.c.l.b16 %v864
    %v1928 = vunpack.c.h.b16 %v864
    %v1929 = vunpack.c.l.b16 %v865
    %v1930 = vunpack.c.h.b16 %v865
    %v1931 = vunpack.c.l.b16 %v866
    %v1932 = vunpack.c.l.b16 %v867
    %v1933 = vunpack.c.h.b16 %v867
    %v1934 = vunpack.c.l.b16 %v868
    %v1935 = vunpack.c.h.b16 %v868
    %v1936 = vunpack.c.l.b16 %v869
    %v1937 = vunpack.c.h.b16 %v869
    %v1938 = vunpack.c.l.b16 %v870
    %v1939 = vunpack.c.l.b16 %v871
    %v1940 = vunpack.c.h.b16 %v871
    %v1941 = vunpack.c.l.b16 %v872
    %v1942 = vunpack.c.h.b16 %v872
    %v1943 = vunpack.c.l.b16 %v873
    %v1944 = vunpack.c.h.b16 %v873
    %v1945 = vunpack.c.l.b16 %v874
    %v1946 = vunpack.c.l.b16 %v875
    %v1947 = vunpack.c.h.b16 %v875
    %v1948 = vunpack.c.l.b16 %v876
    %v1949 = vunpack.c.h.b16 %v876
    %v1950 = vunpack.c.l.b16 %v877
    %v1951 = vunpack.c.h.b16 %v877
    %v1952 = vunpack.c.l.b16 %v878
    %v1953 = vunpack.c.l.b16 %v879
    %v1954 = vunpack.c.h.b16 %v879
    %v1955 = vunpack.c.l.b16 %v880
    %v1956 = vunpack.c.h.b16 %v880
    %v1957 = vunpack.c.l.b16 %v881
    %v1958 = vunpack.c.h.b16 %v881
    %v1959 = vunpack.c.l.b16 %v882
    %v1960 = vunpack.c.l.b16 %v883
    %v1961 = vunpack.c.h.b16 %v883
    %v1962 = vunpack.c.l.b16 %v884
    %v1963 = vunpack.c.h.b16 %v884
    %v1964 = vunpack.c.l.b16 %v885
    %v1965 = vunpack.c.h.b16 %v885
    %v1966 = vunpack.c.l.b16 %v886
    %v1967 = vunpack.c.l.b16 %v887
    %v1968 = vunpack.c.h.b16 %v887
    %v1969 = vunpack.c.l.b16 %v888
    %v1970 = vunpack.c.h.b16 %v888
    %v1971 = vunpack.c.l.b16 %v889
    %v1972 = vunpack.c.h.b16 %v889
    %v1973 = vunpack.c.l.b16 %v890
    %v1974 = vunpack.c.l.b16 %v891
    %v1975 = vunpack.c.h.b16 %v891
    %v1976 = vunpack.c.l.b16 %v892
    %v1977 = vunpack.c.h.b16 %v892
    %v1978 = vunpack.c.l.b16 %v893
    %v1979 = vunpack.c.h.b16 %v893
    %v1980 = vunpack.c.l.b16 %v894
    %v1981 = vunpack.c.l.b16 %v895
    %v1982 = vunpack.c.h.b16 %v895
    %v1983 = vunpack.c.l.b16 %v896
    %v1984 = vunpack.c.h.b16 %v896
    %v1985 = vunpack.c.l.b16 %v897
    %v1986 = vunpack.c.h.b16 %v897
    %v1987 = vunpack.c.l.b16 %v898
    %v1988 = vunpack.c.l.b16 %v899
    %v1989 = vunpack.c.h.b16 %v899
    %v1990 = vunpack.c.l.b16 %v900
    %v1991 = vunpack.c.h.b16 %v900
    %v1992 = vunpack.c.l.b16 %v901
    %v1993 = vunpack.c.h.b16 %v901
    %v1994 = vunpack.c.l.b16 %v902
    %v1995 = vunpack.c.l.b16 %v903
    %v1996 = vunpack.c.h.b16 %v903
    %v1997 = vunpack.c.l.b16 %v904
    %v1998 = vunpack.c.h.b16 %v904
    %v1999 = vunpack.c.l.b16 %v905
    %v2000 = vunpack.c.h.b16 %v905
    %v2001 = vunpack.c.l.b16 %v906
    %v2002 = vunpack.c.l.b16 %v907
    %v2003 = vunpack.c.h.b16 %v907
    %v2004 = vunpack.c.l.b16 %v908
    %v2005 = vunpack.c.h.b16 %v908
    %v2006 = vunpack.c.l.b16 %v909
    %v2007 = vunpack.c.h.b16 %v909
    %v2008 = vunpack.c.l.b16 %v910
    %v2009 = vunpack.c.l.b16 %v911
    %v2010 = vunpack.c.h.b16 %v911
    %v2011 = vunpack.c.l.b16 %v912
    %v2012 = vunpack.c.h.b16 %v912
    %v2013 = vunpack.c.l.b16 %v913
    %v2014 = vunpack.c.h.b16 %v913
    %v2015 = vunpack.c.l.b16 %v914
    %v2016 = vunpack.c.l.b16 %v915
    %v2017 = vunpack.c.h.b16 %v915
    %v2018 = vunpack.c.l.b16 %v916
    %v2019 = vunpack.c.h.b16 %v916
    %v2020 = vunpack.c.l.b16 %v917
    %v2021 = vunpack.c.h.b16 %v917
    %v2022 = vunpack.c.l.b16 %v918
    %v2023 = vunpack.c.l.b16 %v919
    %v2024 = vunpack.c.h.b16 %v919
    %v2025 = vunpack.c.l.b16 %v920
    %v2026 = vunpack.c.h.b16 %v920
    %v2027 = vunpack.c.l.b16 %v921
    %v2028 = vunpack.c.h.b16 %v921
    %v2029 = vunpack.c.l.b16 %v922
    %v2030 = vunpack.c.l.b16 %v923
    %v2031 = vunpack.c.h.b16 %v923
    %v2032 = vunpack.c.l.b16 %v924
    %v2033 = vunpack.c.h.b16 %v924
    %v2034 = vunpack.c.l.b16 %v925
    %v2035 = vunpack.c.h.b16 %v925
    %v2036 = vunpack.c.l.b16 %v926
    %v2037 = vunpack.c.l.b16 %v927
    %v2038 = vunpack.c.h.b16 %v927
    %v2039 = vunpack.c.l.b16 %v928
    %v2040 = vunpack.c.h.b16 %v928
    %v2041 = vunpack.c.l.b16 %v929
    %v2042 = vunpack.c.h.b16 %v929
    %v2043 = vunpack.c.l.b16 %v930
    %v2044 = vunpack.c.l.b16 %v931
    %v2045 = vunpack.c.h.b16 %v931
    %v2046 = vunpack.c.l.b16 %v932
    %v2047 = vunpack.c.h.b16 %v932
    %v2048 = vunpack.c.l.b16 %v933
    %v2049 = vunpack.c.h.b16 %v933
    %v2050 = vunpack.c.l.b16 %v934
    %v2051 = vunpack.c.l.b16 %v935
    %v2052 = vunpack.c.h.b16 %v935
    %v2053 = vunpack.c.l.b16 %v936
    %v2054 = vunpack.c.h.b16 %v936
    %v2055 = vunpack.c.l.b16 %v937
    %v2056 = vunpack.c.h.b16 %v937
    %v2057 = vunpack.c.l.b16 %v938
    %v2058 = vunpack.c.l.b16 %v939
    %v2059 = vunpack.c.h.b16 %v939
    %v2060 = vunpack.c.l.b16 %v940
    %v2061 = vunpack.c.h.b16 %v940
    %v2062 = vunpack.c.l.b16 %v941
    %v2063 = vunpack.c.h.b16 %v941
    %v2064 = vunpack.c.l.b16 %v942
    %v2065 = vunpack.c.l.b16 %v943
    %v2066 = vunpack.c.h.b16 %v943
    %v2067 = vunpack.c.l.b16 %v944
    %v2068 = vunpack.c.h.b16 %v944
    %v2069 = vunpack.c.l.b16 %v945
    %v2070 = vunpack.c.h.b16 %v945
    %v2071 = vunpack.c.l.b16 %v946
    %v2072 = vunpack.c.l.b16 %v947
    %v2073 = vunpack.c.h.b16 %v947
    %v2074 = vunpack.c.l.b16 %v948
    %v2075 = vunpack.c.h.b16 %v948
    %v2076 = vunpack.c.l.b16 %v949
    %v2077 = vunpack.c.h.b16 %v949
    %v2078 = vunpack.c.l.b16 %v950
    %v2079 = vunpack.c.l.b16 %v951
    %v2080 = vunpack.c.h.b16 %v951
    %v2081 = vunpack.c.l.b16 %v952
    %v2082 = vunpack.c.h.b16 %v952
    %v2083 = vunpack.c.l.b16 %v953
    %v2084 = vunpack.c.h.b16 %v953
    %v2085 = vunpack.c.l.b16 %v954
    %v2086 = vunpack.c.l.b16 %v955
    %v2087 = vunpack.c.h.b16 %v955
    %v2088 = vunpack.c.l.b16 %v956
    %v2089 = vunpack.c.h.b16 %v956
    %v2090 = vunpack.c.l.b16 %v957
    %v2091 = vunpack.c.h.b16 %v957
    %v2092 = vunpack.c.l.b16 %v958
    %v2093 = vunpack.c.l.b16 %v959
    %v2094 = vunpack.c.h.b16 %v959
    %v2095 = vunpack.c.l.b16 %v960
    %v2096 = vunpack.c.h.b16 %v960
    %v2097 = vunpack.c.l.b16 %v961
    %v2098 = vunpack.c.h.b16 %v961
    %v2099 = vunpack.c.l.b16 %v962
    %v2100 = vpack.c.b16 %v1407, %v1400
    %v2101 = vpack.c.b16 %v1408, %v1401
    %v2102 = vpack.c.b16 %v1409, %v1402
    %v2103 = vpack.c.b16 %v1410, %v1403
    %v2104 = vpack.c.b16 %v1411, %v1404
    %v2105 = vpack.c.b16 %v1412, %v1405
    %v2106 = vpack.c.b16 %v1413, %v1406
    %v2107 = vpack.c.b16 %v1421, %v1414
    %v2108 = vpack.c.b16 %v1422, %v1415
    %v2109 = vpack.c.b16 %v1423, %v1416
    %v2110 = vpack.c.b16 %v1424, %v1417
    %v2111 = vpack.c.b16 %v1425, %v1418
    %v2112 = vpack.c.b16 %v1426, %v1419
    %v2113 = vpack.c.b16 %v1427, %v1420
    %v2114 = vpack.c.b16 %v1435, %v1428
    %v2115 = vpack.c.b16 %v1436, %v1429
    %v2116 = vpack.c.b16 %v1437, %v1430
    %v2117 = vpack.c.b16 %v1438, %v1431
    %v2118 = vpack.c.b16 %v1439, %v1432
    %v2119 = vpack.c.b16 %v1440, %v1433
    %v2120 = vpack.c.b16 %v1441, %v1434
    %v2121 = vpack.c.b16 %v1449, %v1442
    %v2122 = vpack.c.b16 %v1450, %v1443
    %v2123 = vpack.c.b16 %v1451, %v1444
    %v2124 = vpack.c.b16 %v1452, %v1445
    %v2125 = vpack.c.b16 %v1453, %v1446
    %v2126 = vpack.c.b16 %v1454, %v1447
    %v2127 = vpack.c.b16 %v1455, %v1448
    %v2128 = vpack.c.b16 %v1463, %v1456
    %v2129 = vpack.c.b16 %v1464, %v1457
    %v2130 = vpack.c.b16 %v1465, %v1458
    %v2131 = vpack.c.b16 %v1466, %v1459
    %v2132 = vpack.c.b16 %v1467, %v1460
    %v2133 = vpack.c.b16 %v1468, %v1461
    %v2134 = vpack.c.b16 %v1469, %v1462
    %v2135 = vpack.c.b16 %v1477, %v1470
    %v2136 = vpack.c.b16 %v1478, %v1471
    %v2137 = vpack.c.b16 %v1479, %v1472
    %v2138 = vpack.c.b16 %v1480, %v1473
    %v2139 = vpack.c.b16 %v1481, %v1474
    %v2140 = vpack.c.b16 %v1482, %v1475
    %v2141 = vpack.c.b16 %v1483, %v1476
    %v2142 = vpack.c.b16 %v1491, %v1484
    %v2143 = vpack.c.b16 %v1492, %v1485
    %v2144 = vpack.c.b16 %v1493, %v1486
    %v2145 = vpack.c.b16 %v1494, %v1487
    %v2146 = vpack.c.b16 %v1495, %v1488
    %v2147 = vpack.c.b16 %v1496, %v1489
    %v2148 = vpack.c.b16 %v1497, %v1490
    %v2149 = vpack.c.b16 %v1505, %v1498
    %v2150 = vpack.c.b16 %v1506, %v1499
    %v2151 = vpack.c.b16 %v1507, %v1500
    %v2152 = vpack.c.b16 %v1508, %v1501
    %v2153 = vpack.c.b16 %v1509, %v1502
    %v2154 = vpack.c.b16 %v1510, %v1503
    %v2155 = vpack.c.b16 %v1511, %v1504
    %v2156 = vpack.c.b16 %v1519, %v1512
    %v2157 = vpack.c.b16 %v1520, %v1513
    %v2158 = vpack.c.b16 %v1521, %v1514
    %v2159 = vpack.c.b16 %v1522, %v1515
    %v2160 = vpack.c.b16 %v1523, %v1516
    %v2161 = vpack.c.b16 %v1524, %v1517
    %v2162 = vpack.c.b16 %v1525, %v1518
    %v2163 = vpack.c.b16 %v1533, %v1526
    %v2164 = vpack.c.b16 %v1534, %v1527
    %v2165 = vpack.c.b16 %v1535, %v1528
    %v2166 = vpack.c.b16 %v1536, %v1529
    %v2167 = vpack.c.b16 %v1537, %v1530
    %v2168 = vpack.c.b16 %v1538, %v1531
    %v2169 = vpack.c.b16 %v1539, %v1532
    %v2170 = vpack.c.b16 %v1547, %v1540
    %v2171 = vpack.c.b16 %v1548, %v1541
    %v2172 = vpack.c.b16 %v1549, %v1542
    %v2173 = vpack.c.b16 %v1550, %v1543
    %v2174 = vpack.c.b16 %v1551, %v1544
    %v2175 = vpack.c.b16 %v1552, %v1545
    %v2176 = vpack.c.b16 %v1553, %v1546
    %v2177 = vpack.c.b16 %v1561, %v1554
    %v2178 = vpack.c.b16 %v1562, %v1555
    %v2179 = vpack.c.b16 %v1563, %v1556
    %v2180 = vpack.c.b16 %v1564, %v1557
    %v2181 = vpack.c.b16 %v1565, %v1558
    %v2182 = vpack.c.b16 %v1566, %v1559
    %v2183 = vpack.c.b16 %v1567, %v1560
    %v2184 = vpack.c.b16 %v1575, %v1568
    %v2185 = vpack.c.b16 %v1576, %v1569
    %v2186 = vpack.c.b16 %v1577, %v1570
    %v2187 = vpack.c.b16 %v1578, %v1571
    %v2188 = vpack.c.b16 %v1579, %v1572
    %v2189 = vpack.c.b16 %v1580, %v1573
    %v2190 = vpack.c.b16 %v1581, %v1574
    %v2191 = vpack.c.b16 %v1589, %v1582
    %v2192 = vpack.c.b16 %v1590, %v1583
    %v2193 = vpack.c.b16 %v1591, %v1584
    %v2194 = vpack.c.b16 %v1592, %v1585
    %v2195 = vpack.c.b16 %v1593, %v1586
    %v2196 = vpack.c.b16 %v1594, %v1587
    %v2197 = vpack.c.b16 %v1595, %v1588
    %v2198 = vpack.c.b16 %v1603, %v1596
    %v2199 = vpack.c.b16 %v1604, %v1597
    %v2200 = vpack.c.b16 %v1605, %v1598
    %v2201 = vpack.c.b16 %v1606, %v1599
    %v2202 = vpack.c.b16 %v1607, %v1600
    %v2203 = vpack.c.b16 %v1608, %v1601
    %v2204 = vpack.c.b16 %v1609, %v1602
    %v2205 = vpack.c.b16 %v1617, %v1610
    %v2206 = vpack.c.b16 %v1618, %v1611
    %v2207 = vpack.c.b16 %v1619, %v1612
    %v2208 = vpack.c.b16 %v1620, %v1613
    %v2209 = vpack.c.b16 %v1621, %v1614
    %v2210 = vpack.c.b16 %v1622, %v1615
    %v2211 = vpack.c.b16 %v1623, %v1616
    %v2212 = vpack.c.b16 %v1631, %v1624
    %v2213 = vpack.c.b16 %v1632, %v1625
    %v2214 = vpack.c.b16 %v1633, %v1626
    %v2215 = vpack.c.b16 %v1634, %v1627
    %v2216 = vpack.c.b16 %v1635, %v1628
    %v2217 = vpack.c.b16 %v1636, %v1629
    %v2218 = vpack.c.b16 %v1637, %v1630
    %v2219 = vpack.c.b16 %v1645, %v1638
    %v2220 = vpack.c.b16 %v1646, %v1639
    %v2221 = vpack.c.b16 %v1647, %v1640
    %v2222 = vpack.c.b16 %v1648, %v1641
    %v2223 = vpack.c.b16 %v1649, %v1642
    %v2224 = vpack.c.b16 %v1650, %v1643
    %v2225 = vpack.c.b16 %v1651, %v1644
    %v2226 = vpack.c.b16 %v1659, %v1652
    %v2227 = vpack.c.b16 %v1660, %v1653
    %v2228 = vpack.c.b16 %v1661, %v1654
    %v2229 = vpack.c.b16 %v1662, %v1655
    %v2230 = vpack.c.b16 %v1663, %v1656
    %v2231 = vpack.c.b16 %v1664, %v1657
    %v2232 = vpack.c.b16 %v1665, %v1658
    %v2233 = vpack.c.b16 %v1673, %v1666
    %v2234 = vpack.c.b16 %v1674, %v1667
    %v2235 = vpack.c.b16 %v1675, %v1668
    %v2236 = vpack.c.b16 %v1676, %v1669
    %v2237 = vpack.c.b16 %v1677, %v1670
    %v2238 = vpack.c.b16 %v1678, %v1671
    %v2239 = vpack.c.b16 %v1679, %v1672
    %v2240 = vpack.c.b16 %v1687, %v1680
    %v2241 = vpack.c.b16 %v1688, %v1681
    %v2242 = vpack.c.b16 %v1689, %v1682
    %v2243 = vpack.c.b16 %v1690, %v1683
    %v2244 = vpack.c.b16 %v1691, %v1684
    %v2245 = vpack.c.b16 %v1692, %v1685
    %v2246 = vpack.c.b16 %v1693, %v1686
    %v2247 = vpack.c.b16 %v1701, %v1694
    %v2248 = vpack.c.b16 %v1702, %v1695
    %v2249 = vpack.c.b16 %v1703, %v1696
    %v2250 = vpack.c.b16 %v1704, %v1697
    %v2251 = vpack.c.b16 %v1705, %v1698
    %v2252 = vpack.c.b16 %v1706, %v1699
    %v2253 = vpack.c.b16 %v1707, %v1700
    %v2254 = vpack.c.b16 %v1715, %v1708
    %v2255 = vpack.c.b16 %v1716, %v1709
    %v2256 = vpack.c.b16 %v1717, %v1710
    %v2257 = vpack.c.b16 %v1718, %v1711
    %v2258 = vpack.c.b16 %v1719, %v1712
    %v2259 = vpack.c.b16 %v1720, %v1713
    %v2260 = vpack.c.b16 %v1721, %v1714
    %v2261 = vpack.c.b16 %v1729, %v1722
    %v2262 = vpack.c.b16 %v1730, %v1723
    %v2263 = vpack.c.b16 %v1731, %v1724
    %v2264 = vpack.c.b16 %v1732, %v1725
    %v2265 = vpack.c.b16 %v1733, %v1726
    %v2266 = vpack.c.b16 %v1734, %v1727
    %v2267 = vpack.c.b16 %v1735, %v1728
    %v2268 = vpack.c.b16 %v1743, %v1736
    %v2269 = vpack.c.b16 %v1744, %v1737
    %v2270 = vpack.c.b16 %v1745, %v1738
    %v2271 = vpack.c.b16 %v1746, %v1739
    %v2272 = vpack.c.b16 %v1747, %v1740
    %v2273 = vpack.c.b16 %v1748, %v1741
    %v2274 = vpack.c.b16 %v1749, %v1742
    %v2275 = vpack.c.b16 %v1757, %v1750
    %v2276 = vpack.c.b16 %v1758, %v1751
    %v2277 = vpack.c.b16 %v1759, %v1752
    %v2278 = vpack.c.b16 %v1760, %v1753
    %v2279 = vpack.c.b16 %v1761, %v1754
    %v2280 = vpack.c.b16 %v1762, %v1755
    %v2281 = vpack.c.b16 %v1763, %v1756
    %v2282 = vpack.c.b16 %v1771, %v1764
    %v2283 = vpack.c.b16 %v1772, %v1765
    %v2284 = vpack.c.b16 %v1773, %v1766
    %v2285 = vpack.c.b16 %v1774, %v1767
    %v2286 = vpack.c.b16 %v1775, %v1768
    %v2287 = vpack.c.b16 %v1776, %v1769
    %v2288 = vpack.c.b16 %v1777, %v1770
    %v2289 = vpack.c.b16 %v1785, %v1778
    %v2290 = vpack.c.b16 %v1786, %v1779
    %v2291 = vpack.c.b16 %v1787, %v1780
    %v2292 = vpack.c.b16 %v1788, %v1781
    %v2293 = vpack.c.b16 %v1789, %v1782
    %v2294 = vpack.c.b16 %v1790, %v1783
    %v2295 = vpack.c.b16 %v1791, %v1784
    %v2296 = vpack.c.b16 %v1799, %v1792
    %v2297 = vpack.c.b16 %v1800, %v1793
    %v2298 = vpack.c.b16 %v1801, %v1794
    %v2299 = vpack.c.b16 %v1802, %v1795
    %v2300 = vpack.c.b16 %v1803, %v1796
    %v2301 = vpack.c.b16 %v1804, %v1797
    %v2302 = vpack.c.b16 %v1805, %v1798
    %v2303 = vpack.c.b16 %v1813, %v1806
    %v2304 = vpack.c.b16 %v1814, %v1807
    %v2305 = vpack.c.b16 %v1815, %v1808
    %v2306 = vpack.c.b16 %v1816, %v1809
    %v2307 = vpack.c.b16 %v1817, %v1810
    %v2308 = vpack.c.b16 %v1818, %v1811
    %v2309 = vpack.c.b16 %v1819, %v1812
    %v2310 = vpack.c.b16 %v1827, %v1820
    %v2311 = vpack.c.b16 %v1828, %v1821
    %v2312 = vpack.c.b16 %v1829, %v1822
    %v2313 = vpack.c.b16 %v1830, %v1823
    %v2314 = vpack.c.b16 %v1831, %v1824
    %v2315 = vpack.c.b16 %v1832, %v1825
    %v2316 = vpack.c.b16 %v1833, %v1826
    %v2317 = vpack.c.b16 %v1841, %v1834
    %v2318 = vpack.c.b16 %v1842, %v1835
    %v2319 = vpack.c.b16 %v1843, %v1836
    %v2320 = vpack.c.b16 %v1844, %v1837
    %v2321 = vpack.c.b16 %v1845, %v1838
    %v2322 = vpack.c.b16 %v1846, %v1839
    %v2323 = vpack.c.b16 %v1847, %v1840
    %v2324 = vpack.c.b16 %v1855, %v1848
    %v2325 = vpack.c.b16 %v1856, %v1849
    %v2326 = vpack.c.b16 %v1857, %v1850
    %v2327 = vpack.c.b16 %v1858, %v1851
    %v2328 = vpack.c.b16 %v1859, %v1852
    %v2329 = vpack.c.b16 %v1860, %v1853
    %v2330 = vpack.c.b16 %v1861, %v1854
    %v2331 = vpack.c.b16 %v1869, %v1862
    %v2332 = vpack.c.b16 %v1870, %v1863
    %v2333 = vpack.c.b16 %v1871, %v1864
    %v2334 = vpack.c.b16 %v1872, %v1865
    %v2335 = vpack.c.b16 %v1873, %v1866
    %v2336 = vpack.c.b16 %v1874, %v1867
    %v2337 = vpack.c.b16 %v1875, %v1868
    %v2338 = vpack.c.b16 %v1883, %v1876
    %v2339 = vpack.c.b16 %v1884, %v1877
    %v2340 = vpack.c.b16 %v1885, %v1878
    %v2341 = vpack.c.b16 %v1886, %v1879
    %v2342 = vpack.c.b16 %v1887, %v1880
    %v2343 = vpack.c.b16 %v1888, %v1881
    %v2344 = vpack.c.b16 %v1889, %v1882
    %v2345 = vpack.c.b16 %v1897, %v1890
    %v2346 = vpack.c.b16 %v1898, %v1891
    %v2347 = vpack.c.b16 %v1899, %v1892
    %v2348 = vpack.c.b16 %v1900, %v1893
    %v2349 = vpack.c.b16 %v1901, %v1894
    %v2350 = vpack.c.b16 %v1902, %v1895
    %v2351 = vpack.c.b16 %v1903, %v1896
    %v2352 = vpack.c.b16 %v1911, %v1904
    %v2353 = vpack.c.b16 %v1912, %v1905
    %v2354 = vpack.c.b16 %v1913, %v1906
    %v2355 = vpack.c.b16 %v1914, %v1907
    %v2356 = vpack.c.b16 %v1915, %v1908
    %v2357 = vpack.c.b16 %v1916, %v1909
    %v2358 = vpack.c.b16 %v1917, %v1910
    %v2359 = vpack.c.b16 %v1925, %v1918
    %v2360 = vpack.c.b16 %v1926, %v1919
    %v2361 = vpack.c.b16 %v1927, %v1920
    %v2362 = vpack.c.b16 %v1928, %v1921
    %v2363 = vpack.c.b16 %v1929, %v1922
    %v2364 = vpack.c.b16 %v1930, %v1923
    %v2365 = vpack.c.b16 %v1931, %v1924
    %v2366 = vpack.c.b16 %v1939, %v1932
    %v2367 = vpack.c.b16 %v1940, %v1933
    %v2368 = vpack.c.b16 %v1941, %v1934
    %v2369 = vpack.c.b16 %v1942, %v1935
    %v2370 = vpack.c.b16 %v1943, %v1936
    %v2371 = vpack.c.b16 %v1944, %v1937
    %v2372 = vpack.c.b16 %v1945, %v1938
    %v2373 = vpack.c.b16 %v1953, %v1946
    %v2374 = vpack.c.b16 %v1954, %v1947
    %v2375 = vpack.c.b16 %v1955, %v1948
    %v2376 = vpack.c.b16 %v1956, %v1949
    %v2377 = vpack.c.b16 %v1957, %v1950
    %v2378 = vpack.c.b16 %v1958, %v1951
    %v2379 = vpack.c.b16 %v1959, %v1952
    %v2380 = vpack.c.b16 %v1967, %v1960
    %v2381 = vpack.c.b16 %v1968, %v1961
    %v2382 = vpack.c.b16 %v1969, %v1962
    %v2383 = vpack.c.b16 %v1970, %v1963
    %v2384 = vpack.c.b16 %v1971, %v1964
    %v2385 = vpack.c.b16 %v1972, %v1965
    %v2386 = vpack.c.b16 %v1973, %v1966
    %v2387 = vpack.c.b16 %v1981, %v1974
    %v2388 = vpack.c.b16 %v1982, %v1975
    %v2389 = vpack.c.b16 %v1983, %v1976
    %v2390 = vpack.c.b16 %v1984, %v1977
    %v2391 = vpack.c.b16 %v1985, %v1978
    %v2392 = vpack.c.b16 %v1986, %v1979
    %v2393 = vpack.c.b16 %v1987, %v1980
    %v2394 = vpack.c.b16 %v1995, %v1988
    %v2395 = vpack.c.b16 %v1996, %v1989
    %v2396 = vpack.c.b16 %v1997, %v1990
    %v2397 = vpack.c.b16 %v1998, %v1991
    %v2398 = vpack.c.b16 %v1999, %v1992
    %v2399 = vpack.c.b16 %v2000, %v1993
    %v2400 = vpack.c.b16 %v2001, %v1994
    %v2401 = vpack.c.b16 %v2009, %v2002
    %v2402 = vpack.c.b16 %v2010, %v2003
    %v2403 = vpack.c.b16 %v2011, %v2004
    %v2404 = vpack.c.b16 %v2012, %v2005
    %v2405 = vpack.c.b16 %v2013, %v2006
    %v2406 = vpack.c.b16 %v2014, %v2007
    %v2407 = vpack.c.b16 %v2015, %v2008
    %v2408 = vpack.c.b16 %v2023, %v2016
    %v2409 = vpack.c.b16 %v2024, %v2017
    %v2410 = vpack.c.b16 %v2025, %v2018
    %v2411 = vpack.c.b16 %v2026, %v2019
    %v2412 = vpack.c.b16 %v2027, %v2020
    %v2413 = vpack.c.b16 %v2028, %v2021
    %v2414 = vpack.c.b16 %v2029, %v2022
    %v2415 = vpack.c.b16 %v2037, %v2030
    %v2416 = vpack.c.b16 %v2038, %v2031
    %v2417 = vpack.c.b16 %v2039, %v2032
    %v2418 = vpack.c.b16 %v2040, %v2033
    %v2419 = vpack.c.b16 %v2041, %v2034
    %v2420 = vpack.c.b16 %v2042, %v2035
    %v2421 = vpack.c.b16 %v2043, %v2036
    %v2422 = vpack.c.b16 %v2051, %v2044
    %v2423 = vpack.c.b16 %v2052, %v2045
    %v2424 = vpack.c.b16 %v2053, %v2046
    %v2425 = vpack.c.b16 %v2054, %v2047
    %v2426 = vpack.c.b16 %v2055, %v2048
    %v2427 = vpack.c.b16 %v2056, %v2049
    %v2428 = vpack.c.b16 %v2057, %v2050
    %v2429 = vpack.c.b16 %v2065, %v2058
    %v2430 = vpack.c.b16 %v2066, %v2059
    %v2431 = vpack.c.b16 %v2067, %v2060
    %v2432 = vpack.c.b16 %v2068, %v2061
    %v2433 = vpack.c.b16 %v2069, %v2062
    %v2434 = vpack.c.b16 %v2070, %v2063
    %v2435 = vpack.c.b16 %v2071, %v2064
    %v2436 = vpack.c.b16 %v2079, %v2072
    %v2437 = vpack.c.b16 %v2080, %v2073
    %v2438 = vpack.c.b16 %v2081, %v2074
    %v2439 = vpack.c.b16 %v2082, %v2075
    %v2440 = vpack.c.b16 %v2083, %v2076
    %v2441 = vpack.c.b16 %v2084, %v2077
    %v2442 = vpack.c.b16 %v2085, %v2078
    %v2443 = vpack.c.b16 %v2093, %v2086
    %v2444 = vpack.c.b16 %v2094, %v2087
    %v2445 = vpack.c.b16 %v2095, %v2088
    %v2446 = vpack.c.b16 %v2096, %v2089
    %v2447 = vpack.c.b16 %v2097, %v2090
    %v2448 = vpack.c.b16 %v2098, %v2091
    %v2449 = vpack.c.b16 %v2099, %v2092
    %vm2800 = vcmask 261120
    %v2802 = vsel %vm2800, %v541, 0
    %v2805 = vsel %vm2800, %v548, 0
    %v2808 = vsel %vm2800, %v555, 0
    %v2811 = vsel %vm2800, %v562, 0
    %2813 = vmatprep.subr.bf16.mxu0 %v2150
    %2814 = vmatpush1.bf16.msra.mxu0 %v2149
    %2815 = vmatprep.subr.bf16.mxu0 %v2143
    %2816 = vmatpush1.bf16.msra.mxu0 %v2142
    %2817 = vmatprep.subr.bf16.mxu0 %v2136
    %2818 = vmatpush1.bf16.msra.mxu0 %v2135
    %2819 = vmatprep.subr.bf16.mxu0 %v2129
    %2820 = vmatpush1.bf16.msra.mxu0 %v2128
    %2821 = vmatprep.subr.bf16.mxu0 %v2122
    %2822 = vmatpush1.bf16.msra.mxu0 %v2121
    %2823 = vmatprep.subr.bf16.mxu0 %v2115
    %2824 = vmatpush1.bf16.msra.mxu0 %v2114
    %2825 = vmatprep.subr.bf16.mxu0 %v2108
    %2826 = vmatpush1.bf16.msra.mxu0 %v2107
    %2827 = vmatprep.subr.bf16.mxu0 %v2101
    %2828 = vmatpush1.bf16.msra.mxu0 %v2100
    %2829 = vmatprep.subr.bf16.mxu0 %v2206
    %2830 = vmatpush2.bf16.msra.mxu0 %v2205
    %2831 = vmatprep.subr.bf16.mxu0 %v2199
    %2832 = vmatpush2.bf16.msra.mxu0 %v2198
    %2833 = vmatprep.subr.bf16.mxu0 %v2192
    %2834 = vmatpush2.bf16.msra.mxu0 %v2191
    %2835 = vmatprep.subr.bf16.mxu0 %v2185
    %2836 = vmatpush2.bf16.msra.mxu0 %v2184
    %2837 = vmatprep.subr.bf16.mxu0 %v2178
    %2838 = vmatpush2.bf16.msra.mxu0 %v2177
    %2839 = vmatprep.subr.bf16.mxu0 %v2171
    %2840 = vmatpush2.bf16.msra.mxu0 %v2170
    %2841 = vmatprep.subr.bf16.mxu0 %v2164
    %2842 = vmatpush2.bf16.msra.mxu0 %v2163
    %2843 = vmatprep.subr.bf16.mxu0 %v2157
    %2844 = vmatpush2.bf16.msra.mxu0 %v2156
    %2845 = vmatprep.mubr.bf16.mxu0 %v536
    %2846 = vmatmul.mubr.bf16.gmra.mxu0 %v535
    %v2847 = vpop.f32.mrf.mxu0
    %v2848 = vadd.f32 %v968, %v2847
    %v2849 = vpop.f32.mrf.mxu0
    %v2850 = vadd.f32 %v972, %v2849
    %v2851 = vpop.f32.mrf.mxu0
    %v2852 = vadd.f32 %v968, %v2851
    %v2853 = vpop.f32.mrf.mxu0
    %v2854 = vadd.f32 %v972, %v2853
    %2855 = vmatprep.mubr.bf16.mxu0 %v543
    %2856 = vmatmul.mubr.bf16.gmra.mxu0 %v542
    %v2857 = vpop.f32.mrf.mxu0
    %v2858 = vadd.f32 %v968, %v2857
    %v2859 = vpop.f32.mrf.mxu0
    %v2860 = vadd.f32 %v972, %v2859
    %v2861 = vpop.f32.mrf.mxu0
    %v2862 = vadd.f32 %v968, %v2861
    %v2863 = vpop.f32.mrf.mxu0
    %v2864 = vadd.f32 %v972, %v2863
    %2865 = vmatprep.mubr.bf16.mxu0 %v550
    %2866 = vmatmul.mubr.bf16.gmra.mxu0 %v549
    %v2867 = vpop.f32.mrf.mxu0
    %v2868 = vadd.f32 %v968, %v2867
    %v2869 = vpop.f32.mrf.mxu0
    %v2870 = vadd.f32 %v972, %v2869
    %v2871 = vpop.f32.mrf.mxu0
    %v2872 = vadd.f32 %v968, %v2871
    %v2873 = vpop.f32.mrf.mxu0
    %v2874 = vadd.f32 %v972, %v2873
    %2875 = vmatprep.mubr.bf16.mxu0 %v557
    %2876 = vmatmul.mubr.bf16.gmra.mxu0 %v556
    %v2877 = vpop.f32.mrf.mxu0
    %v2878 = vadd.f32 %v968, %v2877
    %v2879 = vpop.f32.mrf.mxu0
    %v2880 = vadd.f32 %v972, %v2879
    %v2881 = vpop.f32.mrf.mxu0
    %v2882 = vadd.f32 %v968, %v2881
    %v2883 = vpop.f32.mrf.mxu0
    %v2884 = vadd.f32 %v972, %v2883
    %2885 = vdwg.mxu0
    %2886 = vmatprep.subr.bf16.mxu0 %v2262
    %2887 = vmatpush1.bf16.msra.mxu0 %v2261
    %2888 = vmatprep.subr.bf16.mxu0 %v2255
    %2889 = vmatpush1.bf16.msra.mxu0 %v2254
    %2890 = vmatprep.subr.bf16.mxu0 %v2248
    %2891 = vmatpush1.bf16.msra.mxu0 %v2247
    %2892 = vmatprep.subr.bf16.mxu0 %v2241
    %2893 = vmatpush1.bf16.msra.mxu0 %v2240
    %2894 = vmatprep.subr.bf16.mxu0 %v2234
    %2895 = vmatpush1.bf16.msra.mxu0 %v2233
    %2896 = vmatprep.subr.bf16.mxu0 %v2227
    %2897 = vmatpush1.bf16.msra.mxu0 %v2226
    %2898 = vmatprep.subr.bf16.mxu0 %v2220
    %2899 = vmatpush1.bf16.msra.mxu0 %v2219
    %2900 = vmatprep.subr.bf16.mxu0 %v2213
    %2901 = vmatpush1.bf16.msra.mxu0 %v2212
    %2902 = vmatprep.subr.bf16.mxu0 %v2318
    %2903 = vmatpush2.bf16.msra.mxu0 %v2317
    %2904 = vmatprep.subr.bf16.mxu0 %v2311
    %2905 = vmatpush2.bf16.msra.mxu0 %v2310
    %2906 = vmatprep.subr.bf16.mxu0 %v2304
    %2907 = vmatpush2.bf16.msra.mxu0 %v2303
    %2908 = vmatprep.subr.bf16.mxu0 %v2297
    %2909 = vmatpush2.bf16.msra.mxu0 %v2296
    %2910 = vmatprep.subr.bf16.mxu0 %v2290
    %2911 = vmatpush2.bf16.msra.mxu0 %v2289
    %2912 = vmatprep.subr.bf16.mxu0 %v2283
    %2913 = vmatpush2.bf16.msra.mxu0 %v2282
    %2914 = vmatprep.subr.bf16.mxu0 %v2276
    %2915 = vmatpush2.bf16.msra.mxu0 %v2275
    %2916 = vmatprep.subr.bf16.mxu0 %v2269
    %2917 = vmatpush2.bf16.msra.mxu0 %v2268
    %2918 = vmatprep.mubr.bf16.mxu0 %v538
    %2919 = vmatmul.mubr.bf16.gmra.mxu0 %v537
    %v2920 = vpop.f32.mrf.mxu0
    %v2921 = vadd.f32 %v2848, %v2920
    %v2922 = vpop.f32.mrf.mxu0
    %v2923 = vadd.f32 %v2850, %v2922
    %v2924 = vpop.f32.mrf.mxu0
    %v2925 = vadd.f32 %v2852, %v2924
    %v2926 = vpop.f32.mrf.mxu0
    %v2927 = vadd.f32 %v2854, %v2926
    %2928 = vmatprep.mubr.bf16.mxu0 %v545
    %2929 = vmatmul.mubr.bf16.gmra.mxu0 %v544
    %v2930 = vpop.f32.mrf.mxu0
    %v2931 = vadd.f32 %v2858, %v2930
    %v2932 = vpop.f32.mrf.mxu0
    %v2933 = vadd.f32 %v2860, %v2932
    %v2934 = vpop.f32.mrf.mxu0
    %v2935 = vadd.f32 %v2862, %v2934
    %v2936 = vpop.f32.mrf.mxu0
    %v2937 = vadd.f32 %v2864, %v2936
    %2938 = vmatprep.mubr.bf16.mxu0 %v552
    %2939 = vmatmul.mubr.bf16.gmra.mxu0 %v551
    %v2940 = vpop.f32.mrf.mxu0
    %v2941 = vadd.f32 %v2868, %v2940
    %v2942 = vpop.f32.mrf.mxu0
    %v2943 = vadd.f32 %v2870, %v2942
    %v2944 = vpop.f32.mrf.mxu0
    %v2945 = vadd.f32 %v2872, %v2944
    %v2946 = vpop.f32.mrf.mxu0
    %v2947 = vadd.f32 %v2874, %v2946
    %2948 = vmatprep.mubr.bf16.mxu0 %v559
    %2949 = vmatmul.mubr.bf16.gmra.mxu0 %v558
    %v2950 = vpop.f32.mrf.mxu0
    %v2951 = vadd.f32 %v2878, %v2950
    %v2952 = vpop.f32.mrf.mxu0
    %v2953 = vadd.f32 %v2880, %v2952
    %v2954 = vpop.f32.mrf.mxu0
    %v2955 = vadd.f32 %v2882, %v2954
    %v2956 = vpop.f32.mrf.mxu0
    %v2957 = vadd.f32 %v2884, %v2956
    %2958 = vdwg.mxu0
    %2959 = vmatprep.subr.bf16.mxu0 %v2374
    %2960 = vmatpush1.bf16.msra.mxu0 %v2373
    %2961 = vmatprep.subr.bf16.mxu0 %v2367
    %2962 = vmatpush1.bf16.msra.mxu0 %v2366
    %2963 = vmatprep.subr.bf16.mxu0 %v2360
    %2964 = vmatpush1.bf16.msra.mxu0 %v2359
    %2965 = vmatprep.subr.bf16.mxu0 %v2353
    %2966 = vmatpush1.bf16.msra.mxu0 %v2352
    %2967 = vmatprep.subr.bf16.mxu0 %v2346
    %2968 = vmatpush1.bf16.msra.mxu0 %v2345
    %2969 = vmatprep.subr.bf16.mxu0 %v2339
    %2970 = vmatpush1.bf16.msra.mxu0 %v2338
    %2971 = vmatprep.subr.bf16.mxu0 %v2332
    %2972 = vmatpush1.bf16.msra.mxu0 %v2331
    %2973 = vmatprep.subr.bf16.mxu0 %v2325
    %2974 = vmatpush1.bf16.msra.mxu0 %v2324
    %2975 = vmatprep.subr.bf16.mxu0 %v2430
    %2976 = vmatpush2.bf16.msra.mxu0 %v2429
    %2977 = vmatprep.subr.bf16.mxu0 %v2423
    %2978 = vmatpush2.bf16.msra.mxu0 %v2422
    %2979 = vmatprep.subr.bf16.mxu0 %v2416
    %2980 = vmatpush2.bf16.msra.mxu0 %v2415
    %2981 = vmatprep.subr.bf16.mxu0 %v2409
    %2982 = vmatpush2.bf16.msra.mxu0 %v2408
    %2983 = vmatprep.subr.bf16.mxu0 %v2402
    %2984 = vmatpush2.bf16.msra.mxu0 %v2401
    %2985 = vmatprep.subr.bf16.mxu0 %v2395
    %2986 = vmatpush2.bf16.msra.mxu0 %v2394
    %2987 = vmatprep.subr.bf16.mxu0 %v2388
    %2988 = vmatpush2.bf16.msra.mxu0 %v2387
    %2989 = vmatprep.subr.bf16.mxu0 %v2381
    %2990 = vmatpush2.bf16.msra.mxu0 %v2380
    %2991 = vmatprep.mubr.bf16.mxu0 %v540
    %2992 = vmatmul.mubr.bf16.gmra.mxu0 %v539
    %v2993 = vpop.f32.mrf.mxu0
    %v2994 = vadd.f32 %v2921, %v2993
    %v2995 = vpop.f32.mrf.mxu0
    %v2996 = vadd.f32 %v2923, %v2995
    %v2997 = vpop.f32.mrf.mxu0
    %v2998 = vadd.f32 %v2925, %v2997
    %v2999 = vpop.f32.mrf.mxu0
    %v3000 = vadd.f32 %v2927, %v2999
    %3001 = vmatprep.mubr.bf16.mxu0 %v547
    %3002 = vmatmul.mubr.bf16.gmra.mxu0 %v546
    %v3003 = vpop.f32.mrf.mxu0
    %v3004 = vadd.f32 %v2931, %v3003
    %v3005 = vpop.f32.mrf.mxu0
    %v3006 = vadd.f32 %v2933, %v3005
    %v3007 = vpop.f32.mrf.mxu0
    %v3008 = vadd.f32 %v2935, %v3007
    %v3009 = vpop.f32.mrf.mxu0
    %v3010 = vadd.f32 %v2937, %v3009
    %3011 = vmatprep.mubr.bf16.mxu0 %v554
    %3012 = vmatmul.mubr.bf16.gmra.mxu0 %v553
    %v3013 = vpop.f32.mrf.mxu0
    %v3014 = vadd.f32 %v2941, %v3013
    %v3015 = vpop.f32.mrf.mxu0
    %v3016 = vadd.f32 %v2943, %v3015
    %v3017 = vpop.f32.mrf.mxu0
    %v3018 = vadd.f32 %v2945, %v3017
    %v3019 = vpop.f32.mrf.mxu0
    %v3020 = vadd.f32 %v2947, %v3019
    %3021 = vmatprep.mubr.bf16.mxu0 %v561
    %3022 = vmatmul.mubr.bf16.gmra.mxu0 %v560
    %v3023 = vpop.f32.mrf.mxu0
    %v3024 = vadd.f32 %v2951, %v3023
    %v3025 = vpop.f32.mrf.mxu0
    %v3026 = vadd.f32 %v2953, %v3025
    %v3027 = vpop.f32.mrf.mxu0
    %v3028 = vadd.f32 %v2955, %v3027
    %v3029 = vpop.f32.mrf.mxu0
    %v3030 = vadd.f32 %v2957, %v3029
    %3031 = vdwg.mxu0
    %3032 = vmatprep.subr.bf16.mxu0 0
    %3033 = vmatpush1.bf16.msra.mxu0 0
    %3034 = vmatprep.subr.bf16.mxu0 0
    %3035 = vmatpush1.bf16.msra.mxu0 0
    %3036 = vmatprep.subr.bf16.mxu0 0
    %3037 = vmatpush1.bf16.msra.mxu0 0
    %3038 = vmatprep.subr.bf16.mxu0 0
    %3039 = vmatpush1.bf16.msra.mxu0 0
    %3040 = vmatprep.subr.bf16.mxu0 0
    %3041 = vmatpush1.bf16.msra.mxu0 0
    %3042 = vmatprep.subr.bf16.mxu0 0
    %3043 = vmatpush1.bf16.msra.mxu0 0
    %3044 = vmatprep.subr.bf16.mxu0 %v2444
    %3045 = vmatpush1.bf16.msra.mxu0 %v2443
    %3046 = vmatprep.subr.bf16.mxu0 %v2437
    %3047 = vmatpush1.bf16.msra.mxu0 %v2436
    %3048 = vmatprep.subr.bf16.mxu0 0
    %3049 = vmatpush2.bf16.msra.mxu0 0
    %3050 = vmatprep.subr.bf16.mxu0 0
    %3051 = vmatpush2.bf16.msra.mxu0 0
    %3052 = vmatprep.subr.bf16.mxu0 0
    %3053 = vmatpush2.bf16.msra.mxu0 0
    %3054 = vmatprep.subr.bf16.mxu0 0
    %3055 = vmatpush2.bf16.msra.mxu0 0
    %3056 = vmatprep.subr.bf16.mxu0 0
    %3057 = vmatpush2.bf16.msra.mxu0 0
    %3058 = vmatprep.subr.bf16.mxu0 0
    %3059 = vmatpush2.bf16.msra.mxu0 0
    %3060 = vmatprep.subr.bf16.mxu0 0
    %3061 = vmatpush2.bf16.msra.mxu0 0
    %3062 = vmatprep.subr.bf16.mxu0 0
    %3063 = vmatpush2.bf16.msra.mxu0 0
    %3064 = vmatprep.mubr.bf16.mxu0 0
    %3065 = vmatmul.mubr.bf16.gmra.mxu0 %v2802
    %v3066 = vpop.f32.mrf.mxu0
    %v3067 = vadd.f32 %v2994, %v3066
    %v3068 = vpop.f32.mrf.mxu0
    %v3069 = vadd.f32 %v2996, %v3068
    %v3070 = vpop.f32.mrf.mxu0
    %v3071 = vadd.f32 %v2998, %v3070
    %v3072 = vpop.f32.mrf.mxu0
    %v3073 = vadd.f32 %v3000, %v3072
    %3074 = vmatprep.mubr.bf16.mxu0 0
    %3075 = vmatmul.mubr.bf16.gmra.mxu0 %v2805
    %v3076 = vpop.f32.mrf.mxu0
    %v3077 = vadd.f32 %v3004, %v3076
    %v3078 = vpop.f32.mrf.mxu0
    %v3079 = vadd.f32 %v3006, %v3078
    %v3080 = vpop.f32.mrf.mxu0
    %v3081 = vadd.f32 %v3008, %v3080
    %v3082 = vpop.f32.mrf.mxu0
    %v3083 = vadd.f32 %v3010, %v3082
    %3084 = vmatprep.mubr.bf16.mxu0 0
    %3085 = vmatmul.mubr.bf16.gmra.mxu0 %v2808
    %v3086 = vpop.f32.mrf.mxu0
    %v3087 = vadd.f32 %v3014, %v3086
    %v3088 = vpop.f32.mrf.mxu0
    %v3089 = vadd.f32 %v3016, %v3088
    %v3090 = vpop.f32.mrf.mxu0
    %v3091 = vadd.f32 %v3018, %v3090
    %v3092 = vpop.f32.mrf.mxu0
    %v3093 = vadd.f32 %v3020, %v3092
    %3094 = vmatprep.mubr.bf16.mxu0 0
    %3095 = vmatmul.mubr.bf16.gmra.mxu0 %v2811
    %v3096 = vpop.f32.mrf.mxu0
    %v3097 = vadd.f32 %v3024, %v3096
    %v3098 = vpop.f32.mrf.mxu0
    %v3099 = vadd.f32 %v3026, %v3098
    %v3100 = vpop.f32.mrf.mxu0
    %v3101 = vadd.f32 %v3028, %v3100
    %v3102 = vpop.f32.mrf.mxu0
    %v3103 = vadd.f32 %v3030, %v3102
    %3104 = vdwg.mxu0
    %3105 = vmatprep.subr.bf16.mxu0 %v2152
    %3106 = vmatpush1.bf16.msra.mxu0 %v2151
    %3107 = vmatprep.subr.bf16.mxu0 %v2145
    %3108 = vmatpush1.bf16.msra.mxu0 %v2144
    %3109 = vmatprep.subr.bf16.mxu0 %v2138
    %3110 = vmatpush1.bf16.msra.mxu0 %v2137
    %3111 = vmatprep.subr.bf16.mxu0 %v2131
    %3112 = vmatpush1.bf16.msra.mxu0 %v2130
    %3113 = vmatprep.subr.bf16.mxu0 %v2124
    %3114 = vmatpush1.bf16.msra.mxu0 %v2123
    %3115 = vmatprep.subr.bf16.mxu0 %v2117
    %3116 = vmatpush1.bf16.msra.mxu0 %v2116
    %3117 = vmatprep.subr.bf16.mxu0 %v2110
    %3118 = vmatpush1.bf16.msra.mxu0 %v2109
    %3119 = vmatprep.subr.bf16.mxu0 %v2103
    %3120 = vmatpush1.bf16.msra.mxu0 %v2102
    %3121 = vmatprep.subr.bf16.mxu0 %v2208
    %3122 = vmatpush2.bf16.msra.mxu0 %v2207
    %3123 = vmatprep.subr.bf16.mxu0 %v2201
    %3124 = vmatpush2.bf16.msra.mxu0 %v2200
    %3125 = vmatprep.subr.bf16.mxu0 %v2194
    %3126 = vmatpush2.bf16.msra.mxu0 %v2193
    %3127 = vmatprep.subr.bf16.mxu0 %v2187
    %3128 = vmatpush2.bf16.msra.mxu0 %v2186
    %3129 = vmatprep.subr.bf16.mxu0 %v2180
    %3130 = vmatpush2.bf16.msra.mxu0 %v2179
    %3131 = vmatprep.subr.bf16.mxu0 %v2173
    %3132 = vmatpush2.bf16.msra.mxu0 %v2172
    %3133 = vmatprep.subr.bf16.mxu0 %v2166
    %3134 = vmatpush2.bf16.msra.mxu0 %v2165
    %3135 = vmatprep.subr.bf16.mxu0 %v2159
    %3136 = vmatpush2.bf16.msra.mxu0 %v2158
    %3137 = vmatprep.mubr.bf16.mxu0 %v536
    %3138 = vmatmul.mubr.bf16.gmra.mxu0 %v535
    %v3139 = vpop.f32.mrf.mxu0
    %v3140 = vadd.f32 %v976, %v3139
    %v3141 = vpop.f32.mrf.mxu0
    %v3142 = vadd.f32 %v980, %v3141
    %v3143 = vpop.f32.mrf.mxu0
    %v3144 = vadd.f32 %v976, %v3143
    %v3145 = vpop.f32.mrf.mxu0
    %v3146 = vadd.f32 %v980, %v3145
    %3147 = vmatprep.mubr.bf16.mxu0 %v543
    %3148 = vmatmul.mubr.bf16.gmra.mxu0 %v542
    %v3149 = vpop.f32.mrf.mxu0
    %v3150 = vadd.f32 %v976, %v3149
    %v3151 = vpop.f32.mrf.mxu0
    %v3152 = vadd.f32 %v980, %v3151
    %v3153 = vpop.f32.mrf.mxu0
    %v3154 = vadd.f32 %v976, %v3153
    %v3155 = vpop.f32.mrf.mxu0
    %v3156 = vadd.f32 %v980, %v3155
    %3157 = vmatprep.mubr.bf16.mxu0 %v550
    %3158 = vmatmul.mubr.bf16.gmra.mxu0 %v549
    %v3159 = vpop.f32.mrf.mxu0
    %v3160 = vadd.f32 %v976, %v3159
    %v3161 = vpop.f32.mrf.mxu0
    %v3162 = vadd.f32 %v980, %v3161
    %v3163 = vpop.f32.mrf.mxu0
    %v3164 = vadd.f32 %v976, %v3163
    %v3165 = vpop.f32.mrf.mxu0
    %v3166 = vadd.f32 %v980, %v3165
    %3167 = vmatprep.mubr.bf16.mxu0 %v557
    %3168 = vmatmul.mubr.bf16.gmra.mxu0 %v556
    %v3169 = vpop.f32.mrf.mxu0
    %v3170 = vadd.f32 %v976, %v3169
    %v3171 = vpop.f32.mrf.mxu0
    %v3172 = vadd.f32 %v980, %v3171
    %v3173 = vpop.f32.mrf.mxu0
    %v3174 = vadd.f32 %v976, %v3173
    %v3175 = vpop.f32.mrf.mxu0
    %v3176 = vadd.f32 %v980, %v3175
    %3177 = vdwg.mxu0
    %3178 = vmatprep.subr.bf16.mxu0 %v2264
    %3179 = vmatpush1.bf16.msra.mxu0 %v2263
    %3180 = vmatprep.subr.bf16.mxu0 %v2257
    %3181 = vmatpush1.bf16.msra.mxu0 %v2256
    %3182 = vmatprep.subr.bf16.mxu0 %v2250
    %3183 = vmatpush1.bf16.msra.mxu0 %v2249
    %3184 = vmatprep.subr.bf16.mxu0 %v2243
    %3185 = vmatpush1.bf16.msra.mxu0 %v2242
    %3186 = vmatprep.subr.bf16.mxu0 %v2236
    %3187 = vmatpush1.bf16.msra.mxu0 %v2235
    %3188 = vmatprep.subr.bf16.mxu0 %v2229
    %3189 = vmatpush1.bf16.msra.mxu0 %v2228
    %3190 = vmatprep.subr.bf16.mxu0 %v2222
    %3191 = vmatpush1.bf16.msra.mxu0 %v2221
    %3192 = vmatprep.subr.bf16.mxu0 %v2215
    %3193 = vmatpush1.bf16.msra.mxu0 %v2214
    %3194 = vmatprep.subr.bf16.mxu0 %v2320
    %3195 = vmatpush2.bf16.msra.mxu0 %v2319
    %3196 = vmatprep.subr.bf16.mxu0 %v2313
    %3197 = vmatpush2.bf16.msra.mxu0 %v2312
    %3198 = vmatprep.subr.bf16.mxu0 %v2306
    %3199 = vmatpush2.bf16.msra.mxu0 %v2305
    %3200 = vmatprep.subr.bf16.mxu0 %v2299
    %3201 = vmatpush2.bf16.msra.mxu0 %v2298
    %3202 = vmatprep.subr.bf16.mxu0 %v2292
    %3203 = vmatpush2.bf16.msra.mxu0 %v2291
    %3204 = vmatprep.subr.bf16.mxu0 %v2285
    %3205 = vmatpush2.bf16.msra.mxu0 %v2284
    %3206 = vmatprep.subr.bf16.mxu0 %v2278
    %3207 = vmatpush2.bf16.msra.mxu0 %v2277
    %3208 = vmatprep.subr.bf16.mxu0 %v2271
    %3209 = vmatpush2.bf16.msra.mxu0 %v2270
    %3210 = vmatprep.mubr.bf16.mxu0 %v538
    %3211 = vmatmul.mubr.bf16.gmra.mxu0 %v537
    %v3212 = vpop.f32.mrf.mxu0
    %v3213 = vadd.f32 %v3140, %v3212
    %v3214 = vpop.f32.mrf.mxu0
    %v3215 = vadd.f32 %v3142, %v3214
    %v3216 = vpop.f32.mrf.mxu0
    %v3217 = vadd.f32 %v3144, %v3216
    %v3218 = vpop.f32.mrf.mxu0
    %v3219 = vadd.f32 %v3146, %v3218
    %3220 = vmatprep.mubr.bf16.mxu0 %v545
    %3221 = vmatmul.mubr.bf16.gmra.mxu0 %v544
    %v3222 = vpop.f32.mrf.mxu0
    %v3223 = vadd.f32 %v3150, %v3222
    %v3224 = vpop.f32.mrf.mxu0
    %v3225 = vadd.f32 %v3152, %v3224
    %v3226 = vpop.f32.mrf.mxu0
    %v3227 = vadd.f32 %v3154, %v3226
    %v3228 = vpop.f32.mrf.mxu0
    %v3229 = vadd.f32 %v3156, %v3228
    %3230 = vmatprep.mubr.bf16.mxu0 %v552
    %3231 = vmatmul.mubr.bf16.gmra.mxu0 %v551
    %v3232 = vpop.f32.mrf.mxu0
    %v3233 = vadd.f32 %v3160, %v3232
    %v3234 = vpop.f32.mrf.mxu0
    %v3235 = vadd.f32 %v3162, %v3234
    %v3236 = vpop.f32.mrf.mxu0
    %v3237 = vadd.f32 %v3164, %v3236
    %v3238 = vpop.f32.mrf.mxu0
    %v3239 = vadd.f32 %v3166, %v3238
    %3240 = vmatprep.mubr.bf16.mxu0 %v559
    %3241 = vmatmul.mubr.bf16.gmra.mxu0 %v558
    %v3242 = vpop.f32.mrf.mxu0
    %v3243 = vadd.f32 %v3170, %v3242
    %v3244 = vpop.f32.mrf.mxu0
    %v3245 = vadd.f32 %v3172, %v3244
    %v3246 = vpop.f32.mrf.mxu0
    %v3247 = vadd.f32 %v3174, %v3246
    %v3248 = vpop.f32.mrf.mxu0
    %v3249 = vadd.f32 %v3176, %v3248
    %3250 = vdwg.mxu0
    %3251 = vmatprep.subr.bf16.mxu0 %v2376
    %3252 = vmatpush1.bf16.msra.mxu0 %v2375
    %3253 = vmatprep.subr.bf16.mxu0 %v2369
    %3254 = vmatpush1.bf16.msra.mxu0 %v2368
    %3255 = vmatprep.subr.bf16.mxu0 %v2362
    %3256 = vmatpush1.bf16.msra.mxu0 %v2361
    %3257 = vmatprep.subr.bf16.mxu0 %v2355
    %3258 = vmatpush1.bf16.msra.mxu0 %v2354
    %3259 = vmatprep.subr.bf16.mxu0 %v2348
    %3260 = vmatpush1.bf16.msra.mxu0 %v2347
    %3261 = vmatprep.subr.bf16.mxu0 %v2341
    %3262 = vmatpush1.bf16.msra.mxu0 %v2340
    %3263 = vmatprep.subr.bf16.mxu0 %v2334
    %3264 = vmatpush1.bf16.msra.mxu0 %v2333
    %3265 = vmatprep.subr.bf16.mxu0 %v2327
    %3266 = vmatpush1.bf16.msra.mxu0 %v2326
    %3267 = vmatprep.subr.bf16.mxu0 %v2432
    %3268 = vmatpush2.bf16.msra.mxu0 %v2431
    %3269 = vmatprep.subr.bf16.mxu0 %v2425
    %3270 = vmatpush2.bf16.msra.mxu0 %v2424
    %3271 = vmatprep.subr.bf16.mxu0 %v2418
    %3272 = vmatpush2.bf16.msra.mxu0 %v2417
    %3273 = vmatprep.subr.bf16.mxu0 %v2411
    %3274 = vmatpush2.bf16.msra.mxu0 %v2410
    %3275 = vmatprep.subr.bf16.mxu0 %v2404
    %3276 = vmatpush2.bf16.msra.mxu0 %v2403
    %3277 = vmatprep.subr.bf16.mxu0 %v2397
    %3278 = vmatpush2.bf16.msra.mxu0 %v2396
    %3279 = vmatprep.subr.bf16.mxu0 %v2390
    %3280 = vmatpush2.bf16.msra.mxu0 %v2389
    %3281 = vmatprep.subr.bf16.mxu0 %v2383
    %3282 = vmatpush2.bf16.msra.mxu0 %v2382
    %3283 = vmatprep.mubr.bf16.mxu0 %v540
    %3284 = vmatmul.mubr.bf16.gmra.mxu0 %v539
    %v3285 = vpop.f32.mrf.mxu0
    %v3286 = vadd.f32 %v3213, %v3285
    %v3287 = vpop.f32.mrf.mxu0
    %v3288 = vadd.f32 %v3215, %v3287
    %v3289 = vpop.f32.mrf.mxu0
    %v3290 = vadd.f32 %v3217, %v3289
    %v3291 = vpop.f32.mrf.mxu0
    %v3292 = vadd.f32 %v3219, %v3291
    %3293 = vmatprep.mubr.bf16.mxu0 %v547
    %3294 = vmatmul.mubr.bf16.gmra.mxu0 %v546
    %v3295 = vpop.f32.mrf.mxu0
    %v3296 = vadd.f32 %v3223, %v3295
    %v3297 = vpop.f32.mrf.mxu0
    %v3298 = vadd.f32 %v3225, %v3297
    %v3299 = vpop.f32.mrf.mxu0
    %v3300 = vadd.f32 %v3227, %v3299
    %v3301 = vpop.f32.mrf.mxu0
    %v3302 = vadd.f32 %v3229, %v3301
    %3303 = vmatprep.mubr.bf16.mxu0 %v554
    %3304 = vmatmul.mubr.bf16.gmra.mxu0 %v553
    %v3305 = vpop.f32.mrf.mxu0
    %v3306 = vadd.f32 %v3233, %v3305
    %v3307 = vpop.f32.mrf.mxu0
    %v3308 = vadd.f32 %v3235, %v3307
    %v3309 = vpop.f32.mrf.mxu0
    %v3310 = vadd.f32 %v3237, %v3309
    %v3311 = vpop.f32.mrf.mxu0
    %v3312 = vadd.f32 %v3239, %v3311
    %3313 = vmatprep.mubr.bf16.mxu0 %v561
    %3314 = vmatmul.mubr.bf16.gmra.mxu0 %v560
    %v3315 = vpop.f32.mrf.mxu0
    %v3316 = vadd.f32 %v3243, %v3315
    %v3317 = vpop.f32.mrf.mxu0
    %v3318 = vadd.f32 %v3245, %v3317
    %v3319 = vpop.f32.mrf.mxu0
    %v3320 = vadd.f32 %v3247, %v3319
    %v3321 = vpop.f32.mrf.mxu0
    %v3322 = vadd.f32 %v3249, %v3321
    %3323 = vdwg.mxu0
    %3324 = vmatprep.subr.bf16.mxu0 0
    %3325 = vmatpush1.bf16.msra.mxu0 0
    %3326 = vmatprep.subr.bf16.mxu0 0
    %3327 = vmatpush1.bf16.msra.mxu0 0
    %3328 = vmatprep.subr.bf16.mxu0 0
    %3329 = vmatpush1.bf16.msra.mxu0 0
    %3330 = vmatprep.subr.bf16.mxu0 0
    %3331 = vmatpush1.bf16.msra.mxu0 0
    %3332 = vmatprep.subr.bf16.mxu0 0
    %3333 = vmatpush1.bf16.msra.mxu0 0
    %3334 = vmatprep.subr.bf16.mxu0 0
    %3335 = vmatpush1.bf16.msra.mxu0 0
    %3336 = vmatprep.subr.bf16.mxu0 %v2446
    %3337 = vmatpush1.bf16.msra.mxu0 %v2445
    %3338 = vmatprep.subr.bf16.mxu0 %v2439
    %3339 = vmatpush1.bf16.msra.mxu0 %v2438
    %3340 = vmatprep.subr.bf16.mxu0 0
    %3341 = vmatpush2.bf16.msra.mxu0 0
    %3342 = vmatprep.subr.bf16.mxu0 0
    %3343 = vmatpush2.bf16.msra.mxu0 0
    %3344 = vmatprep.subr.bf16.mxu0 0
    %3345 = vmatpush2.bf16.msra.mxu0 0
    %3346 = vmatprep.subr.bf16.mxu0 0
    %3347 = vmatpush2.bf16.msra.mxu0 0
    %3348 = vmatprep.subr.bf16.mxu0 0
    %3349 = vmatpush2.bf16.msra.mxu0 0
    %3350 = vmatprep.subr.bf16.mxu0 0
    %3351 = vmatpush2.bf16.msra.mxu0 0
    %3352 = vmatprep.subr.bf16.mxu0 0
    %3353 = vmatpush2.bf16.msra.mxu0 0
    %3354 = vmatprep.subr.bf16.mxu0 0
    %3355 = vmatpush2.bf16.msra.mxu0 0
    %3356 = vmatprep.mubr.bf16.mxu0 0
    %3357 = vmatmul.mubr.bf16.gmra.mxu0 %v2802
    %v3358 = vpop.f32.mrf.mxu0
    %v3359 = vadd.f32 %v3286, %v3358
    %v3360 = vpop.f32.mrf.mxu0
    %v3361 = vadd.f32 %v3288, %v3360
    %v3362 = vpop.f32.mrf.mxu0
    %v3363 = vadd.f32 %v3290, %v3362
    %v3364 = vpop.f32.mrf.mxu0
    %v3365 = vadd.f32 %v3292, %v3364
    %3366 = vmatprep.mubr.bf16.mxu0 0
    %3367 = vmatmul.mubr.bf16.gmra.mxu0 %v2805
    %v3368 = vpop.f32.mrf.mxu0
    %v3369 = vadd.f32 %v3296, %v3368
    %v3370 = vpop.f32.mrf.mxu0
    %v3371 = vadd.f32 %v3298, %v3370
    %v3372 = vpop.f32.mrf.mxu0
    %v3373 = vadd.f32 %v3300, %v3372
    %v3374 = vpop.f32.mrf.mxu0
    %v3375 = vadd.f32 %v3302, %v3374
    %3376 = vmatprep.mubr.bf16.mxu0 0
    %3377 = vmatmul.mubr.bf16.gmra.mxu0 %v2808
    %v3378 = vpop.f32.mrf.mxu0
    %v3379 = vadd.f32 %v3306, %v3378
    %v3380 = vpop.f32.mrf.mxu0
    %v3381 = vadd.f32 %v3308, %v3380
    %v3382 = vpop.f32.mrf.mxu0
    %v3383 = vadd.f32 %v3310, %v3382
    %v3384 = vpop.f32.mrf.mxu0
    %v3385 = vadd.f32 %v3312, %v3384
    %3386 = vmatprep.mubr.bf16.mxu0 0
    %3387 = vmatmul.mubr.bf16.gmra.mxu0 %v2811
    %v3388 = vpop.f32.mrf.mxu0
    %v3389 = vadd.f32 %v3316, %v3388
    %v3390 = vpop.f32.mrf.mxu0
    %v3391 = vadd.f32 %v3318, %v3390
    %v3392 = vpop.f32.mrf.mxu0
    %v3393 = vadd.f32 %v3320, %v3392
    %v3394 = vpop.f32.mrf.mxu0
    %v3395 = vadd.f32 %v3322, %v3394
    %3396 = vdwg.mxu0
    %3397 = vmatprep.subr.bf16.mxu0 %v2154
    %3398 = vmatpush1.bf16.msra.mxu0 %v2153
    %3399 = vmatprep.subr.bf16.mxu0 %v2147
    %3400 = vmatpush1.bf16.msra.mxu0 %v2146
    %3401 = vmatprep.subr.bf16.mxu0 %v2140
    %3402 = vmatpush1.bf16.msra.mxu0 %v2139
    %3403 = vmatprep.subr.bf16.mxu0 %v2133
    %3404 = vmatpush1.bf16.msra.mxu0 %v2132
    %3405 = vmatprep.subr.bf16.mxu0 %v2126
    %3406 = vmatpush1.bf16.msra.mxu0 %v2125
    %3407 = vmatprep.subr.bf16.mxu0 %v2119
    %3408 = vmatpush1.bf16.msra.mxu0 %v2118
    %3409 = vmatprep.subr.bf16.mxu0 %v2112
    %3410 = vmatpush1.bf16.msra.mxu0 %v2111
    %3411 = vmatprep.subr.bf16.mxu0 %v2105
    %3412 = vmatpush1.bf16.msra.mxu0 %v2104
    %3413 = vmatprep.subr.bf16.mxu0 %v2210
    %3414 = vmatpush2.bf16.msra.mxu0 %v2209
    %3415 = vmatprep.subr.bf16.mxu0 %v2203
    %3416 = vmatpush2.bf16.msra.mxu0 %v2202
    %3417 = vmatprep.subr.bf16.mxu0 %v2196
    %3418 = vmatpush2.bf16.msra.mxu0 %v2195
    %3419 = vmatprep.subr.bf16.mxu0 %v2189
    %3420 = vmatpush2.bf16.msra.mxu0 %v2188
    %3421 = vmatprep.subr.bf16.mxu0 %v2182
    %3422 = vmatpush2.bf16.msra.mxu0 %v2181
    %3423 = vmatprep.subr.bf16.mxu0 %v2175
    %3424 = vmatpush2.bf16.msra.mxu0 %v2174
    %3425 = vmatprep.subr.bf16.mxu0 %v2168
    %3426 = vmatpush2.bf16.msra.mxu0 %v2167
    %3427 = vmatprep.subr.bf16.mxu0 %v2161
    %3428 = vmatpush2.bf16.msra.mxu0 %v2160
    %3429 = vmatprep.mubr.bf16.mxu0 %v536
    %3430 = vmatmul.mubr.bf16.gmra.mxu0 %v535
    %v3431 = vpop.f32.mrf.mxu0
    %v3432 = vadd.f32 %v984, %v3431
    %v3433 = vpop.f32.mrf.mxu0
    %v3434 = vadd.f32 %v988, %v3433
    %v3435 = vpop.f32.mrf.mxu0
    %v3436 = vadd.f32 %v984, %v3435
    %v3437 = vpop.f32.mrf.mxu0
    %v3438 = vadd.f32 %v988, %v3437
    %3439 = vmatprep.mubr.bf16.mxu0 %v543
    %3440 = vmatmul.mubr.bf16.gmra.mxu0 %v542
    %v3441 = vpop.f32.mrf.mxu0
    %v3442 = vadd.f32 %v984, %v3441
    %v3443 = vpop.f32.mrf.mxu0
    %v3444 = vadd.f32 %v988, %v3443
    %v3445 = vpop.f32.mrf.mxu0
    %v3446 = vadd.f32 %v984, %v3445
    %v3447 = vpop.f32.mrf.mxu0
    %v3448 = vadd.f32 %v988, %v3447
    %3449 = vmatprep.mubr.bf16.mxu0 %v550
    %3450 = vmatmul.mubr.bf16.gmra.mxu0 %v549
    %v3451 = vpop.f32.mrf.mxu0
    %v3452 = vadd.f32 %v984, %v3451
    %v3453 = vpop.f32.mrf.mxu0
    %v3454 = vadd.f32 %v988, %v3453
    %v3455 = vpop.f32.mrf.mxu0
    %v3456 = vadd.f32 %v984, %v3455
    %v3457 = vpop.f32.mrf.mxu0
    %v3458 = vadd.f32 %v988, %v3457
    %3459 = vmatprep.mubr.bf16.mxu0 %v557
    %3460 = vmatmul.mubr.bf16.gmra.mxu0 %v556
    %v3461 = vpop.f32.mrf.mxu0
    %v3462 = vadd.f32 %v984, %v3461
    %v3463 = vpop.f32.mrf.mxu0
    %v3464 = vadd.f32 %v988, %v3463
    %v3465 = vpop.f32.mrf.mxu0
    %v3466 = vadd.f32 %v984, %v3465
    %v3467 = vpop.f32.mrf.mxu0
    %v3468 = vadd.f32 %v988, %v3467
    %3469 = vdwg.mxu0
    %3470 = vmatprep.subr.bf16.mxu0 %v2266
    %3471 = vmatpush1.bf16.msra.mxu0 %v2265
    %3472 = vmatprep.subr.bf16.mxu0 %v2259
    %3473 = vmatpush1.bf16.msra.mxu0 %v2258
    %3474 = vmatprep.subr.bf16.mxu0 %v2252
    %3475 = vmatpush1.bf16.msra.mxu0 %v2251
    %3476 = vmatprep.subr.bf16.mxu0 %v2245
    %3477 = vmatpush1.bf16.msra.mxu0 %v2244
    %3478 = vmatprep.subr.bf16.mxu0 %v2238
    %3479 = vmatpush1.bf16.msra.mxu0 %v2237
    %3480 = vmatprep.subr.bf16.mxu0 %v2231
    %3481 = vmatpush1.bf16.msra.mxu0 %v2230
    %3482 = vmatprep.subr.bf16.mxu0 %v2224
    %3483 = vmatpush1.bf16.msra.mxu0 %v2223
    %3484 = vmatprep.subr.bf16.mxu0 %v2217
    %3485 = vmatpush1.bf16.msra.mxu0 %v2216
    %3486 = vmatprep.subr.bf16.mxu0 %v2322
    %3487 = vmatpush2.bf16.msra.mxu0 %v2321
    %3488 = vmatprep.subr.bf16.mxu0 %v2315
    %3489 = vmatpush2.bf16.msra.mxu0 %v2314
    %3490 = vmatprep.subr.bf16.mxu0 %v2308
    %3491 = vmatpush2.bf16.msra.mxu0 %v2307
    %3492 = vmatprep.subr.bf16.mxu0 %v2301
    %3493 = vmatpush2.bf16.msra.mxu0 %v2300
    %3494 = vmatprep.subr.bf16.mxu0 %v2294
    %3495 = vmatpush2.bf16.msra.mxu0 %v2293
    %3496 = vmatprep.subr.bf16.mxu0 %v2287
    %3497 = vmatpush2.bf16.msra.mxu0 %v2286
    %3498 = vmatprep.subr.bf16.mxu0 %v2280
    %3499 = vmatpush2.bf16.msra.mxu0 %v2279
    %3500 = vmatprep.subr.bf16.mxu0 %v2273
    %3501 = vmatpush2.bf16.msra.mxu0 %v2272
    %3502 = vmatprep.mubr.bf16.mxu0 %v538
    %3503 = vmatmul.mubr.bf16.gmra.mxu0 %v537
    %v3504 = vpop.f32.mrf.mxu0
    %v3505 = vadd.f32 %v3432, %v3504
    %v3506 = vpop.f32.mrf.mxu0
    %v3507 = vadd.f32 %v3434, %v3506
    %v3508 = vpop.f32.mrf.mxu0
    %v3509 = vadd.f32 %v3436, %v3508
    %v3510 = vpop.f32.mrf.mxu0
    %v3511 = vadd.f32 %v3438, %v3510
    %3512 = vmatprep.mubr.bf16.mxu0 %v545
    %3513 = vmatmul.mubr.bf16.gmra.mxu0 %v544
    %v3514 = vpop.f32.mrf.mxu0
    %v3515 = vadd.f32 %v3442, %v3514
    %v3516 = vpop.f32.mrf.mxu0
    %v3517 = vadd.f32 %v3444, %v3516
    %v3518 = vpop.f32.mrf.mxu0
    %v3519 = vadd.f32 %v3446, %v3518
    %v3520 = vpop.f32.mrf.mxu0
    %v3521 = vadd.f32 %v3448, %v3520
    %3522 = vmatprep.mubr.bf16.mxu0 %v552
    %3523 = vmatmul.mubr.bf16.gmra.mxu0 %v551
    %v3524 = vpop.f32.mrf.mxu0
    %v3525 = vadd.f32 %v3452, %v3524
    %v3526 = vpop.f32.mrf.mxu0
    %v3527 = vadd.f32 %v3454, %v3526
    %v3528 = vpop.f32.mrf.mxu0
    %v3529 = vadd.f32 %v3456, %v3528
    %v3530 = vpop.f32.mrf.mxu0
    %v3531 = vadd.f32 %v3458, %v3530
    %3532 = vmatprep.mubr.bf16.mxu0 %v559
    %3533 = vmatmul.mubr.bf16.gmra.mxu0 %v558
    %v3534 = vpop.f32.mrf.mxu0
    %v3535 = vadd.f32 %v3462, %v3534
    %v3536 = vpop.f32.mrf.mxu0
    %v3537 = vadd.f32 %v3464, %v3536
    %v3538 = vpop.f32.mrf.mxu0
    %v3539 = vadd.f32 %v3466, %v3538
    %v3540 = vpop.f32.mrf.mxu0
    %v3541 = vadd.f32 %v3468, %v3540
    %3542 = vdwg.mxu0
    %3543 = vmatprep.subr.bf16.mxu0 %v2378
    %3544 = vmatpush1.bf16.msra.mxu0 %v2377
    %3545 = vmatprep.subr.bf16.mxu0 %v2371
    %3546 = vmatpush1.bf16.msra.mxu0 %v2370
    %3547 = vmatprep.subr.bf16.mxu0 %v2364
    %3548 = vmatpush1.bf16.msra.mxu0 %v2363
    %3549 = vmatprep.subr.bf16.mxu0 %v2357
    %3550 = vmatpush1.bf16.msra.mxu0 %v2356
    %3551 = vmatprep.subr.bf16.mxu0 %v2350
    %3552 = vmatpush1.bf16.msra.mxu0 %v2349
    %3553 = vmatprep.subr.bf16.mxu0 %v2343
    %3554 = vmatpush1.bf16.msra.mxu0 %v2342
    %3555 = vmatprep.subr.bf16.mxu0 %v2336
    %3556 = vmatpush1.bf16.msra.mxu0 %v2335
    %3557 = vmatprep.subr.bf16.mxu0 %v2329
    %3558 = vmatpush1.bf16.msra.mxu0 %v2328
    %3559 = vmatprep.subr.bf16.mxu0 %v2434
    %3560 = vmatpush2.bf16.msra.mxu0 %v2433
    %3561 = vmatprep.subr.bf16.mxu0 %v2427
    %3562 = vmatpush2.bf16.msra.mxu0 %v2426
    %3563 = vmatprep.subr.bf16.mxu0 %v2420
    %3564 = vmatpush2.bf16.msra.mxu0 %v2419
    %3565 = vmatprep.subr.bf16.mxu0 %v2413
    %3566 = vmatpush2.bf16.msra.mxu0 %v2412
    %3567 = vmatprep.subr.bf16.mxu0 %v2406
    %3568 = vmatpush2.bf16.msra.mxu0 %v2405
    %3569 = vmatprep.subr.bf16.mxu0 %v2399
    %3570 = vmatpush2.bf16.msra.mxu0 %v2398
    %3571 = vmatprep.subr.bf16.mxu0 %v2392
    %3572 = vmatpush2.bf16.msra.mxu0 %v2391
    %3573 = vmatprep.subr.bf16.mxu0 %v2385
    %3574 = vmatpush2.bf16.msra.mxu0 %v2384
    %3575 = vmatprep.mubr.bf16.mxu0 %v540
    %3576 = vmatmul.mubr.bf16.gmra.mxu0 %v539
    %v3577 = vpop.f32.mrf.mxu0
    %v3578 = vadd.f32 %v3505, %v3577
    %v3579 = vpop.f32.mrf.mxu0
    %v3580 = vadd.f32 %v3507, %v3579
    %v3581 = vpop.f32.mrf.mxu0
    %v3582 = vadd.f32 %v3509, %v3581
    %v3583 = vpop.f32.mrf.mxu0
    %v3584 = vadd.f32 %v3511, %v3583
    %3585 = vmatprep.mubr.bf16.mxu0 %v547
    %3586 = vmatmul.mubr.bf16.gmra.mxu0 %v546
    %v3587 = vpop.f32.mrf.mxu0
    %v3588 = vadd.f32 %v3515, %v3587
    %v3589 = vpop.f32.mrf.mxu0
    %v3590 = vadd.f32 %v3517, %v3589
    %v3591 = vpop.f32.mrf.mxu0
    %v3592 = vadd.f32 %v3519, %v3591
    %v3593 = vpop.f32.mrf.mxu0
    %v3594 = vadd.f32 %v3521, %v3593
    %3595 = vmatprep.mubr.bf16.mxu0 %v554
    %3596 = vmatmul.mubr.bf16.gmra.mxu0 %v553
    %v3597 = vpop.f32.mrf.mxu0
    %v3598 = vadd.f32 %v3525, %v3597
    %v3599 = vpop.f32.mrf.mxu0
    %v3600 = vadd.f32 %v3527, %v3599
    %v3601 = vpop.f32.mrf.mxu0
    %v3602 = vadd.f32 %v3529, %v3601
    %v3603 = vpop.f32.mrf.mxu0
    %v3604 = vadd.f32 %v3531, %v3603
    %3605 = vmatprep.mubr.bf16.mxu0 %v561
    %3606 = vmatmul.mubr.bf16.gmra.mxu0 %v560
    %v3607 = vpop.f32.mrf.mxu0
    %v3608 = vadd.f32 %v3535, %v3607
    %v3609 = vpop.f32.mrf.mxu0
    %v3610 = vadd.f32 %v3537, %v3609
    %v3611 = vpop.f32.mrf.mxu0
    %v3612 = vadd.f32 %v3539, %v3611
    %v3613 = vpop.f32.mrf.mxu0
    %v3614 = vadd.f32 %v3541, %v3613
    %3615 = vdwg.mxu0
    %3616 = vmatprep.subr.bf16.mxu0 0
    %3617 = vmatpush1.bf16.msra.mxu0 0
    %3618 = vmatprep.subr.bf16.mxu0 0
    %3619 = vmatpush1.bf16.msra.mxu0 0
    %3620 = vmatprep.subr.bf16.mxu0 0
    %3621 = vmatpush1.bf16.msra.mxu0 0
    %3622 = vmatprep.subr.bf16.mxu0 0
    %3623 = vmatpush1.bf16.msra.mxu0 0
    %3624 = vmatprep.subr.bf16.mxu0 0
    %3625 = vmatpush1.bf16.msra.mxu0 0
    %3626 = vmatprep.subr.bf16.mxu0 0
    %3627 = vmatpush1.bf16.msra.mxu0 0
    %3628 = vmatprep.subr.bf16.mxu0 %v2448
    %3629 = vmatpush1.bf16.msra.mxu0 %v2447
    %3630 = vmatprep.subr.bf16.mxu0 %v2441
    %3631 = vmatpush1.bf16.msra.mxu0 %v2440
    %3632 = vmatprep.subr.bf16.mxu0 0
    %3633 = vmatpush2.bf16.msra.mxu0 0
    %3634 = vmatprep.subr.bf16.mxu0 0
    %3635 = vmatpush2.bf16.msra.mxu0 0
    %3636 = vmatprep.subr.bf16.mxu0 0
    %3637 = vmatpush2.bf16.msra.mxu0 0
    %3638 = vmatprep.subr.bf16.mxu0 0
    %3639 = vmatpush2.bf16.msra.mxu0 0
    %3640 = vmatprep.subr.bf16.mxu0 0
    %3641 = vmatpush2.bf16.msra.mxu0 0
    %3642 = vmatprep.subr.bf16.mxu0 0
    %3643 = vmatpush2.bf16.msra.mxu0 0
    %3644 = vmatprep.subr.bf16.mxu0 0
    %3645 = vmatpush2.bf16.msra.mxu0 0
    %3646 = vmatprep.subr.bf16.mxu0 0
    %3647 = vmatpush2.bf16.msra.mxu0 0
    %3648 = vmatprep.mubr.bf16.mxu0 0
    %3649 = vmatmul.mubr.bf16.gmra.mxu0 %v2802
    %v3650 = vpop.f32.mrf.mxu0
    %v3651 = vadd.f32 %v3578, %v3650
    %v3652 = vpop.f32.mrf.mxu0
    %v3653 = vadd.f32 %v3580, %v3652
    %v3654 = vpop.f32.mrf.mxu0
    %v3655 = vadd.f32 %v3582, %v3654
    %v3656 = vpop.f32.mrf.mxu0
    %v3657 = vadd.f32 %v3584, %v3656
    %3658 = vmatprep.mubr.bf16.mxu0 0
    %3659 = vmatmul.mubr.bf16.gmra.mxu0 %v2805
    %v3660 = vpop.f32.mrf.mxu0
    %v3661 = vadd.f32 %v3588, %v3660
    %v3662 = vpop.f32.mrf.mxu0
    %v3663 = vadd.f32 %v3590, %v3662
    %v3664 = vpop.f32.mrf.mxu0
    %v3665 = vadd.f32 %v3592, %v3664
    %v3666 = vpop.f32.mrf.mxu0
    %v3667 = vadd.f32 %v3594, %v3666
    %3668 = vmatprep.mubr.bf16.mxu0 0
    %3669 = vmatmul.mubr.bf16.gmra.mxu0 %v2808
    %v3670 = vpop.f32.mrf.mxu0
    %v3671 = vadd.f32 %v3598, %v3670
    %v3672 = vpop.f32.mrf.mxu0
    %v3673 = vadd.f32 %v3600, %v3672
    %v3674 = vpop.f32.mrf.mxu0
    %v3675 = vadd.f32 %v3602, %v3674
    %v3676 = vpop.f32.mrf.mxu0
    %v3677 = vadd.f32 %v3604, %v3676
    %3678 = vmatprep.mubr.bf16.mxu0 0
    %3679 = vmatmul.mubr.bf16.gmra.mxu0 %v2811
    %v3680 = vpop.f32.mrf.mxu0
    %v3681 = vadd.f32 %v3608, %v3680
    %v3682 = vpop.f32.mrf.mxu0
    %v3683 = vadd.f32 %v3610, %v3682
    %v3684 = vpop.f32.mrf.mxu0
    %v3685 = vadd.f32 %v3612, %v3684
    %v3686 = vpop.f32.mrf.mxu0
    %v3687 = vadd.f32 %v3614, %v3686
    %3688 = vdwg.mxu0
    %3689 = vmatprep.subr.bf16.mxu0 0
    %3690 = vmatpush1.bf16.msra.mxu0 %v2155
    %3691 = vmatprep.subr.bf16.mxu0 0
    %3692 = vmatpush1.bf16.msra.mxu0 %v2148
    %3693 = vmatprep.subr.bf16.mxu0 0
    %3694 = vmatpush1.bf16.msra.mxu0 %v2141
    %3695 = vmatprep.subr.bf16.mxu0 0
    %3696 = vmatpush1.bf16.msra.mxu0 %v2134
    %3697 = vmatprep.subr.bf16.mxu0 0
    %3698 = vmatpush1.bf16.msra.mxu0 %v2127
    %3699 = vmatprep.subr.bf16.mxu0 0
    %3700 = vmatpush1.bf16.msra.mxu0 %v2120
    %3701 = vmatprep.subr.bf16.mxu0 0
    %3702 = vmatpush1.bf16.msra.mxu0 %v2113
    %3703 = vmatprep.subr.bf16.mxu0 0
    %3704 = vmatpush1.bf16.msra.mxu0 %v2106
    %3705 = vmatprep.subr.bf16.mxu0 0
    %3706 = vmatpush2.bf16.msra.mxu0 %v2211
    %3707 = vmatprep.subr.bf16.mxu0 0
    %3708 = vmatpush2.bf16.msra.mxu0 %v2204
    %3709 = vmatprep.subr.bf16.mxu0 0
    %3710 = vmatpush2.bf16.msra.mxu0 %v2197
    %3711 = vmatprep.subr.bf16.mxu0 0
    %3712 = vmatpush2.bf16.msra.mxu0 %v2190
    %3713 = vmatprep.subr.bf16.mxu0 0
    %3714 = vmatpush2.bf16.msra.mxu0 %v2183
    %3715 = vmatprep.subr.bf16.mxu0 0
    %3716 = vmatpush2.bf16.msra.mxu0 %v2176
    %3717 = vmatprep.subr.bf16.mxu0 0
    %3718 = vmatpush2.bf16.msra.mxu0 %v2169
    %3719 = vmatprep.subr.bf16.mxu0 0
    %3720 = vmatpush2.bf16.msra.mxu0 %v2162
    %3721 = vmatprep.mubr.bf16.mxu0 %v536
    %3722 = vmatmul.mubr.bf16.gmra.mxu0 %v535
    %v3723 = vpop.f32.mrf.mxu0
    %v3724 = vadd.f32 %v992, %v3723
    %v3725 = vpop.f32.mrf.mxu0
    %v3726 = vpop.f32.mrf.mxu0
    %v3727 = vadd.f32 %v992, %v3726
    %v3728 = vpop.f32.mrf.mxu0
    %3729 = vmatprep.mubr.bf16.mxu0 %v543
    %3730 = vmatmul.mubr.bf16.gmra.mxu0 %v542
    %v3731 = vpop.f32.mrf.mxu0
    %v3732 = vadd.f32 %v992, %v3731
    %v3733 = vpop.f32.mrf.mxu0
    %v3734 = vpop.f32.mrf.mxu0
    %v3735 = vadd.f32 %v992, %v3734
    %v3736 = vpop.f32.mrf.mxu0
    %3737 = vmatprep.mubr.bf16.mxu0 %v550
    %3738 = vmatmul.mubr.bf16.gmra.mxu0 %v549
    %v3739 = vpop.f32.mrf.mxu0
    %v3740 = vadd.f32 %v992, %v3739
    %v3741 = vpop.f32.mrf.mxu0
    %v3742 = vpop.f32.mrf.mxu0
    %v3743 = vadd.f32 %v992, %v3742
    %v3744 = vpop.f32.mrf.mxu0
    %3745 = vmatprep.mubr.bf16.mxu0 %v557
    %3746 = vmatmul.mubr.bf16.gmra.mxu0 %v556
    %v3747 = vpop.f32.mrf.mxu0
    %v3748 = vadd.f32 %v992, %v3747
    %v3749 = vpop.f32.mrf.mxu0
    %v3750 = vpop.f32.mrf.mxu0
    %v3751 = vadd.f32 %v992, %v3750
    %v3752 = vpop.f32.mrf.mxu0
    %3753 = vdwg.mxu0
    %3754 = vmatprep.subr.bf16.mxu0 0
    %3755 = vmatpush1.bf16.msra.mxu0 %v2267
    %3756 = vmatprep.subr.bf16.mxu0 0
    %3757 = vmatpush1.bf16.msra.mxu0 %v2260
    %3758 = vmatprep.subr.bf16.mxu0 0
    %3759 = vmatpush1.bf16.msra.mxu0 %v2253
    %3760 = vmatprep.subr.bf16.mxu0 0
    %3761 = vmatpush1.bf16.msra.mxu0 %v2246
    %3762 = vmatprep.subr.bf16.mxu0 0
    %3763 = vmatpush1.bf16.msra.mxu0 %v2239
    %3764 = vmatprep.subr.bf16.mxu0 0
    %3765 = vmatpush1.bf16.msra.mxu0 %v2232
    %3766 = vmatprep.subr.bf16.mxu0 0
    %3767 = vmatpush1.bf16.msra.mxu0 %v2225
    %3768 = vmatprep.subr.bf16.mxu0 0
    %3769 = vmatpush1.bf16.msra.mxu0 %v2218
    %3770 = vmatprep.subr.bf16.mxu0 0
    %3771 = vmatpush2.bf16.msra.mxu0 %v2323
    %3772 = vmatprep.subr.bf16.mxu0 0
    %3773 = vmatpush2.bf16.msra.mxu0 %v2316
    %3774 = vmatprep.subr.bf16.mxu0 0
    %3775 = vmatpush2.bf16.msra.mxu0 %v2309
    %3776 = vmatprep.subr.bf16.mxu0 0
    %3777 = vmatpush2.bf16.msra.mxu0 %v2302
    %3778 = vmatprep.subr.bf16.mxu0 0
    %3779 = vmatpush2.bf16.msra.mxu0 %v2295
    %3780 = vmatprep.subr.bf16.mxu0 0
    %3781 = vmatpush2.bf16.msra.mxu0 %v2288
    %3782 = vmatprep.subr.bf16.mxu0 0
    %3783 = vmatpush2.bf16.msra.mxu0 %v2281
    %3784 = vmatprep.subr.bf16.mxu0 0
    %3785 = vmatpush2.bf16.msra.mxu0 %v2274
    %3786 = vmatprep.mubr.bf16.mxu0 %v538
    %3787 = vmatmul.mubr.bf16.gmra.mxu0 %v537
    %v3788 = vpop.f32.mrf.mxu0
    %v3789 = vadd.f32 %v3724, %v3788
    %v3790 = vpop.f32.mrf.mxu0
    %v3791 = vpop.f32.mrf.mxu0
    %v3792 = vadd.f32 %v3727, %v3791
    %v3793 = vpop.f32.mrf.mxu0
    %3794 = vmatprep.mubr.bf16.mxu0 %v545
    %3795 = vmatmul.mubr.bf16.gmra.mxu0 %v544
    %v3796 = vpop.f32.mrf.mxu0
    %v3797 = vadd.f32 %v3732, %v3796
    %v3798 = vpop.f32.mrf.mxu0
    %v3799 = vpop.f32.mrf.mxu0
    %v3800 = vadd.f32 %v3735, %v3799
    %v3801 = vpop.f32.mrf.mxu0
    %3802 = vmatprep.mubr.bf16.mxu0 %v552
    %3803 = vmatmul.mubr.bf16.gmra.mxu0 %v551
    %v3804 = vpop.f32.mrf.mxu0
    %v3805 = vadd.f32 %v3740, %v3804
    %v3806 = vpop.f32.mrf.mxu0
    %v3807 = vpop.f32.mrf.mxu0
    %v3808 = vadd.f32 %v3743, %v3807
    %v3809 = vpop.f32.mrf.mxu0
    %3810 = vmatprep.mubr.bf16.mxu0 %v559
    %3811 = vmatmul.mubr.bf16.gmra.mxu0 %v558
    %v3812 = vpop.f32.mrf.mxu0
    %v3813 = vadd.f32 %v3748, %v3812
    %v3814 = vpop.f32.mrf.mxu0
    %v3815 = vpop.f32.mrf.mxu0
    %v3816 = vadd.f32 %v3751, %v3815
    %v3817 = vpop.f32.mrf.mxu0
    %3818 = vdwg.mxu0
    %3819 = vmatprep.subr.bf16.mxu0 0
    %3820 = vmatpush1.bf16.msra.mxu0 %v2379
    %3821 = vmatprep.subr.bf16.mxu0 0
    %3822 = vmatpush1.bf16.msra.mxu0 %v2372
    %3823 = vmatprep.subr.bf16.mxu0 0
    %3824 = vmatpush1.bf16.msra.mxu0 %v2365
    %3825 = vmatprep.subr.bf16.mxu0 0
    %3826 = vmatpush1.bf16.msra.mxu0 %v2358
    %3827 = vmatprep.subr.bf16.mxu0 0
    %3828 = vmatpush1.bf16.msra.mxu0 %v2351
    %3829 = vmatprep.subr.bf16.mxu0 0
    %3830 = vmatpush1.bf16.msra.mxu0 %v2344
    %3831 = vmatprep.subr.bf16.mxu0 0
    %3832 = vmatpush1.bf16.msra.mxu0 %v2337
    %3833 = vmatprep.subr.bf16.mxu0 0
    %3834 = vmatpush1.bf16.msra.mxu0 %v2330
    %3835 = vmatprep.subr.bf16.mxu0 0
    %3836 = vmatpush2.bf16.msra.mxu0 %v2435
    %3837 = vmatprep.subr.bf16.mxu0 0
    %3838 = vmatpush2.bf16.msra.mxu0 %v2428
    %3839 = vmatprep.subr.bf16.mxu0 0
    %3840 = vmatpush2.bf16.msra.mxu0 %v2421
    %3841 = vmatprep.subr.bf16.mxu0 0
    %3842 = vmatpush2.bf16.msra.mxu0 %v2414
    %3843 = vmatprep.subr.bf16.mxu0 0
    %3844 = vmatpush2.bf16.msra.mxu0 %v2407
    %3845 = vmatprep.subr.bf16.mxu0 0
    %3846 = vmatpush2.bf16.msra.mxu0 %v2400
    %3847 = vmatprep.subr.bf16.mxu0 0
    %3848 = vmatpush2.bf16.msra.mxu0 %v2393
    %3849 = vmatprep.subr.bf16.mxu0 0
    %3850 = vmatpush2.bf16.msra.mxu0 %v2386
    %3851 = vmatprep.mubr.bf16.mxu0 %v540
    %3852 = vmatmul.mubr.bf16.gmra.mxu0 %v539
    %v3853 = vpop.f32.mrf.mxu0
    %v3854 = vadd.f32 %v3789, %v3853
    %v3855 = vpop.f32.mrf.mxu0
    %v3856 = vpop.f32.mrf.mxu0
    %v3857 = vadd.f32 %v3792, %v3856
    %v3858 = vpop.f32.mrf.mxu0
    %3859 = vmatprep.mubr.bf16.mxu0 %v547
    %3860 = vmatmul.mubr.bf16.gmra.mxu0 %v546
    %v3861 = vpop.f32.mrf.mxu0
    %v3862 = vadd.f32 %v3797, %v3861
    %v3863 = vpop.f32.mrf.mxu0
    %v3864 = vpop.f32.mrf.mxu0
    %v3865 = vadd.f32 %v3800, %v3864
    %v3866 = vpop.f32.mrf.mxu0
    %3867 = vmatprep.mubr.bf16.mxu0 %v554
    %3868 = vmatmul.mubr.bf16.gmra.mxu0 %v553
    %v3869 = vpop.f32.mrf.mxu0
    %v3870 = vadd.f32 %v3805, %v3869
    %v3871 = vpop.f32.mrf.mxu0
    %v3872 = vpop.f32.mrf.mxu0
    %v3873 = vadd.f32 %v3808, %v3872
    %v3874 = vpop.f32.mrf.mxu0
    %3875 = vmatprep.mubr.bf16.mxu0 %v561
    %3876 = vmatmul.mubr.bf16.gmra.mxu0 %v560
    %v3877 = vpop.f32.mrf.mxu0
    %v3878 = vadd.f32 %v3813, %v3877
    %v3879 = vpop.f32.mrf.mxu0
    %v3880 = vpop.f32.mrf.mxu0
    %v3881 = vadd.f32 %v3816, %v3880
    %v3882 = vpop.f32.mrf.mxu0
    %3883 = vdwg.mxu0
    %3884 = vmatprep.subr.bf16.mxu0 0
    %3885 = vmatpush1.bf16.msra.mxu0 0
    %3886 = vmatprep.subr.bf16.mxu0 0
    %3887 = vmatpush1.bf16.msra.mxu0 0
    %3888 = vmatprep.subr.bf16.mxu0 0
    %3889 = vmatpush1.bf16.msra.mxu0 0
    %3890 = vmatprep.subr.bf16.mxu0 0
    %3891 = vmatpush1.bf16.msra.mxu0 0
    %3892 = vmatprep.subr.bf16.mxu0 0
    %3893 = vmatpush1.bf16.msra.mxu0 0
    %3894 = vmatprep.subr.bf16.mxu0 0
    %3895 = vmatpush1.bf16.msra.mxu0 0
    %3896 = vmatprep.subr.bf16.mxu0 0
    %3897 = vmatpush1.bf16.msra.mxu0 %v2449
    %3898 = vmatprep.subr.bf16.mxu0 0
    %3899 = vmatpush1.bf16.msra.mxu0 %v2442
    %3900 = vmatprep.subr.bf16.mxu0 0
    %3901 = vmatpush2.bf16.msra.mxu0 0
    %3902 = vmatprep.subr.bf16.mxu0 0
    %3903 = vmatpush2.bf16.msra.mxu0 0
    %3904 = vmatprep.subr.bf16.mxu0 0
    %3905 = vmatpush2.bf16.msra.mxu0 0
    %3906 = vmatprep.subr.bf16.mxu0 0
    %3907 = vmatpush2.bf16.msra.mxu0 0
    %3908 = vmatprep.subr.bf16.mxu0 0
    %3909 = vmatpush2.bf16.msra.mxu0 0
    %3910 = vmatprep.subr.bf16.mxu0 0
    %3911 = vmatpush2.bf16.msra.mxu0 0
    %3912 = vmatprep.subr.bf16.mxu0 0
    %3913 = vmatpush2.bf16.msra.mxu0 0
    %3914 = vmatprep.subr.bf16.mxu0 0
    %3915 = vmatpush2.bf16.msra.mxu0 0
    %3916 = vmatprep.mubr.bf16.mxu0 0
    %3917 = vmatmul.mubr.bf16.gmra.mxu0 %v2802
    %v3918 = vpop.f32.mrf.mxu0
    %v3919 = vadd.f32 %v3854, %v3918
    %v3920 = vpop.f32.mrf.mxu0
    %v3921 = vpop.f32.mrf.mxu0
    %v3922 = vadd.f32 %v3857, %v3921
    %v3923 = vpop.f32.mrf.mxu0
    %3924 = vmatprep.mubr.bf16.mxu0 0
    %3925 = vmatmul.mubr.bf16.gmra.mxu0 %v2805
    %v3926 = vpop.f32.mrf.mxu0
    %v3927 = vadd.f32 %v3862, %v3926
    %v3928 = vpop.f32.mrf.mxu0
    %v3929 = vpop.f32.mrf.mxu0
    %v3930 = vadd.f32 %v3865, %v3929
    %v3931 = vpop.f32.mrf.mxu0
    %3932 = vmatprep.mubr.bf16.mxu0 0
    %3933 = vmatmul.mubr.bf16.gmra.mxu0 %v2808
    %v3934 = vpop.f32.mrf.mxu0
    %v3935 = vadd.f32 %v3870, %v3934
    %v3936 = vpop.f32.mrf.mxu0
    %v3937 = vpop.f32.mrf.mxu0
    %v3938 = vadd.f32 %v3873, %v3937
    %v3939 = vpop.f32.mrf.mxu0
    %3940 = vmatprep.mubr.bf16.mxu0 0
    %3941 = vmatmul.mubr.bf16.gmra.mxu0 %v2811
    %v3942 = vpop.f32.mrf.mxu0
    %v3943 = vadd.f32 %v3878, %v3942
    %v3944 = vpop.f32.mrf.mxu0
    %v3945 = vpop.f32.mrf.mxu0
    %v3946 = vadd.f32 %v3881, %v3945
    %v3947 = vpop.f32.mrf.mxu0
    %3948 = vdwg.mxu0
    %v3949 = vmax.f32 %v3067, 0.0
    %v3950 = vmax.f32 %v3069, 0.0
    %v3951 = vmax.f32 %v3359, 0.0
    %v3952 = vmax.f32 %v3361, 0.0
    %v3953 = vmax.f32 %v3651, 0.0
    %v3954 = vmax.f32 %v3653, 0.0
    %v3955 = vmax.f32 %v3919, 0.0
    %v3956 = vmax.f32 %v3071, 0.0
    %v3957 = vmax.f32 %v3073, 0.0
    %v3958 = vmax.f32 %v3363, 0.0
    %v3959 = vmax.f32 %v3365, 0.0
    %v3960 = vmax.f32 %v3655, 0.0
    %v3961 = vmax.f32 %v3657, 0.0
    %v3962 = vmax.f32 %v3922, 0.0
    %v3963 = vmax.f32 %v3077, 0.0
    %v3964 = vmax.f32 %v3079, 0.0
    %v3965 = vmax.f32 %v3369, 0.0
    %v3966 = vmax.f32 %v3371, 0.0
    %v3967 = vmax.f32 %v3661, 0.0
    %v3968 = vmax.f32 %v3663, 0.0
    %v3969 = vmax.f32 %v3927, 0.0
    %v3970 = vmax.f32 %v3081, 0.0
    %v3971 = vmax.f32 %v3083, 0.0
    %v3972 = vmax.f32 %v3373, 0.0
    %v3973 = vmax.f32 %v3375, 0.0
    %v3974 = vmax.f32 %v3665, 0.0
    %v3975 = vmax.f32 %v3667, 0.0
    %v3976 = vmax.f32 %v3930, 0.0
    %v3977 = vmax.f32 %v3087, 0.0
    %v3978 = vmax.f32 %v3089, 0.0
    %v3979 = vmax.f32 %v3379, 0.0
    %v3980 = vmax.f32 %v3381, 0.0
    %v3981 = vmax.f32 %v3671, 0.0
    %v3982 = vmax.f32 %v3673, 0.0
    %v3983 = vmax.f32 %v3935, 0.0
    %v3984 = vmax.f32 %v3091, 0.0
    %v3985 = vmax.f32 %v3093, 0.0
    %v3986 = vmax.f32 %v3383, 0.0
    %v3987 = vmax.f32 %v3385, 0.0
    %v3988 = vmax.f32 %v3675, 0.0
    %v3989 = vmax.f32 %v3677, 0.0
    %v3990 = vmax.f32 %v3938, 0.0
    %v3991 = vmax.f32 %v3097, 0.0
    %v3992 = vmax.f32 %v3099, 0.0
    %v3993 = vmax.f32 %v3389, 0.0
    %v3994 = vmax.f32 %v3391, 0.0
    %v3995 = vmax.f32 %v3681, 0.0
    %v3996 = vmax.f32 %v3683, 0.0
    %v3997 = vmax.f32 %v3943, 0.0
    %v3998 = vmax.f32 %v3101, 0.0
    %v3999 = vmax.f32 %v3103, 0.0
    %v4000 = vmax.f32 %v3393, 0.0
    %v4001 = vmax.f32 %v3395, 0.0
    %v4002 = vmax.f32 %v3685, 0.0
    %v4003 = vmax.f32 %v3687, 0.0
    %v4004 = vmax.f32 %v3946, 0.0
    %v4005 = vpack.c.bf16 %v3956, %v3949
    %v4006 = vpack.c.bf16 %v3957, %v3950
    %v4007 = vpack.c.bf16 %v3958, %v3951
    %v4008 = vpack.c.bf16 %v3959, %v3952
    %v4009 = vpack.c.bf16 %v3960, %v3953
    %v4010 = vpack.c.bf16 %v3961, %v3954
    %v4011 = vpack.c.bf16 %v3962, %v3955
    %v4012 = vpack.c.bf16 %v3970, %v3963
    %v4013 = vpack.c.bf16 %v3971, %v3964
    %v4014 = vpack.c.bf16 %v3972, %v3965
    %v4015 = vpack.c.bf16 %v3973, %v3966
    %v4016 = vpack.c.bf16 %v3974, %v3967
    %v4017 = vpack.c.bf16 %v3975, %v3968
    %v4018 = vpack.c.bf16 %v3976, %v3969
    %v4019 = vpack.c.bf16 %v3984, %v3977
    %v4020 = vpack.c.bf16 %v3985, %v3978
    %v4021 = vpack.c.bf16 %v3986, %v3979
    %v4022 = vpack.c.bf16 %v3987, %v3980
    %v4023 = vpack.c.bf16 %v3988, %v3981
    %v4024 = vpack.c.bf16 %v3989, %v3982
    %v4025 = vpack.c.bf16 %v3990, %v3983
    %v4026 = vpack.c.bf16 %v3998, %v3991
    %v4027 = vpack.c.bf16 %v3999, %v3992
    %v4028 = vpack.c.bf16 %v4000, %v3993
    %v4029 = vpack.c.bf16 %v4001, %v3994
    %v4030 = vpack.c.bf16 %v4002, %v3995
    %v4031 = vpack.c.bf16 %v4003, %v3996
    %v4032 = vpack.c.bf16 %v4004, %v3997
    %v4033 = vld [vmem:[%s5] sm:$0xf]
    %v4034 = vld [vmem:[%s5 + $0x4] sm:$0xf]
    %v4035 = vld [vmem:[%s5 + $0x8] sm:$0xf]
    %v4036 = vld [vmem:[%s5 + $0xc] sm:$0xf]
    %v4037 = vld [vmem:[%s5 + $0x10] sm:$0xf]
    %v4038 = vld [vmem:[%s5 + $0x14] sm:$0xf]
    %v4039 = vld [vmem:[%s5 + $0x18] sm:$0xf]
    %v4040 = vld [vmem:[%s5 + $0x1c] sm:$0xf]
    %v4041 = vld [vmem:[%s5 + $0x20] sm:$0xf]
    %v4042 = vld [vmem:[%s5 + $0x24] sm:$0xf]
    %v4043 = vld [vmem:[%s5 + $0x28] sm:$0xf]
    %v4044 = vld [vmem:[%s5 + $0x2c] sm:$0xf]
    %v4045 = vld [vmem:[%s5 + $0x30] sm:$0xf]
    %v4046 = vld [vmem:[%s5 + $0x34] sm:$0xf]
    %v4047 = vld [vmem:[%s5 + $0x38] sm:$0xf]
    %v4048 = vld [vmem:[%s5 + $0x3c] sm:$0xf]
    %v4049 = vld [vmem:[%s5 + $0x40] sm:$0xf]
    %v4050 = vld [vmem:[%s5 + $0x44] sm:$0xf]
    %v4051 = vld [vmem:[%s5 + $0x48] sm:$0xf]
    %v4052 = vld [vmem:[%s5 + $0x4c] sm:$0xf]
    %v4053 = vld [vmem:[%s5 + $0x50] sm:$0xf]
    %v4054 = vld [vmem:[%s5 + $0x54] sm:$0xf]
    %v4055 = vld [vmem:[%s5 + $0x58] sm:$0xf]
    %v4056 = vld [vmem:[%s5 + $0x5c] sm:$0xf]
    %v4057 = vld [vmem:[%s5 + $0x60] sm:$0xf]
    %v4058 = vld [vmem:[%s5 + $0x64] sm:$0xf]
    %v4059 = vld [vmem:[%s5 + $0x68] sm:$0xf]
    %v4060 = vld [vmem:[%s5 + $0x6c] sm:$0xf]
    %v4061 = vld [vmem:[%s5 + $0x70] sm:$0xf]
    %v4062 = vld [vmem:[%s5 + $0x74] sm:$0xf]
    %v4063 = vld [vmem:[%s5 + $0x78] sm:$0xf]
    %v4064 = vld [vmem:[%s5 + $0x7c] sm:$0xf]
    %v4065 = vld [vmem:[%s5 + $0x80] sm:$0xf]
    %v4066 = vld [vmem:[%s5 + $0x84] sm:$0xf]
    %v4067 = vld [vmem:[%s5 + $0x88] sm:$0xf]
    %v4068 = vld [vmem:[%s5 + $0x8c] sm:$0xf]
    %v4069 = vld [vmem:[%s5 + $0x90] sm:$0xf]
    %v4070 = vld [vmem:[%s5 + $0x94] sm:$0xf]
    %v4071 = vld [vmem:[%s5 + $0x98] sm:$0xf]
    %v4072 = vld [vmem:[%s5 + $0x9c] sm:$0xf]
    %v4073 = vld [vmem:[%s5 + $0xa0] sm:$0xf]
    %v4074 = vld [vmem:[%s5 + $0xa4] sm:$0xf]
    %v4075 = vld [vmem:[%s5 + $0xa8] sm:$0xf]
    %v4076 = vld [vmem:[%s5 + $0xac] sm:$0xf]
    %v4077 = vld [vmem:[%s5 + $0xb0] sm:$0xf]
    %v4078 = vld [vmem:[%s5 + $0xb4] sm:$0xf]
    %v4079 = vld [vmem:[%s5 + $0xb8] sm:$0xf]
    %v4080 = vld [vmem:[%s5 + $0xbc] sm:$0xf]
    %v4081 = vld [vmem:[%s5 + $0xc0] sm:$0xf]
    %v4082 = vld [vmem:[%s5 + $0xc4] sm:$0xf]
    %v4083 = vld [vmem:[%s5 + $0xc8] sm:$0xf]
    %v4084 = vld [vmem:[%s5 + $0xcc] sm:$0xf]
    %v4085 = vld [vmem:[%s5 + $0xd0] sm:$0xf]
    %v4086 = vld [vmem:[%s5 + $0xd4] sm:$0xf]
    %v4087 = vld [vmem:[%s5 + $0xd8] sm:$0xf]
    %v4088 = vld [vmem:[%s5 + $0xdc] sm:$0xf]
    %v4089 = vld [vmem:[%s5 + $0xe0] sm:$0xf]
    %v4090 = vld [vmem:[%s5 + $0xe4] sm:$0xf]
    %v4091 = vld [vmem:[%s5 + $0xe8] sm:$0xf]
    %v4092 = vld [vmem:[%s5 + $0xec] sm:$0xf]
    %v4093 = vld [vmem:[%s5 + $0xf0] sm:$0xf]
    %v4094 = vld [vmem:[%s5 + $0xf4] sm:$0xf]
    %v4095 = vld [vmem:[%s5 + $0xf8] sm:$0xf]
    %v4096 = vld [vmem:[%s5 + $0xfc] sm:$0xf]
    %v4097 = vld [vmem:[%s5 + $0x100] sm:$0xf]
    %v4098 = vld [vmem:[%s5 + $0x104] sm:$0xf]
    %v4099 = vld [vmem:[%s5 + $0x108] sm:$0xf]
    %v4100 = vld [vmem:[%s5 + $0x10c] sm:$0xf]
    %v4101 = vld [vmem:[%s5 + $0x110] sm:$0xf]
    %v4102 = vld [vmem:[%s5 + $0x114] sm:$0xf]
    %v4103 = vld [vmem:[%s5 + $0x118] sm:$0xf]
    %v4104 = vld [vmem:[%s5 + $0x11c] sm:$0xf]
    %v4105 = vld [vmem:[%s5 + $0x120] sm:$0xf]
    %v4106 = vld [vmem:[%s5 + $0x124] sm:$0xf]
    %v4107 = vld [vmem:[%s5 + $0x128] sm:$0xf]
    %v4108 = vld [vmem:[%s5 + $0x12c] sm:$0xf]
    %v4109 = vld [vmem:[%s5 + $0x130] sm:$0xf]
    %v4110 = vld [vmem:[%s5 + $0x134] sm:$0xf]
    %v4111 = vld [vmem:[%s5 + $0x138] sm:$0xf]
    %v4112 = vld [vmem:[%s5 + $0x13c] sm:$0xf]
    %v4113 = vld [vmem:[%s5 + $0x140] sm:$0xf]
    %v4114 = vld [vmem:[%s5 + $0x144] sm:$0xf]
    %v4115 = vld [vmem:[%s5 + $0x148] sm:$0xf]
    %v4116 = vld [vmem:[%s5 + $0x14c] sm:$0xf]
    %v4117 = vld [vmem:[%s5 + $0x150] sm:$0xf]
    %v4118 = vld [vmem:[%s5 + $0x154] sm:$0xf]
    %v4119 = vld [vmem:[%s5 + $0x158] sm:$0xf]
    %v4120 = vld [vmem:[%s5 + $0x15c] sm:$0xf]
    %v4121 = vld [vmem:[%s5 + $0x160] sm:$0xf]
    %v4122 = vld [vmem:[%s5 + $0x164] sm:$0xf]
    %v4123 = vld [vmem:[%s5 + $0x168] sm:$0xf]
    %v4124 = vld [vmem:[%s5 + $0x16c] sm:$0xf]
    %v4125 = vld [vmem:[%s5 + $0x170] sm:$0xf]
    %v4126 = vld [vmem:[%s5 + $0x174] sm:$0xf]
    %v4127 = vld [vmem:[%s5 + $0x178] sm:$0xf]
    %v4128 = vld [vmem:[%s5 + $0x17c] sm:$0xf]
    %v4129 = vld [vmem:[%s5 + $0x180] sm:$0xf]
    %v4130 = vld [vmem:[%s5 + $0x184] sm:$0xf]
    %v4131 = vld [vmem:[%s5 + $0x188] sm:$0xf]
    %v4132 = vld [vmem:[%s5 + $0x18c] sm:$0xf]
    %v4133 = vld [vmem:[#allocation9] sm:$0x1]
    %v4135 = vlaneseq
    %v4136 = vshrl.u32 %v4135, 7
    %v4137 = vsub.s32 0, %v4136
    %v4138 = vrot.slane %v4133, %v4137
    %v4240 = vunpack.c.l.b16 %v4033
    %v4241 = vunpack.c.l.b16 %v4034
    %v4242 = vunpack.c.l.b16 %v4035
    %v4243 = vunpack.c.l.b16 %v4036
    %v4244 = vunpack.c.l.b16 %v4037
    %v4245 = vunpack.c.l.b16 %v4038
    %v4246 = vunpack.c.l.b16 %v4039
    %v4247 = vunpack.c.l.b16 %v4040
    %v4248 = vunpack.c.l.b16 %v4041
    %v4249 = vunpack.c.l.b16 %v4042
    %v4250 = vunpack.c.l.b16 %v4043
    %v4251 = vunpack.c.l.b16 %v4044
    %v4252 = vunpack.c.l.b16 %v4045
    %v4253 = vunpack.c.l.b16 %v4046
    %v4254 = vunpack.c.l.b16 %v4047
    %v4255 = vunpack.c.l.b16 %v4048
    %v4256 = vunpack.c.l.b16 %v4049
    %v4257 = vunpack.c.l.b16 %v4050
    %v4258 = vunpack.c.l.b16 %v4051
    %v4259 = vunpack.c.l.b16 %v4052
    %v4260 = vunpack.c.l.b16 %v4053
    %v4261 = vunpack.c.l.b16 %v4054
    %v4262 = vunpack.c.l.b16 %v4055
    %v4263 = vunpack.c.l.b16 %v4056
    %v4264 = vunpack.c.l.b16 %v4057
    %v4265 = vunpack.c.l.b16 %v4058
    %v4266 = vunpack.c.l.b16 %v4059
    %v4267 = vunpack.c.l.b16 %v4060
    %v4268 = vunpack.c.l.b16 %v4061
    %v4269 = vunpack.c.l.b16 %v4062
    %v4270 = vunpack.c.l.b16 %v4063
    %v4271 = vunpack.c.l.b16 %v4064
    %v4272 = vunpack.c.l.b16 %v4065
    %v4273 = vunpack.c.l.b16 %v4066
    %v4274 = vunpack.c.l.b16 %v4067
    %v4275 = vunpack.c.l.b16 %v4068
    %v4276 = vunpack.c.l.b16 %v4069
    %v4277 = vunpack.c.l.b16 %v4070
    %v4278 = vunpack.c.l.b16 %v4071
    %v4279 = vunpack.c.l.b16 %v4072
    %v4280 = vunpack.c.l.b16 %v4073
    %v4281 = vunpack.c.l.b16 %v4074
    %v4282 = vunpack.c.l.b16 %v4075
    %v4283 = vunpack.c.l.b16 %v4076
    %v4284 = vunpack.c.l.b16 %v4077
    %v4285 = vunpack.c.l.b16 %v4078
    %v4286 = vunpack.c.l.b16 %v4079
    %v4287 = vunpack.c.l.b16 %v4080
    %v4288 = vunpack.c.l.b16 %v4081
    %v4289 = vunpack.c.l.b16 %v4082
    %v4290 = vunpack.c.l.b16 %v4083
    %v4291 = vunpack.c.l.b16 %v4084
    %v4292 = vunpack.c.l.b16 %v4085
    %v4293 = vunpack.c.l.b16 %v4086
    %v4294 = vunpack.c.l.b16 %v4087
    %v4295 = vunpack.c.l.b16 %v4088
    %v4296 = vunpack.c.l.b16 %v4089
    %v4297 = vunpack.c.l.b16 %v4090
    %v4298 = vunpack.c.l.b16 %v4091
    %v4299 = vunpack.c.l.b16 %v4092
    %v4300 = vunpack.c.l.b16 %v4093
    %v4301 = vunpack.c.l.b16 %v4094
    %v4302 = vunpack.c.l.b16 %v4095
    %v4303 = vunpack.c.l.b16 %v4096
    %v4304 = vunpack.c.l.b16 %v4097
    %v4305 = vunpack.c.l.b16 %v4098
    %v4306 = vunpack.c.l.b16 %v4099
    %v4307 = vunpack.c.l.b16 %v4100
    %v4308 = vunpack.c.l.b16 %v4101
    %v4309 = vunpack.c.l.b16 %v4102
    %v4310 = vunpack.c.l.b16 %v4103
    %v4311 = vunpack.c.l.b16 %v4104
    %v4312 = vunpack.c.l.b16 %v4105
    %v4313 = vunpack.c.l.b16 %v4106
    %v4314 = vunpack.c.l.b16 %v4107
    %v4315 = vunpack.c.l.b16 %v4108
    %v4316 = vunpack.c.l.b16 %v4109
    %v4317 = vunpack.c.l.b16 %v4110
    %v4318 = vunpack.c.l.b16 %v4111
    %v4319 = vunpack.c.l.b16 %v4112
    %v4320 = vunpack.c.l.b16 %v4113
    %v4321 = vunpack.c.l.b16 %v4114
    %v4322 = vunpack.c.l.b16 %v4115
    %v4323 = vunpack.c.l.b16 %v4116
    %v4324 = vunpack.c.l.b16 %v4117
    %v4325 = vunpack.c.l.b16 %v4118
    %v4326 = vunpack.c.l.b16 %v4119
    %v4327 = vunpack.c.l.b16 %v4120
    %v4328 = vunpack.c.l.b16 %v4121
    %v4329 = vunpack.c.l.b16 %v4122
    %v4330 = vunpack.c.l.b16 %v4123
    %v4331 = vunpack.c.l.b16 %v4124
    %v4332 = vunpack.c.l.b16 %v4125
    %v4333 = vunpack.c.l.b16 %v4126
    %v4334 = vunpack.c.l.b16 %v4127
    %v4335 = vunpack.c.l.b16 %v4128
    %v4336 = vunpack.c.l.b16 %v4129
    %v4337 = vunpack.c.l.b16 %v4130
    %v4338 = vunpack.c.l.b16 %v4131
    %v4339 = vunpack.c.l.b16 %v4132
    %v4340 = vpack.c.b16 %v4241, %v4240
    %v4341 = vpack.c.b16 %v4243, %v4242
    %v4342 = vpack.c.b16 %v4245, %v4244
    %v4343 = vpack.c.b16 %v4247, %v4246
    %v4344 = vpack.c.b16 %v4249, %v4248
    %v4345 = vpack.c.b16 %v4251, %v4250
    %v4346 = vpack.c.b16 %v4253, %v4252
    %v4347 = vpack.c.b16 %v4255, %v4254
    %v4348 = vpack.c.b16 %v4257, %v4256
    %v4349 = vpack.c.b16 %v4259, %v4258
    %v4350 = vpack.c.b16 %v4261, %v4260
    %v4351 = vpack.c.b16 %v4263, %v4262
    %v4352 = vpack.c.b16 %v4265, %v4264
    %v4353 = vpack.c.b16 %v4267, %v4266
    %v4354 = vpack.c.b16 %v4269, %v4268
    %v4355 = vpack.c.b16 %v4271, %v4270
    %v4356 = vpack.c.b16 %v4273, %v4272
    %v4357 = vpack.c.b16 %v4275, %v4274
    %v4358 = vpack.c.b16 %v4277, %v4276
    %v4359 = vpack.c.b16 %v4279, %v4278
    %v4360 = vpack.c.b16 %v4281, %v4280
    %v4361 = vpack.c.b16 %v4283, %v4282
    %v4362 = vpack.c.b16 %v4285, %v4284
    %v4363 = vpack.c.b16 %v4287, %v4286
    %v4364 = vpack.c.b16 %v4289, %v4288
    %v4365 = vpack.c.b16 %v4291, %v4290
    %v4366 = vpack.c.b16 %v4293, %v4292
    %v4367 = vpack.c.b16 %v4295, %v4294
    %v4368 = vpack.c.b16 %v4297, %v4296
    %v4369 = vpack.c.b16 %v4299, %v4298
    %v4370 = vpack.c.b16 %v4301, %v4300
    %v4371 = vpack.c.b16 %v4303, %v4302
    %v4372 = vpack.c.b16 %v4305, %v4304
    %v4373 = vpack.c.b16 %v4307, %v4306
    %v4374 = vpack.c.b16 %v4309, %v4308
    %v4375 = vpack.c.b16 %v4311, %v4310
    %v4376 = vpack.c.b16 %v4313, %v4312
    %v4377 = vpack.c.b16 %v4315, %v4314
    %v4378 = vpack.c.b16 %v4317, %v4316
    %v4379 = vpack.c.b16 %v4319, %v4318
    %v4380 = vpack.c.b16 %v4321, %v4320
    %v4381 = vpack.c.b16 %v4323, %v4322
    %v4382 = vpack.c.b16 %v4325, %v4324
    %v4383 = vpack.c.b16 %v4327, %v4326
    %v4384 = vpack.c.b16 %v4329, %v4328
    %v4385 = vpack.c.b16 %v4331, %v4330
    %v4386 = vpack.c.b16 %v4333, %v4332
    %v4387 = vpack.c.b16 %v4335, %v4334
    %v4388 = vpack.c.b16 %v4337, %v4336
    %v4389 = vpack.c.b16 %v4339, %v4338
    %v4441 = vsel %vm2800, %v4011, 0
    %v4444 = vsel %vm2800, %v4018, 0
    %v4447 = vsel %vm2800, %v4025, 0
    %v4450 = vsel %vm2800, %v4032, 0
    %4452 = vmatprep.subr.bf16.mxu0 0
    %4453 = vmatpush1.bf16.msra.mxu0 %v4347
    %4454 = vmatprep.subr.bf16.mxu0 0
    %4455 = vmatpush1.bf16.msra.mxu0 %v4346
    %4456 = vmatprep.subr.bf16.mxu0 0
    %4457 = vmatpush1.bf16.msra.mxu0 %v4345
    %4458 = vmatprep.subr.bf16.mxu0 0
    %4459 = vmatpush1.bf16.msra.mxu0 %v4344
    %4460 = vmatprep.subr.bf16.mxu0 0
    %4461 = vmatpush1.bf16.msra.mxu0 %v4343
    %4462 = vmatprep.subr.bf16.mxu0 0
    %4463 = vmatpush1.bf16.msra.mxu0 %v4342
    %4464 = vmatprep.subr.bf16.mxu0 0
    %4465 = vmatpush1.bf16.msra.mxu0 %v4341
    %4466 = vmatprep.subr.bf16.mxu0 0
    %4467 = vmatpush1.bf16.msra.mxu0 %v4340
    %4468 = vmatprep.subr.bf16.mxu0 0
    %4469 = vmatpush2.bf16.msra.mxu0 %v4355
    %4470 = vmatprep.subr.bf16.mxu0 0
    %4471 = vmatpush2.bf16.msra.mxu0 %v4354
    %4472 = vmatprep.subr.bf16.mxu0 0
    %4473 = vmatpush2.bf16.msra.mxu0 %v4353
    %4474 = vmatprep.subr.bf16.mxu0 0
    %4475 = vmatpush2.bf16.msra.mxu0 %v4352
    %4476 = vmatprep.subr.bf16.mxu0 0
    %4477 = vmatpush2.bf16.msra.mxu0 %v4351
    %4478 = vmatprep.subr.bf16.mxu0 0
    %4479 = vmatpush2.bf16.msra.mxu0 %v4350
    %4480 = vmatprep.subr.bf16.mxu0 0
    %4481 = vmatpush2.bf16.msra.mxu0 %v4349
    %4482 = vmatprep.subr.bf16.mxu0 0
    %4483 = vmatpush2.bf16.msra.mxu0 %v4348
    %4484 = vmatprep.mubr.bf16.mxu0 %v4006
    %4485 = vmatmul.mubr.bf16.gmra.mxu0 %v4005
    %v4486 = vpop.f32.mrf.mxu0
    %v4487 = vadd.f32 %v4138, %v4486
    %v4488 = vpop.f32.mrf.mxu0
    %v4489 = vpop.f32.mrf.mxu0
    %v4490 = vadd.f32 %v4138, %v4489
    %v4491 = vpop.f32.mrf.mxu0
    %4492 = vmatprep.mubr.bf16.mxu0 %v4013
    %4493 = vmatmul.mubr.bf16.gmra.mxu0 %v4012
    %v4494 = vpop.f32.mrf.mxu0
    %v4495 = vadd.f32 %v4138, %v4494
    %v4496 = vpop.f32.mrf.mxu0
    %v4497 = vpop.f32.mrf.mxu0
    %v4498 = vadd.f32 %v4138, %v4497
    %v4499 = vpop.f32.mrf.mxu0
    %4500 = vmatprep.mubr.bf16.mxu0 %v4020
    %4501 = vmatmul.mubr.bf16.gmra.mxu0 %v4019
    %v4502 = vpop.f32.mrf.mxu0
    %v4503 = vadd.f32 %v4138, %v4502
    %v4504 = vpop.f32.mrf.mxu0
    %v4505 = vpop.f32.mrf.mxu0
    %v4506 = vadd.f32 %v4138, %v4505
    %v4507 = vpop.f32.mrf.mxu0
    %4508 = vmatprep.mubr.bf16.mxu0 %v4027
    %4509 = vmatmul.mubr.bf16.gmra.mxu0 %v4026
    %v4510 = vpop.f32.mrf.mxu0
    %v4511 = vadd.f32 %v4138, %v4510
    %v4512 = vpop.f32.mrf.mxu0
    %v4513 = vpop.f32.mrf.mxu0
    %v4514 = vadd.f32 %v4138, %v4513
    %v4515 = vpop.f32.mrf.mxu0
    %4516 = vdwg.mxu0
    %4517 = vmatprep.subr.bf16.mxu0 0
    %4518 = vmatpush1.bf16.msra.mxu0 %v4363
    %4519 = vmatprep.subr.bf16.mxu0 0
    %4520 = vmatpush1.bf16.msra.mxu0 %v4362
    %4521 = vmatprep.subr.bf16.mxu0 0
    %4522 = vmatpush1.bf16.msra.mxu0 %v4361
    %4523 = vmatprep.subr.bf16.mxu0 0
    %4524 = vmatpush1.bf16.msra.mxu0 %v4360
    %4525 = vmatprep.subr.bf16.mxu0 0
    %4526 = vmatpush1.bf16.msra.mxu0 %v4359
    %4527 = vmatprep.subr.bf16.mxu0 0
    %4528 = vmatpush1.bf16.msra.mxu0 %v4358
    %4529 = vmatprep.subr.bf16.mxu0 0
    %4530 = vmatpush1.bf16.msra.mxu0 %v4357
    %4531 = vmatprep.subr.bf16.mxu0 0
    %4532 = vmatpush1.bf16.msra.mxu0 %v4356
    %4533 = vmatprep.subr.bf16.mxu0 0
    %4534 = vmatpush2.bf16.msra.mxu0 %v4371
    %4535 = vmatprep.subr.bf16.mxu0 0
    %4536 = vmatpush2.bf16.msra.mxu0 %v4370
    %4537 = vmatprep.subr.bf16.mxu0 0
    %4538 = vmatpush2.bf16.msra.mxu0 %v4369
    %4539 = vmatprep.subr.bf16.mxu0 0
    %4540 = vmatpush2.bf16.msra.mxu0 %v4368
    %4541 = vmatprep.subr.bf16.mxu0 0
    %4542 = vmatpush2.bf16.msra.mxu0 %v4367
    %4543 = vmatprep.subr.bf16.mxu0 0
    %4544 = vmatpush2.bf16.msra.mxu0 %v4366
    %4545 = vmatprep.subr.bf16.mxu0 0
    %4546 = vmatpush2.bf16.msra.mxu0 %v4365
    %4547 = vmatprep.subr.bf16.mxu0 0
    %4548 = vmatpush2.bf16.msra.mxu0 %v4364
    %4549 = vmatprep.mubr.bf16.mxu0 %v4008
    %4550 = vmatmul.mubr.bf16.gmra.mxu0 %v4007
    %v4551 = vpop.f32.mrf.mxu0
    %v4552 = vadd.f32 %v4487, %v4551
    %v4553 = vpop.f32.mrf.mxu0
    %v4554 = vpop.f32.mrf.mxu0
    %v4555 = vadd.f32 %v4490, %v4554
    %v4556 = vpop.f32.mrf.mxu0
    %4557 = vmatprep.mubr.bf16.mxu0 %v4015
    %4558 = vmatmul.mubr.bf16.gmra.mxu0 %v4014
    %v4559 = vpop.f32.mrf.mxu0
    %v4560 = vadd.f32 %v4495, %v4559
    %v4561 = vpop.f32.mrf.mxu0
    %v4562 = vpop.f32.mrf.mxu0
    %v4563 = vadd.f32 %v4498, %v4562
    %v4564 = vpop.f32.mrf.mxu0
    %4565 = vmatprep.mubr.bf16.mxu0 %v4022
    %4566 = vmatmul.mubr.bf16.gmra.mxu0 %v4021
    %v4567 = vpop.f32.mrf.mxu0
    %v4568 = vadd.f32 %v4503, %v4567
    %v4569 = vpop.f32.mrf.mxu0
    %v4570 = vpop.f32.mrf.mxu0
    %v4571 = vadd.f32 %v4506, %v4570
    %v4572 = vpop.f32.mrf.mxu0
    %4573 = vmatprep.mubr.bf16.mxu0 %v4029
    %4574 = vmatmul.mubr.bf16.gmra.mxu0 %v4028
    %v4575 = vpop.f32.mrf.mxu0
    %v4576 = vadd.f32 %v4511, %v4575
    %v4577 = vpop.f32.mrf.mxu0
    %v4578 = vpop.f32.mrf.mxu0
    %v4579 = vadd.f32 %v4514, %v4578
    %v4580 = vpop.f32.mrf.mxu0
    %4581 = vdwg.mxu0
    %4582 = vmatprep.subr.bf16.mxu0 0
    %4583 = vmatpush1.bf16.msra.mxu0 %v4379
    %4584 = vmatprep.subr.bf16.mxu0 0
    %4585 = vmatpush1.bf16.msra.mxu0 %v4378
    %4586 = vmatprep.subr.bf16.mxu0 0
    %4587 = vmatpush1.bf16.msra.mxu0 %v4377
    %4588 = vmatprep.subr.bf16.mxu0 0
    %4589 = vmatpush1.bf16.msra.mxu0 %v4376
    %4590 = vmatprep.subr.bf16.mxu0 0
    %4591 = vmatpush1.bf16.msra.mxu0 %v4375
    %4592 = vmatprep.subr.bf16.mxu0 0
    %4593 = vmatpush1.bf16.msra.mxu0 %v4374
    %4594 = vmatprep.subr.bf16.mxu0 0
    %4595 = vmatpush1.bf16.msra.mxu0 %v4373
    %4596 = vmatprep.subr.bf16.mxu0 0
    %4597 = vmatpush1.bf16.msra.mxu0 %v4372
    %4598 = vmatprep.subr.bf16.mxu0 0
    %4599 = vmatpush2.bf16.msra.mxu0 %v4387
    %4600 = vmatprep.subr.bf16.mxu0 0
    %4601 = vmatpush2.bf16.msra.mxu0 %v4386
    %4602 = vmatprep.subr.bf16.mxu0 0
    %4603 = vmatpush2.bf16.msra.mxu0 %v4385
    %4604 = vmatprep.subr.bf16.mxu0 0
    %4605 = vmatpush2.bf16.msra.mxu0 %v4384
    %4606 = vmatprep.subr.bf16.mxu0 0
    %4607 = vmatpush2.bf16.msra.mxu0 %v4383
    %4608 = vmatprep.subr.bf16.mxu0 0
    %4609 = vmatpush2.bf16.msra.mxu0 %v4382
    %4610 = vmatprep.subr.bf16.mxu0 0
    %4611 = vmatpush2.bf16.msra.mxu0 %v4381
    %4612 = vmatprep.subr.bf16.mxu0 0
    %4613 = vmatpush2.bf16.msra.mxu0 %v4380
    %4614 = vmatprep.mubr.bf16.mxu0 %v4010
    %4615 = vmatmul.mubr.bf16.gmra.mxu0 %v4009
    %v4616 = vpop.f32.mrf.mxu0
    %v4617 = vadd.f32 %v4552, %v4616
    %v4618 = vpop.f32.mrf.mxu0
    %v4619 = vpop.f32.mrf.mxu0
    %v4620 = vadd.f32 %v4555, %v4619
    %v4621 = vpop.f32.mrf.mxu0
    %4622 = vmatprep.mubr.bf16.mxu0 %v4017
    %4623 = vmatmul.mubr.bf16.gmra.mxu0 %v4016
    %v4624 = vpop.f32.mrf.mxu0
    %v4625 = vadd.f32 %v4560, %v4624
    %v4626 = vpop.f32.mrf.mxu0
    %v4627 = vpop.f32.mrf.mxu0
    %v4628 = vadd.f32 %v4563, %v4627
    %v4629 = vpop.f32.mrf.mxu0
    %4630 = vmatprep.mubr.bf16.mxu0 %v4024
    %4631 = vmatmul.mubr.bf16.gmra.mxu0 %v4023
    %v4632 = vpop.f32.mrf.mxu0
    %v4633 = vadd.f32 %v4568, %v4632
    %v4634 = vpop.f32.mrf.mxu0
    %v4635 = vpop.f32.mrf.mxu0
    %v4636 = vadd.f32 %v4571, %v4635
    %v4637 = vpop.f32.mrf.mxu0
    %4638 = vmatprep.mubr.bf16.mxu0 %v4031
    %4639 = vmatmul.mubr.bf16.gmra.mxu0 %v4030
    %v4640 = vpop.f32.mrf.mxu0
    %v4641 = vadd.f32 %v4576, %v4640
    %v4642 = vpop.f32.mrf.mxu0
    %v4643 = vpop.f32.mrf.mxu0
    %v4644 = vadd.f32 %v4579, %v4643
    %v4645 = vpop.f32.mrf.mxu0
    %4646 = vdwg.mxu0
    %4647 = vmatprep.subr.bf16.mxu0 0
    %4648 = vmatpush1.bf16.msra.mxu0 0
    %4649 = vmatprep.subr.bf16.mxu0 0
    %4650 = vmatpush1.bf16.msra.mxu0 0
    %4651 = vmatprep.subr.bf16.mxu0 0
    %4652 = vmatpush1.bf16.msra.mxu0 0
    %4653 = vmatprep.subr.bf16.mxu0 0
    %4654 = vmatpush1.bf16.msra.mxu0 0
    %4655 = vmatprep.subr.bf16.mxu0 0
    %4656 = vmatpush1.bf16.msra.mxu0 0
    %4657 = vmatprep.subr.bf16.mxu0 0
    %4658 = vmatpush1.bf16.msra.mxu0 0
    %4659 = vmatprep.subr.bf16.mxu0 0
    %4660 = vmatpush1.bf16.msra.mxu0 %v4389
    %4661 = vmatprep.subr.bf16.mxu0 0
    %4662 = vmatpush1.bf16.msra.mxu0 %v4388
    %4663 = vmatprep.subr.bf16.mxu0 0
    %4664 = vmatpush2.bf16.msra.mxu0 0
    %4665 = vmatprep.subr.bf16.mxu0 0
    %4666 = vmatpush2.bf16.msra.mxu0 0
    %4667 = vmatprep.subr.bf16.mxu0 0
    %4668 = vmatpush2.bf16.msra.mxu0 0
    %4669 = vmatprep.subr.bf16.mxu0 0
    %4670 = vmatpush2.bf16.msra.mxu0 0
    %4671 = vmatprep.subr.bf16.mxu0 0
    %4672 = vmatpush2.bf16.msra.mxu0 0
    %4673 = vmatprep.subr.bf16.mxu0 0
    %4674 = vmatpush2.bf16.msra.mxu0 0
    %4675 = vmatprep.subr.bf16.mxu0 0
    %4676 = vmatpush2.bf16.msra.mxu0 0
    %4677 = vmatprep.subr.bf16.mxu0 0
    %4678 = vmatpush2.bf16.msra.mxu0 0
    %4679 = vmatprep.mubr.bf16.mxu0 0
    %4680 = vmatmul.mubr.bf16.gmra.mxu0 %v4441
    %v4681 = vpop.f32.mrf.mxu0
    %v4682 = vadd.f32 %v4617, %v4681
    %v4683 = vpop.f32.mrf.mxu0
    %v4684 = vpop.f32.mrf.mxu0
    %v4685 = vadd.f32 %v4620, %v4684
    %v4686 = vpop.f32.mrf.mxu0
    %4687 = vmatprep.mubr.bf16.mxu0 0
    %4688 = vmatmul.mubr.bf16.gmra.mxu0 %v4444
    %v4689 = vpop.f32.mrf.mxu0
    %v4690 = vadd.f32 %v4625, %v4689
    %v4691 = vpop.f32.mrf.mxu0
    %v4692 = vpop.f32.mrf.mxu0
    %v4693 = vadd.f32 %v4628, %v4692
    %v4694 = vpop.f32.mrf.mxu0
    %4695 = vmatprep.mubr.bf16.mxu0 0
    %4696 = vmatmul.mubr.bf16.gmra.mxu0 %v4447
    %v4697 = vpop.f32.mrf.mxu0
    %v4698 = vadd.f32 %v4633, %v4697
    %v4699 = vpop.f32.mrf.mxu0
    %v4700 = vpop.f32.mrf.mxu0
    %v4701 = vadd.f32 %v4636, %v4700
    %v4702 = vpop.f32.mrf.mxu0
    %4703 = vmatprep.mubr.bf16.mxu0 0
    %4704 = vmatmul.mubr.bf16.gmra.mxu0 %v4450
    %v4705 = vpop.f32.mrf.mxu0
    %v4706 = vadd.f32 %v4641, %v4705
    %v4707 = vpop.f32.mrf.mxu0
    %v4708 = vpop.f32.mrf.mxu0
    %v4709 = vadd.f32 %v4644, %v4708
    %v4710 = vpop.f32.mrf.mxu0
    %4711 = vdwg.mxu0
    %4712 = vst.msk [vmem:[%s7] sm:$0xff] %vm182, %v4682
    %4713 = vst.msk [vmem:[%s7 + $0x8] sm:$0xff] %vm182, %v4685
    %4714 = vst.msk [vmem:[%s7 + $0x10] sm:$0xff] %vm182, %v4690
    %4715 = vst.msk [vmem:[%s7 + $0x18] sm:$0xff] %vm182, %v4693
    %4716 = vst.msk [vmem:[%s7 + $0x20] sm:$0xff] %vm182, %v4698
    %4717 = vst.msk [vmem:[%s7 + $0x28] sm:$0xff] %vm182, %v4701
    %4718 = vst.msk [vmem:[%s7 + $0x30] sm:$0xff] %vm182, %v4706
    %4719 = vst.msk [vmem:[%s7 + $0x38] sm:$0xff] %vm182, %v4709
    // Predicated region
    $region50: #{tpu_custom_call.1} parent=1 // pred_check
      _
    $region51: #{tpu_custom_call.1} parent=1 // pred_check_branch
      %4721 = sbr.rel (0) target = $region53
    $region52: #{tpu_custom_call.1} parent=1 // pred_region
      _
    $region53: #{tpu_custom_call.1} parent=1 // pred_fallthru
      _
    // Predicated region
    $region54: #{tpu_custom_call.1} parent=1 // pred_check
      _
    $region55: #{tpu_custom_call.1} parent=1 // pred_check_branch
      %4723 = sbr.rel (0) target = $region57
    $region56: #{tpu_custom_call.1} parent=1 // pred_region
      _
    $region57: #{tpu_custom_call.1} parent=1 // pred_fallthru
      _
    %4724 = vsyncpa [#allocation3], 1
    %4725 = vsyncpa [#allocation5], 1
    %4726 = vsyncpa [#allocation8], 1

</llo_original>
